<compile_context>
chip_gen: v7x
topology: tpu7x:2x2x1
jax: 0.10.0
libtpu: 0.0.40
codegen_flags: <defaults>
</compile_context>

<pallas_src>
import numpy as np
import jax
import jax.numpy as jnp
from jax.experimental import pallas as pl
from jax.experimental.pallas import tpu as pltpu

# Static geometry fixed by the PyTorch module (Linear(32*7*7, 10) => 28x28 input).
H1 = 28                    # conv1 spatial size
H2 = 14                    # after first 2x2 pool
H3 = 7                     # after second 2x2 pool
C1 = 16                    # conv1 out channels
C2 = 32                    # conv2 out channels
K1 = 5 * (H1 + 4)          # 160  : conv1 contraction (5 ky-blocks of padded width 32)
K2 = 5 * (H2 + 4) * C1     # 1440 : conv2 contraction (5 ky-blocks of padded 18*16 lanes)
N1 = H1 * C1               # 448  : conv1 output lanes, order (even-w block | odd-w block)
N2 = H2 * C2               # 448  : conv2 output lanes, same ordering trick
FEAT = H3 * H3 * C2        # 1568 : flattened feature size
NCLS = 10


# ------------------------------ fused kernel ------------------------------- #

def _fused_cnn_kernel(x_ref, w1_ref, b1_ref, w2_ref, b2_ref, wo_ref, bo_ref,
                      logits_ref, feat_ref, xp_scr, p1_scr):
    bt = x_ref.shape[0]

    # ---------------- conv1 (banded matmul) + ReLU + 2x2 maxpool ----------- #
    # Zero-padded input lives in VMEM scratch (in-kernel halo handling).
    xp_scr[...] = jnp.zeros(xp_scr.shape, jnp.float32)
    xp_scr[:, 2:2 + H1, 2:2 + H1] = x_ref[...]
    # lhs1[h, ky*32 + j] = xpad[h+ky, j]  (per image, images stacked on sublanes)
    lhs1 = jnp.concatenate(
        [jnp.concatenate([xp_scr[b, ky:ky + H1, :] for ky in range(5)], axis=1)
         for b in range(bt)], axis=0)                               # (bt*28, 160)
    h1 = jnp.dot(lhs1, w1_ref[...], preferred_element_type=jnp.float32)
    h1 = jnp.maximum(h1 + b1_ref[...], 0.0)                         # (bt*28, 448)
    # Horizontal pool: output columns were permuted so partners sit 224 lanes apart.
    h1 = jnp.maximum(h1[:, :N1 // 2], h1[:, N1 // 2:])              # (bt*28, 224)
    # Vertical pool: row-pair maxima, written directly into the padded conv2 input.
    p1_scr[...] = jnp.zeros(p1_scr.shape, jnp.float32)
    for b in range(bt):
        rows = [jnp.maximum(h1[b * H1 + 2 * i:b * H1 + 2 * i + 1, :],
                            h1[b * H1 + 2 * i + 1:b * H1 + 2 * i + 2, :])
                for i in range(H2)]
        p1_scr[b, 2:2 + H2, 2 * C1:2 * C1 + H2 * C1] = jnp.concatenate(rows, axis=0)

    # ---------------- conv2 (banded matmul) + ReLU + 2x2 maxpool ----------- #
    lhs2 = jnp.concatenate(
        [jnp.concatenate([p1_scr[b, ky:ky + H2, :] for ky in range(5)], axis=1)
         for b in range(bt)], axis=0)                               # (bt*14, 1440)
    h2 = jnp.dot(lhs2, w2_ref[...], preferred_element_type=jnp.float32)
    h2 = jnp.maximum(h2 + b2_ref[...], 0.0)                         # (bt*14, 448)
    h2 = jnp.maximum(h2[:, :N2 // 2], h2[:, N2 // 2:])              # (bt*14, 224)

    # ---------------- flatten ((H, W, C) order) + fused Linear -------------- #
    feats = []
    for b in range(bt):
        rows = [jnp.maximum(h2[b * H2 + 2 * i:b * H2 + 2 * i + 1, :],
                            h2[b * H2 + 2 * i + 1:b * H2 + 2 * i + 2, :])
                for i in range(H3)]
        feats.append(jnp.concatenate(rows, axis=1))                 # (1, 1568) lane-dense
    feat = jnp.concatenate(feats, axis=0)                           # (bt, 1568)
    feat_ref[...] = feat
    logits_ref[...] = (jnp.dot(feat, wo_ref[...], preferred_element_type=jnp.float32)
                       + bo_ref[...])


# ------------------------------ pallas_call wrapper ------------------------ #

def _pick_block_b(batch, max_block=8):
    # Keep the per-step working set small and the unrolled kernel body bounded.  The tiled
    # batch dim must either divide the batch cleanly (multiple of 8 for the lane-dense
    # outputs) or equal the whole batch, so fall back to the whole batch otherwise.
    if batch <= max_block:
        return batch
    if batch % max_block == 0:
        return max_block
    return batch


def fused_cnn(xs, kp):
    """xs: (B, 28, 28) f32.  Returns (logits (B, 10), feat_hwc (B, 1568))."""
    batch = xs.shape[0]
    bt = _pick_block_b(batch)
    const2 = lambda i: (0, 0)
    return pl.pallas_call(
        _fused_cnn_kernel,
        out_shape=(jax.ShapeDtypeStruct((batch, NCLS), jnp.float32),
                   jax.ShapeDtypeStruct((batch, FEAT), jnp.float32)),
        grid=(batch // bt,),
        in_specs=[
            pl.BlockSpec((bt, H1, H1), lambda i: (i, 0, 0)),   # input images (batch-tiled)
            pl.BlockSpec((K1, N1), const2),                    # conv1 banded weights
            pl.BlockSpec((1, N1), const2),                     # conv1 bias (pre-tiled)
            pl.BlockSpec((K2, N2), const2),                    # conv2 banded weights
            pl.BlockSpec((1, N2), const2),                     # conv2 bias (pre-tiled)
            pl.BlockSpec((FEAT, NCLS), const2),                # linear weights (HWC rows)
            pl.BlockSpec((1, NCLS), const2),                   # linear bias
        ],
        out_specs=(pl.BlockSpec((bt, NCLS), lambda i: (i, 0)),
                   pl.BlockSpec((bt, FEAT), lambda i: (i, 0))),
        scratch_shapes=[
            pltpu.VMEM((bt, H1 + 4, H1 + 4), jnp.float32),         # padded conv1 input
            pltpu.VMEM((bt, H2 + 4, (H2 + 4) * C1), jnp.float32),  # padded conv2 input
        ],
        compiler_params=pltpu.CompilerParams(
            dimension_semantics=("parallel",),        # batch tiles are independent
            vmem_limit_bytes=32 * 1024 * 1024,        # safe on v5e/v6e/v7x
        ),
    )(xs, kp["w1b"], kp["b1t"], kp["w2b"], kp["b2t"], kp["wo"], kp["bo"])


# ------------------------------ parameters --------------------------------- #

def init_params(key):
    """Parameters in native PyTorch layouts (conv: (Cout,Cin,kh,kw), linear: (N,K))."""
    k1, k2, k3, k4, k5, k6 = jax.random.split(key, 6)
    return dict(
        w1=jax.random.normal(k1, (C1, 1, 5, 5), jnp.float32) * 0.1,
        b1=jax.random.normal(k2, (C1,), jnp.float32) * 0.1,
        w2=jax.random.normal(k3, (C2, C1, 5, 5), jnp.float32) * 0.05,
        b2=jax.random.normal(k4, (C2,), jnp.float32) * 0.05,
        wo=jax.random.normal(k5, (NCLS, FEAT), jnp.float32) * 0.02,
        bo=jax.random.normal(k6, (NCLS,), jnp.float32) * 0.02,
    )


def build_kernel_params(params):
    """One-time host-side repack of PyTorch-layout weights into the kernel layouts."""
    w1 = np.asarray(params["w1"], np.float32)
    w2 = np.asarray(params["w2"], np.float32)
    wo = np.asarray(params["wo"], np.float32)

    # conv1 banded weights: lhs1[h, ky*32 + j] = xpad[h+ky, j]; output column for (w, co)
    # is (w//2)*16 + co in the first half (even w) / +224 in the second half (odd w), so
    # the horizontal 2x2 pool inside the kernel is max(first half, second half).
    w1b = np.zeros((K1, N1), np.float32)
    for w in range(H1):
        col = (w // 2) * C1 + (N1 // 2) * (w % 2)
        for ky in range(5):
            for kx in range(5):
                w1b[ky * (H1 + 4) + w + kx, col:col + C1] = w1[:, 0, ky, kx]

    # conv2 banded weights: lhs2[h, ky*288 + (w'+2)*16 + ci] = p1[h+ky-2, w', ci]
    w2b = np.zeros((K2, N2), np.float32)
    for w in range(H2):
        col = (w // 2) * C2 + (N2 // 2) * (w % 2)
        for ky in range(5):
            for kx in range(5):
                r0 = ky * (H2 + 4) * C1 + (w + kx) * C1
                w2b[r0:r0 + C1, col:col + C2] = w2[:, :, ky, kx].T

    # Linear: permute K rows from torch's (C, H, W) flatten order to the kernel's (H, W, C)
    # feature layout so no activation transpose is needed in front of the matmul.
    wo_hwc = wo.reshape(NCLS, C2, H3, H3).transpose(2, 3, 1, 0).reshape(FEAT, NCLS)

    return dict(
        w1b=jnp.asarray(w1b),
        b1t=jnp.asarray(np.tile(np.asarray(params["b1"], np.float32), H1).reshape(1, N1)),
        w2b=jnp.asarray(w2b),
        b2t=jnp.asarray(np.tile(np.asarray(params["b2"], np.float32), H2).reshape(1, N2)),
        wo=jnp.asarray(wo_hwc),
        bo=jnp.asarray(np.asarray(params["bo"], np.float32).reshape(1, NCLS)),
    )


# ------------------------------ forward pass -------------------------------- #

@jax.jit
def cnn_forward(x, kparams):
    """x: (B, 1, 28, 28) NCHW, like the PyTorch module.  Returns (logits, flat features)."""
    batch = x.shape[0]
    logits, feat_hwc = fused_cnn(x.reshape(batch, H1, H1), kparams)
    # The linear already consumed the (H, W, C)-ordered features inside the kernel; this
    # tiny permute only reproduces torch's `.view(B, -1)` (C, H, W) return convention.
    feat = feat_hwc.reshape(batch, H3, H3, C2).transpose(0, 3, 1, 2).reshape(batch, FEAT)
    return logits, feat


# ------------------------------ pure-XLA reference -------------------------- #

def _reference_forward(x, params):
    """Straightforward XLA mirror of the PyTorch module, used only for validation."""
    hi = jax.lax.Precision.HIGHEST

    def conv5x5(h, w, b):                       # h: (B,H,W,Cin), w: (Cout,Cin,5,5)
        bsz, hh, ww, _ = h.shape
        hp = jnp.pad(h, ((0, 0), (2, 2), (2, 2), (0, 0)))
        out = jnp.zeros((bsz, hh, ww, w.shape[0]), jnp.float32)
        for ky in range(5):
            for kx in range(5):
                out = out + jnp.einsum("bhwc,oc->bhwo",
                                       hp[:, ky:ky + hh, kx:kx + ww, :],
                                       w[:, :, ky, kx], precision=hi)
        return out + b

    def pool2(h):
        bsz, hh, ww, c = h.shape
        return jnp.max(h.reshape(bsz, hh // 2, 2, ww // 2, 2, c), axis=(2, 4))

    h = jnp.transpose(x, (0, 2, 3, 1))
    h = pool2(jnp.maximum(conv5x5(h, params["w1"], params["b1"]), 0.0))
    h = pool2(jnp.maximum(conv5x5(h, params["w2"], params["b2"]), 0.0))
    feat = jnp.transpose(h, (0, 3, 1, 2)).reshape(x.shape[0], -1)
    logits = jnp.dot(feat, params["wo"].T, precision=hi) + params["bo"]
    return logits, feat


if __name__ == "__main__":
    key = jax.random.PRNGKey(0)
    pkey, xkey = jax.random.split(key)
    params = init_params(pkey)
    kparams = build_kernel_params(params)

    x = jax.random.normal(xkey, (2, 1, H1, H1), jnp.float32)   # MNIST-like NCHW input
    out, feat = cnn_forward(x, kparams)
    jax.block_until_ready((out, feat))

    assert out.shape == (2, NCLS) and feat.shape == (2, FEAT)
    assert out.dtype == jnp.float32 and feat.dtype == jnp.float32

    ref_out, ref_feat = _reference_forward(x, params)
    assert jnp.allclose(feat, ref_feat, rtol=2e-2, atol=2e-2), \
        f"feat mismatch: {float(jnp.max(jnp.abs(feat - ref_feat)))}"
    assert jnp.allclose(out, ref_out, rtol=2e-2, atol=2e-2), \
        f"logits mismatch: {float(jnp.max(jnp.abs(out - ref_out)))}"
    print("KERNEL_OK")
</pallas_src>

<mosaic_0001>
module attributes {stable_mosaic.version = 11 : i64} {
  func.func @_fused_cnn_kernel(%arg0: i32, %arg1: memref<2x28x28xf32, #tpu.memory_space<vmem>>, %arg2: memref<160x448xf32, #tpu.memory_space<vmem>>, %arg3: memref<1x448xf32, #tpu.memory_space<vmem>>, %arg4: memref<1440x448xf32, #tpu.memory_space<vmem>>, %arg5: memref<1x448xf32, #tpu.memory_space<vmem>>, %arg6: memref<1568x10xf32, #tpu.memory_space<vmem>>, %arg7: memref<1x10xf32, #tpu.memory_space<vmem>>, %arg8: memref<2x10xf32, #tpu.memory_space<vmem>>, %arg9: memref<2x1568xf32, #tpu.memory_space<vmem>>, %arg10: memref<2x32x32xf32, #tpu.memory_space<vmem>>, %arg11: memref<2x18x288xf32, #tpu.memory_space<vmem>>) attributes {dimension_semantics = [#tpu.dimension_semantics<parallel>], iteration_bounds = array<i64: 1>, scalar_prefetch = 0 : i64, scratch_operands = 2 : i64, tpu.core_type = #tpu.core_type<tc>, window_params = [{transform_indices = @transform_0, window_bounds = array<i64: 2, 28, 28>}, {pipeline_mode = #tpu.pipeline_mode<synchronous>, transform_indices = @transform_1, window_bounds = array<i64: 160, 448>}, {pipeline_mode = #tpu.pipeline_mode<synchronous>, transform_indices = @transform_2, window_bounds = array<i64: 1, 448>}, {pipeline_mode = #tpu.pipeline_mode<synchronous>, transform_indices = @transform_3, window_bounds = array<i64: 1440, 448>}, {pipeline_mode = #tpu.pipeline_mode<synchronous>, transform_indices = @transform_4, window_bounds = array<i64: 1, 448>}, {pipeline_mode = #tpu.pipeline_mode<synchronous>, transform_indices = @transform_5, window_bounds = array<i64: 1568, 10>}, {pipeline_mode = #tpu.pipeline_mode<synchronous>, transform_indices = @transform_6, window_bounds = array<i64: 1, 10>}, {transform_indices = @transform_7, window_bounds = array<i64: 2, 10>}, {transform_indices = @transform_8, window_bounds = array<i64: 2, 1568>}]} {
    %cst = arith.constant 0.000000e+00 : f32
    %0 = vector.broadcast %cst : f32 to vector<2x32x32xf32>
    %c0 = arith.constant 0 : index
    %c0_0 = arith.constant 0 : index
    %c0_1 = arith.constant 0 : index
    %1 = vector.load %arg10[%c0, %c0_0, %c0_1] : memref<2x32x32xf32, #tpu.memory_space<vmem>>, vector<2x32x32xf32>
    tpu.vector_store %arg10[%c0, %c0_0, %c0_1], %0 {strides = array<i32>} : memref<2x32x32xf32, #tpu.memory_space<vmem>>, vector<2x32x32xf32>,
    %c0_2 = arith.constant 0 : index
    %c0_3 = arith.constant 0 : index
    %c0_4 = arith.constant 0 : index
    %2 = vector.load %arg1[%c0_2, %c0_3, %c0_4] : memref<2x28x28xf32, #tpu.memory_space<vmem>>, vector<2x28x28xf32>
    %c0_5 = arith.constant 0 : index
    %c2 = arith.constant 2 : index
    %c2_6 = arith.constant 2 : index
    %3 = vector.load %arg10[%c0_5, %c2, %c2_6] : memref<2x32x32xf32, #tpu.memory_space<vmem>>, vector<2x28x28xf32>
    tpu.vector_store %arg10[%c0_5, %c2, %c2_6], %2 {strides = array<i32>} : memref<2x32x32xf32, #tpu.memory_space<vmem>>, vector<2x28x28xf32>,
    %c0_7 = arith.constant 0 : index
    %c0_8 = arith.constant 0 : index
    %c0_9 = arith.constant 0 : index
    %4 = vector.load %arg10[%c0_7, %c0_8, %c0_9] : memref<2x32x32xf32, #tpu.memory_space<vmem>>, vector<1x28x32xf32>
    %5 = vector.shape_cast %4 : vector<1x28x32xf32> to vector<28x32xf32>
    %c0_10 = arith.constant 0 : index
    %c1 = arith.constant 1 : index
    %c0_11 = arith.constant 0 : index
    %6 = vector.load %arg10[%c0_10, %c1, %c0_11] : memref<2x32x32xf32, #tpu.memory_space<vmem>>, vector<1x28x32xf32>
    %7 = vector.shape_cast %6 : vector<1x28x32xf32> to vector<28x32xf32>
    %c0_12 = arith.constant 0 : index
    %c2_13 = arith.constant 2 : index
    %c0_14 = arith.constant 0 : index
    %8 = vector.load %arg10[%c0_12, %c2_13, %c0_14] : memref<2x32x32xf32, #tpu.memory_space<vmem>>, vector<1x28x32xf32>
    %9 = vector.shape_cast %8 : vector<1x28x32xf32> to vector<28x32xf32>
    %c0_15 = arith.constant 0 : index
    %c3 = arith.constant 3 : index
    %c0_16 = arith.constant 0 : index
    %10 = vector.load %arg10[%c0_15, %c3, %c0_16] : memref<2x32x32xf32, #tpu.memory_space<vmem>>, vector<1x28x32xf32>
    %11 = vector.shape_cast %10 : vector<1x28x32xf32> to vector<28x32xf32>
    %c0_17 = arith.constant 0 : index
    %c4 = arith.constant 4 : index
    %c0_18 = arith.constant 0 : index
    %12 = vector.load %arg10[%c0_17, %c4, %c0_18] : memref<2x32x32xf32, #tpu.memory_space<vmem>>, vector<1x28x32xf32>
    %13 = vector.shape_cast %12 : vector<1x28x32xf32> to vector<28x32xf32>
    %14 = tpu.concatenate %5, %7, %9, %11, %13 in 1 : vector<28x32xf32>, vector<28x32xf32>, vector<28x32xf32>, vector<28x32xf32>, vector<28x32xf32> -> vector<28x160xf32>
    %c1_19 = arith.constant 1 : index
    %c0_20 = arith.constant 0 : index
    %c0_21 = arith.constant 0 : index
    %15 = vector.load %arg10[%c1_19, %c0_20, %c0_21] : memref<2x32x32xf32, #tpu.memory_space<vmem>>, vector<1x28x32xf32>
    %16 = vector.shape_cast %15 : vector<1x28x32xf32> to vector<28x32xf32>
    %c1_22 = arith.constant 1 : index
    %c1_23 = arith.constant 1 : index
    %c0_24 = arith.constant 0 : index
    %17 = vector.load %arg10[%c1_22, %c1_23, %c0_24] : memref<2x32x32xf32, #tpu.memory_space<vmem>>, vector<1x28x32xf32>
    %18 = vector.shape_cast %17 : vector<1x28x32xf32> to vector<28x32xf32>
    %c1_25 = arith.constant 1 : index
    %c2_26 = arith.constant 2 : index
    %c0_27 = arith.constant 0 : index
    %19 = vector.load %arg10[%c1_25, %c2_26, %c0_27] : memref<2x32x32xf32, #tpu.memory_space<vmem>>, vector<1x28x32xf32>
    %20 = vector.shape_cast %19 : vector<1x28x32xf32> to vector<28x32xf32>
    %c1_28 = arith.constant 1 : index
    %c3_29 = arith.constant 3 : index
    %c0_30 = arith.constant 0 : index
    %21 = vector.load %arg10[%c1_28, %c3_29, %c0_30] : memref<2x32x32xf32, #tpu.memory_space<vmem>>, vector<1x28x32xf32>
    %22 = vector.shape_cast %21 : vector<1x28x32xf32> to vector<28x32xf32>
    %c1_31 = arith.constant 1 : index
    %c4_32 = arith.constant 4 : index
    %c0_33 = arith.constant 0 : index
    %23 = vector.load %arg10[%c1_31, %c4_32, %c0_33] : memref<2x32x32xf32, #tpu.memory_space<vmem>>, vector<1x28x32xf32>
    %24 = vector.shape_cast %23 : vector<1x28x32xf32> to vector<28x32xf32>
    %25 = tpu.concatenate %16, %18, %20, %22, %24 in 1 : vector<28x32xf32>, vector<28x32xf32>, vector<28x32xf32>, vector<28x32xf32>, vector<28x32xf32> -> vector<28x160xf32>
    %26 = tpu.concatenate %14, %25 in 0 : vector<28x160xf32>, vector<28x160xf32> -> vector<56x160xf32>
    %c0_34 = arith.constant 0 : index
    %c0_35 = arith.constant 0 : index
    %27 = vector.load %arg2[%c0_34, %c0_35] : memref<160x448xf32, #tpu.memory_space<vmem>>, vector<160x448xf32>
    %cst_36 = arith.constant dense<0.000000e+00> : vector<56x448xf32>
    %28 = tpu.matmul %26, %27, %cst_36 {dimension_numbers = #tpu.dot_dimension_numbers<[1], [0], [0], [1], [0, 0, 1, 1], [], []>} : vector<56x160xf32>, vector<160x448xf32>, vector<56x448xf32> -> vector<56x448xf32>
    %c0_37 = arith.constant 0 : index
    %c0_38 = arith.constant 0 : index
    %29 = vector.load %arg3[%c0_37, %c0_38] : memref<1x448xf32, #tpu.memory_space<vmem>>, vector<1x448xf32>
    %30 = vector.broadcast %29 : vector<1x448xf32> to vector<56x448xf32>
    %31 = arith.addf %28, %30 : vector<56x448xf32>
    %cst_39 = arith.constant 0.000000e+00 : f32
    %32 = vector.broadcast %cst_39 : f32 to vector<56x448xf32>
    %33 = arith.maximumf %31, %32 : vector<56x448xf32>
    %34 = vector.extract_strided_slice %33 {offsets = [0, 0], sizes = [56, 224], strides = [1, 1]} : vector<56x448xf32> to vector<56x224xf32>
    %35 = vector.extract_strided_slice %33 {offsets = [0, 224], sizes = [56, 224], strides = [1, 1]} : vector<56x448xf32> to vector<56x224xf32>
    %36 = arith.maximumf %34, %35 : vector<56x224xf32>
    %cst_40 = arith.constant 0.000000e+00 : f32
    %37 = vector.broadcast %cst_40 : f32 to vector<2x18x288xf32>
    %c0_41 = arith.constant 0 : index
    %c0_42 = arith.constant 0 : index
    %c0_43 = arith.constant 0 : index
    %38 = vector.load %arg11[%c0_41, %c0_42, %c0_43] : memref<2x18x288xf32, #tpu.memory_space<vmem>>, vector<2x18x288xf32>
    tpu.vector_store %arg11[%c0_41, %c0_42, %c0_43], %37 {strides = array<i32>} : memref<2x18x288xf32, #tpu.memory_space<vmem>>, vector<2x18x288xf32>,
    %39 = vector.extract_strided_slice %36 {offsets = [0, 0], sizes = [1, 224], strides = [1, 1]} : vector<56x224xf32> to vector<1x224xf32>
    %40 = vector.extract_strided_slice %36 {offsets = [1, 0], sizes = [1, 224], strides = [1, 1]} : vector<56x224xf32> to vector<1x224xf32>
    %41 = arith.maximumf %39, %40 : vector<1x224xf32>
    %42 = vector.extract_strided_slice %36 {offsets = [2, 0], sizes = [1, 224], strides = [1, 1]} : vector<56x224xf32> to vector<1x224xf32>
    %43 = vector.extract_strided_slice %36 {offsets = [3, 0], sizes = [1, 224], strides = [1, 1]} : vector<56x224xf32> to vector<1x224xf32>
    %44 = arith.maximumf %42, %43 : vector<1x224xf32>
    %45 = vector.extract_strided_slice %36 {offsets = [4, 0], sizes = [1, 224], strides = [1, 1]} : vector<56x224xf32> to vector<1x224xf32>
    %46 = vector.extract_strided_slice %36 {offsets = [5, 0], sizes = [1, 224], strides = [1, 1]} : vector<56x224xf32> to vector<1x224xf32>
    %47 = arith.maximumf %45, %46 : vector<1x224xf32>
    %48 = vector.extract_strided_slice %36 {offsets = [6, 0], sizes = [1, 224], strides = [1, 1]} : vector<56x224xf32> to vector<1x224xf32>
    %49 = vector.extract_strided_slice %36 {offsets = [7, 0], sizes = [1, 224], strides = [1, 1]} : vector<56x224xf32> to vector<1x224xf32>
    %50 = arith.maximumf %48, %49 : vector<1x224xf32>
    %51 = vector.extract_strided_slice %36 {offsets = [8, 0], sizes = [1, 224], strides = [1, 1]} : vector<56x224xf32> to vector<1x224xf32>
    %52 = vector.extract_strided_slice %36 {offsets = [9, 0], sizes = [1, 224], strides = [1, 1]} : vector<56x224xf32> to vector<1x224xf32>
    %53 = arith.maximumf %51, %52 : vector<1x224xf32>
    %54 = vector.extract_strided_slice %36 {offsets = [10, 0], sizes = [1, 224], strides = [1, 1]} : vector<56x224xf32> to vector<1x224xf32>
    %55 = vector.extract_strided_slice %36 {offsets = [11, 0], sizes = [1, 224], strides = [1, 1]} : vector<56x224xf32> to vector<1x224xf32>
    %56 = arith.maximumf %54, %55 : vector<1x224xf32>
    %57 = vector.extract_strided_slice %36 {offsets = [12, 0], sizes = [1, 224], strides = [1, 1]} : vector<56x224xf32> to vector<1x224xf32>
    %58 = vector.extract_strided_slice %36 {offsets = [13, 0], sizes = [1, 224], strides = [1, 1]} : vector<56x224xf32> to vector<1x224xf32>
    %59 = arith.maximumf %57, %58 : vector<1x224xf32>
    %60 = vector.extract_strided_slice %36 {offsets = [14, 0], sizes = [1, 224], strides = [1, 1]} : vector<56x224xf32> to vector<1x224xf32>
    %61 = vector.extract_strided_slice %36 {offsets = [15, 0], sizes = [1, 224], strides = [1, 1]} : vector<56x224xf32> to vector<1x224xf32>
    %62 = arith.maximumf %60, %61 : vector<1x224xf32>
    %63 = vector.extract_strided_slice %36 {offsets = [16, 0], sizes = [1, 224], strides = [1, 1]} : vector<56x224xf32> to vector<1x224xf32>
    %64 = vector.extract_strided_slice %36 {offsets = [17, 0], sizes = [1, 224], strides = [1, 1]} : vector<56x224xf32> to vector<1x224xf32>
    %65 = arith.maximumf %63, %64 : vector<1x224xf32>
    %66 = vector.extract_strided_slice %36 {offsets = [18, 0], sizes = [1, 224], strides = [1, 1]} : vector<56x224xf32> to vector<1x224xf32>
    %67 = vector.extract_strided_slice %36 {offsets = [19, 0], sizes = [1, 224], strides = [1, 1]} : vector<56x224xf32> to vector<1x224xf32>
    %68 = arith.maximumf %66, %67 : vector<1x224xf32>
    %69 = vector.extract_strided_slice %36 {offsets = [20, 0], sizes = [1, 224], strides = [1, 1]} : vector<56x224xf32> to vector<1x224xf32>
    %70 = vector.extract_strided_slice %36 {offsets = [21, 0], sizes = [1, 224], strides = [1, 1]} : vector<56x224xf32> to vector<1x224xf32>
    %71 = arith.maximumf %69, %70 : vector<1x224xf32>
    %72 = vector.extract_strided_slice %36 {offsets = [22, 0], sizes = [1, 224], strides = [1, 1]} : vector<56x224xf32> to vector<1x224xf32>
    %73 = vector.extract_strided_slice %36 {offsets = [23, 0], sizes = [1, 224], strides = [1, 1]} : vector<56x224xf32> to vector<1x224xf32>
    %74 = arith.maximumf %72, %73 : vector<1x224xf32>
    %75 = vector.extract_strided_slice %36 {offsets = [24, 0], sizes = [1, 224], strides = [1, 1]} : vector<56x224xf32> to vector<1x224xf32>
    %76 = vector.extract_strided_slice %36 {offsets = [25, 0], sizes = [1, 224], strides = [1, 1]} : vector<56x224xf32> to vector<1x224xf32>
    %77 = arith.maximumf %75, %76 : vector<1x224xf32>
    %78 = vector.extract_strided_slice %36 {offsets = [26, 0], sizes = [1, 224], strides = [1, 1]} : vector<56x224xf32> to vector<1x224xf32>
    %79 = vector.extract_strided_slice %36 {offsets = [27, 0], sizes = [1, 224], strides = [1, 1]} : vector<56x224xf32> to vector<1x224xf32>
    %80 = arith.maximumf %78, %79 : vector<1x224xf32>
    %81 = tpu.concatenate %41, %44, %47, %50, %53, %56, %59, %62, %65, %68, %71, %74, %77, %80 in 0 : vector<1x224xf32>, vector<1x224xf32>, vector<1x224xf32>, vector<1x224xf32>, vector<1x224xf32>, vector<1x224xf32>, vector<1x224xf32>, vector<1x224xf32>, vector<1x224xf32>, vector<1x224xf32>, vector<1x224xf32>, vector<1x224xf32>, vector<1x224xf32>, vector<1x224xf32> -> vector<14x224xf32>
    %c0_44 = arith.constant 0 : index
    %c2_45 = arith.constant 2 : index
    %c32 = arith.constant 32 : index
    %82 = vector.load %arg11[%c0_44, %c2_45, %c32] : memref<2x18x288xf32, #tpu.memory_space<vmem>>, vector<1x14x224xf32>
    %83 = vector.shape_cast %82 : vector<1x14x224xf32> to vector<14x224xf32>
    %84 = vector.shape_cast %81 : vector<14x224xf32> to vector<1x14x224xf32>
    tpu.vector_store %arg11[%c0_44, %c2_45, %c32], %84 {strides = array<i32>} : memref<2x18x288xf32, #tpu.memory_space<vmem>>, vector<1x14x224xf32>,
    %85 = vector.extract_strided_slice %36 {offsets = [28, 0], sizes = [1, 224], strides = [1, 1]} : vector<56x224xf32> to vector<1x224xf32>
    %86 = vector.extract_strided_slice %36 {offsets = [29, 0], sizes = [1, 224], strides = [1, 1]} : vector<56x224xf32> to vector<1x224xf32>
    %87 = arith.maximumf %85, %86 : vector<1x224xf32>
    %88 = vector.extract_strided_slice %36 {offsets = [30, 0], sizes = [1, 224], strides = [1, 1]} : vector<56x224xf32> to vector<1x224xf32>
    %89 = vector.extract_strided_slice %36 {offsets = [31, 0], sizes = [1, 224], strides = [1, 1]} : vector<56x224xf32> to vector<1x224xf32>
    %90 = arith.maximumf %88, %89 : vector<1x224xf32>
    %91 = vector.extract_strided_slice %36 {offsets = [32, 0], sizes = [1, 224], strides = [1, 1]} : vector<56x224xf32> to vector<1x224xf32>
    %92 = vector.extract_strided_slice %36 {offsets = [33, 0], sizes = [1, 224], strides = [1, 1]} : vector<56x224xf32> to vector<1x224xf32>
    %93 = arith.maximumf %91, %92 : vector<1x224xf32>
    %94 = vector.extract_strided_slice %36 {offsets = [34, 0], sizes = [1, 224], strides = [1, 1]} : vector<56x224xf32> to vector<1x224xf32>
    %95 = vector.extract_strided_slice %36 {offsets = [35, 0], sizes = [1, 224], strides = [1, 1]} : vector<56x224xf32> to vector<1x224xf32>
    %96 = arith.maximumf %94, %95 : vector<1x224xf32>
    %97 = vector.extract_strided_slice %36 {offsets = [36, 0], sizes = [1, 224], strides = [1, 1]} : vector<56x224xf32> to vector<1x224xf32>
    %98 = vector.extract_strided_slice %36 {offsets = [37, 0], sizes = [1, 224], strides = [1, 1]} : vector<56x224xf32> to vector<1x224xf32>
    %99 = arith.maximumf %97, %98 : vector<1x224xf32>
    %100 = vector.extract_strided_slice %36 {offsets = [38, 0], sizes = [1, 224], strides = [1, 1]} : vector<56x224xf32> to vector<1x224xf32>
    %101 = vector.extract_strided_slice %36 {offsets = [39, 0], sizes = [1, 224], strides = [1, 1]} : vector<56x224xf32> to vector<1x224xf32>
    %102 = arith.maximumf %100, %101 : vector<1x224xf32>
    %103 = vector.extract_strided_slice %36 {offsets = [40, 0], sizes = [1, 224], strides = [1, 1]} : vector<56x224xf32> to vector<1x224xf32>
    %104 = vector.extract_strided_slice %36 {offsets = [41, 0], sizes = [1, 224], strides = [1, 1]} : vector<56x224xf32> to vector<1x224xf32>
    %105 = arith.maximumf %103, %104 : vector<1x224xf32>
    %106 = vector.extract_strided_slice %36 {offsets = [42, 0], sizes = [1, 224], strides = [1, 1]} : vector<56x224xf32> to vector<1x224xf32>
    %107 = vector.extract_strided_slice %36 {offsets = [43, 0], sizes = [1, 224], strides = [1, 1]} : vector<56x224xf32> to vector<1x224xf32>
    %108 = arith.maximumf %106, %107 : vector<1x224xf32>
    %109 = vector.extract_strided_slice %36 {offsets = [44, 0], sizes = [1, 224], strides = [1, 1]} : vector<56x224xf32> to vector<1x224xf32>
    %110 = vector.extract_strided_slice %36 {offsets = [45, 0], sizes = [1, 224], strides = [1, 1]} : vector<56x224xf32> to vector<1x224xf32>
    %111 = arith.maximumf %109, %110 : vector<1x224xf32>
    %112 = vector.extract_strided_slice %36 {offsets = [46, 0], sizes = [1, 224], strides = [1, 1]} : vector<56x224xf32> to vector<1x224xf32>
    %113 = vector.extract_strided_slice %36 {offsets = [47, 0], sizes = [1, 224], strides = [1, 1]} : vector<56x224xf32> to vector<1x224xf32>
    %114 = arith.maximumf %112, %113 : vector<1x224xf32>
    %115 = vector.extract_strided_slice %36 {offsets = [48, 0], sizes = [1, 224], strides = [1, 1]} : vector<56x224xf32> to vector<1x224xf32>
    %116 = vector.extract_strided_slice %36 {offsets = [49, 0], sizes = [1, 224], strides = [1, 1]} : vector<56x224xf32> to vector<1x224xf32>
    %117 = arith.maximumf %115, %116 : vector<1x224xf32>
    %118 = vector.extract_strided_slice %36 {offsets = [50, 0], sizes = [1, 224], strides = [1, 1]} : vector<56x224xf32> to vector<1x224xf32>
    %119 = vector.extract_strided_slice %36 {offsets = [51, 0], sizes = [1, 224], strides = [1, 1]} : vector<56x224xf32> to vector<1x224xf32>
    %120 = arith.maximumf %118, %119 : vector<1x224xf32>
    %121 = vector.extract_strided_slice %36 {offsets = [52, 0], sizes = [1, 224], strides = [1, 1]} : vector<56x224xf32> to vector<1x224xf32>
    %122 = vector.extract_strided_slice %36 {offsets = [53, 0], sizes = [1, 224], strides = [1, 1]} : vector<56x224xf32> to vector<1x224xf32>
    %123 = arith.maximumf %121, %122 : vector<1x224xf32>
    %124 = vector.extract_strided_slice %36 {offsets = [54, 0], sizes = [1, 224], strides = [1, 1]} : vector<56x224xf32> to vector<1x224xf32>
    %125 = vector.extract_strided_slice %36 {offsets = [55, 0], sizes = [1, 224], strides = [1, 1]} : vector<56x224xf32> to vector<1x224xf32>
    %126 = arith.maximumf %124, %125 : vector<1x224xf32>
    %127 = tpu.concatenate %87, %90, %93, %96, %99, %102, %105, %108, %111, %114, %117, %120, %123, %126 in 0 : vector<1x224xf32>, vector<1x224xf32>, vector<1x224xf32>, vector<1x224xf32>, vector<1x224xf32>, vector<1x224xf32>, vector<1x224xf32>, vector<1x224xf32>, vector<1x224xf32>, vector<1x224xf32>, vector<1x224xf32>, vector<1x224xf32>, vector<1x224xf32>, vector<1x224xf32> -> vector<14x224xf32>
    %c1_46 = arith.constant 1 : index
    %c2_47 = arith.constant 2 : index
    %c32_48 = arith.constant 32 : index
    %128 = vector.load %arg11[%c1_46, %c2_47, %c32_48] : memref<2x18x288xf32, #tpu.memory_space<vmem>>, vector<1x14x224xf32>
    %129 = vector.shape_cast %128 : vector<1x14x224xf32> to vector<14x224xf32>
    %130 = vector.shape_cast %127 : vector<14x224xf32> to vector<1x14x224xf32>
    tpu.vector_store %arg11[%c1_46, %c2_47, %c32_48], %130 {strides = array<i32>} : memref<2x18x288xf32, #tpu.memory_space<vmem>>, vector<1x14x224xf32>,
    %c0_49 = arith.constant 0 : index
    %c0_50 = arith.constant 0 : index
    %c0_51 = arith.constant 0 : index
    %131 = vector.load %arg11[%c0_49, %c0_50, %c0_51] : memref<2x18x288xf32, #tpu.memory_space<vmem>>, vector<1x14x288xf32>
    %132 = vector.shape_cast %131 : vector<1x14x288xf32> to vector<14x288xf32>
    %c0_52 = arith.constant 0 : index
    %c1_53 = arith.constant 1 : index
    %c0_54 = arith.constant 0 : index
    %133 = vector.load %arg11[%c0_52, %c1_53, %c0_54] : memref<2x18x288xf32, #tpu.memory_space<vmem>>, vector<1x14x288xf32>
    %134 = vector.shape_cast %133 : vector<1x14x288xf32> to vector<14x288xf32>
    %c0_55 = arith.constant 0 : index
    %c2_56 = arith.constant 2 : index
    %c0_57 = arith.constant 0 : index
    %135 = vector.load %arg11[%c0_55, %c2_56, %c0_57] : memref<2x18x288xf32, #tpu.memory_space<vmem>>, vector<1x14x288xf32>
    %136 = vector.shape_cast %135 : vector<1x14x288xf32> to vector<14x288xf32>
    %c0_58 = arith.constant 0 : index
    %c3_59 = arith.constant 3 : index
    %c0_60 = arith.constant 0 : index
    %137 = vector.load %arg11[%c0_58, %c3_59, %c0_60] : memref<2x18x288xf32, #tpu.memory_space<vmem>>, vector<1x14x288xf32>
    %138 = vector.shape_cast %137 : vector<1x14x288xf32> to vector<14x288xf32>
    %c0_61 = arith.constant 0 : index
    %c4_62 = arith.constant 4 : index
    %c0_63 = arith.constant 0 : index
    %139 = vector.load %arg11[%c0_61, %c4_62, %c0_63] : memref<2x18x288xf32, #tpu.memory_space<vmem>>, vector<1x14x288xf32>
    %140 = vector.shape_cast %139 : vector<1x14x288xf32> to vector<14x288xf32>
    %141 = tpu.concatenate %132, %134, %136, %138, %140 in 1 : vector<14x288xf32>, vector<14x288xf32>, vector<14x288xf32>, vector<14x288xf32>, vector<14x288xf32> -> vector<14x1440xf32>
    %c1_64 = arith.constant 1 : index
    %c0_65 = arith.constant 0 : index
    %c0_66 = arith.constant 0 : index
    %142 = vector.load %arg11[%c1_64, %c0_65, %c0_66] : memref<2x18x288xf32, #tpu.memory_space<vmem>>, vector<1x14x288xf32>
    %143 = vector.shape_cast %142 : vector<1x14x288xf32> to vector<14x288xf32>
    %c1_67 = arith.constant 1 : index
    %c1_68 = arith.constant 1 : index
    %c0_69 = arith.constant 0 : index
    %144 = vector.load %arg11[%c1_67, %c1_68, %c0_69] : memref<2x18x288xf32, #tpu.memory_space<vmem>>, vector<1x14x288xf32>
    %145 = vector.shape_cast %144 : vector<1x14x288xf32> to vector<14x288xf32>
    %c1_70 = arith.constant 1 : index
    %c2_71 = arith.constant 2 : index
    %c0_72 = arith.constant 0 : index
    %146 = vector.load %arg11[%c1_70, %c2_71, %c0_72] : memref<2x18x288xf32, #tpu.memory_space<vmem>>, vector<1x14x288xf32>
    %147 = vector.shape_cast %146 : vector<1x14x288xf32> to vector<14x288xf32>
    %c1_73 = arith.constant 1 : index
    %c3_74 = arith.constant 3 : index
    %c0_75 = arith.constant 0 : index
    %148 = vector.load %arg11[%c1_73, %c3_74, %c0_75] : memref<2x18x288xf32, #tpu.memory_space<vmem>>, vector<1x14x288xf32>
    %149 = vector.shape_cast %148 : vector<1x14x288xf32> to vector<14x288xf32>
    %c1_76 = arith.constant 1 : index
    %c4_77 = arith.constant 4 : index
    %c0_78 = arith.constant 0 : index
    %150 = vector.load %arg11[%c1_76, %c4_77, %c0_78] : memref<2x18x288xf32, #tpu.memory_space<vmem>>, vector<1x14x288xf32>
    %151 = vector.shape_cast %150 : vector<1x14x288xf32> to vector<14x288xf32>
    %152 = tpu.concatenate %143, %145, %147, %149, %151 in 1 : vector<14x288xf32>, vector<14x288xf32>, vector<14x288xf32>, vector<14x288xf32>, vector<14x288xf32> -> vector<14x1440xf32>
    %153 = tpu.concatenate %141, %152 in 0 : vector<14x1440xf32>, vector<14x1440xf32> -> vector<28x1440xf32>
    %c0_79 = arith.constant 0 : index
    %c0_80 = arith.constant 0 : index
    %154 = vector.load %arg4[%c0_79, %c0_80] : memref<1440x448xf32, #tpu.memory_space<vmem>>, vector<1440x448xf32>
    %cst_81 = arith.constant dense<0.000000e+00> : vector<28x448xf32>
    %155 = tpu.matmul %153, %154, %cst_81 {dimension_numbers = #tpu.dot_dimension_numbers<[1], [0], [0], [1], [0, 0, 1, 1], [], []>} : vector<28x1440xf32>, vector<1440x448xf32>, vector<28x448xf32> -> vector<28x448xf32>
    %c0_82 = arith.constant 0 : index
    %c0_83 = arith.constant 0 : index
    %156 = vector.load %arg5[%c0_82, %c0_83] : memref<1x448xf32, #tpu.memory_space<vmem>>, vector<1x448xf32>
    %157 = vector.broadcast %156 : vector<1x448xf32> to vector<28x448xf32>
    %158 = arith.addf %155, %157 : vector<28x448xf32>
    %cst_84 = arith.constant 0.000000e+00 : f32
    %159 = vector.broadcast %cst_84 : f32 to vector<28x448xf32>
    %160 = arith.maximumf %158, %159 : vector<28x448xf32>
    %161 = vector.extract_strided_slice %160 {offsets = [0, 0], sizes = [28, 224], strides = [1, 1]} : vector<28x448xf32> to vector<28x224xf32>
    %162 = vector.extract_strided_slice %160 {offsets = [0, 224], sizes = [28, 224], strides = [1, 1]} : vector<28x448xf32> to vector<28x224xf32>
    %163 = arith.maximumf %161, %162 : vector<28x224xf32>
    %164 = vector.extract_strided_slice %163 {offsets = [0, 0], sizes = [1, 224], strides = [1, 1]} : vector<28x224xf32> to vector<1x224xf32>
    %165 = vector.extract_strided_slice %163 {offsets = [1, 0], sizes = [1, 224], strides = [1, 1]} : vector<28x224xf32> to vector<1x224xf32>
    %166 = arith.maximumf %164, %165 : vector<1x224xf32>
    %167 = vector.extract_strided_slice %163 {offsets = [2, 0], sizes = [1, 224], strides = [1, 1]} : vector<28x224xf32> to vector<1x224xf32>
    %168 = vector.extract_strided_slice %163 {offsets = [3, 0], sizes = [1, 224], strides = [1, 1]} : vector<28x224xf32> to vector<1x224xf32>
    %169 = arith.maximumf %167, %168 : vector<1x224xf32>
    %170 = vector.extract_strided_slice %163 {offsets = [4, 0], sizes = [1, 224], strides = [1, 1]} : vector<28x224xf32> to vector<1x224xf32>
    %171 = vector.extract_strided_slice %163 {offsets = [5, 0], sizes = [1, 224], strides = [1, 1]} : vector<28x224xf32> to vector<1x224xf32>
    %172 = arith.maximumf %170, %171 : vector<1x224xf32>
    %173 = vector.extract_strided_slice %163 {offsets = [6, 0], sizes = [1, 224], strides = [1, 1]} : vector<28x224xf32> to vector<1x224xf32>
    %174 = vector.extract_strided_slice %163 {offsets = [7, 0], sizes = [1, 224], strides = [1, 1]} : vector<28x224xf32> to vector<1x224xf32>
    %175 = arith.maximumf %173, %174 : vector<1x224xf32>
    %176 = vector.extract_strided_slice %163 {offsets = [8, 0], sizes = [1, 224], strides = [1, 1]} : vector<28x224xf32> to vector<1x224xf32>
    %177 = vector.extract_strided_slice %163 {offsets = [9, 0], sizes = [1, 224], strides = [1, 1]} : vector<28x224xf32> to vector<1x224xf32>
    %178 = arith.maximumf %176, %177 : vector<1x224xf32>
    %179 = vector.extract_strided_slice %163 {offsets = [10, 0], sizes = [1, 224], strides = [1, 1]} : vector<28x224xf32> to vector<1x224xf32>
    %180 = vector.extract_strided_slice %163 {offsets = [11, 0], sizes = [1, 224], strides = [1, 1]} : vector<28x224xf32> to vector<1x224xf32>
    %181 = arith.maximumf %179, %180 : vector<1x224xf32>
    %182 = vector.extract_strided_slice %163 {offsets = [12, 0], sizes = [1, 224], strides = [1, 1]} : vector<28x224xf32> to vector<1x224xf32>
    %183 = vector.extract_strided_slice %163 {offsets = [13, 0], sizes = [1, 224], strides = [1, 1]} : vector<28x224xf32> to vector<1x224xf32>
    %184 = arith.maximumf %182, %183 : vector<1x224xf32>
    %185 = tpu.concatenate %166, %169, %172, %175, %178, %181, %184 in 1 : vector<1x224xf32>, vector<1x224xf32>, vector<1x224xf32>, vector<1x224xf32>, vector<1x224xf32>, vector<1x224xf32>, vector<1x224xf32> -> vector<1x1568xf32>
    %186 = vector.extract_strided_slice %163 {offsets = [14, 0], sizes = [1, 224], strides = [1, 1]} : vector<28x224xf32> to vector<1x224xf32>
    %187 = vector.extract_strided_slice %163 {offsets = [15, 0], sizes = [1, 224], strides = [1, 1]} : vector<28x224xf32> to vector<1x224xf32>
    %188 = arith.maximumf %186, %187 : vector<1x224xf32>
    %189 = vector.extract_strided_slice %163 {offsets = [16, 0], sizes = [1, 224], strides = [1, 1]} : vector<28x224xf32> to vector<1x224xf32>
    %190 = vector.extract_strided_slice %163 {offsets = [17, 0], sizes = [1, 224], strides = [1, 1]} : vector<28x224xf32> to vector<1x224xf32>
    %191 = arith.maximumf %189, %190 : vector<1x224xf32>
    %192 = vector.extract_strided_slice %163 {offsets = [18, 0], sizes = [1, 224], strides = [1, 1]} : vector<28x224xf32> to vector<1x224xf32>
    %193 = vector.extract_strided_slice %163 {offsets = [19, 0], sizes = [1, 224], strides = [1, 1]} : vector<28x224xf32> to vector<1x224xf32>
    %194 = arith.maximumf %192, %193 : vector<1x224xf32>
    %195 = vector.extract_strided_slice %163 {offsets = [20, 0], sizes = [1, 224], strides = [1, 1]} : vector<28x224xf32> to vector<1x224xf32>
    %196 = vector.extract_strided_slice %163 {offsets = [21, 0], sizes = [1, 224], strides = [1, 1]} : vector<28x224xf32> to vector<1x224xf32>
    %197 = arith.maximumf %195, %196 : vector<1x224xf32>
    %198 = vector.extract_strided_slice %163 {offsets = [22, 0], sizes = [1, 224], strides = [1, 1]} : vector<28x224xf32> to vector<1x224xf32>
    %199 = vector.extract_strided_slice %163 {offsets = [23, 0], sizes = [1, 224], strides = [1, 1]} : vector<28x224xf32> to vector<1x224xf32>
    %200 = arith.maximumf %198, %199 : vector<1x224xf32>
    %201 = vector.extract_strided_slice %163 {offsets = [24, 0], sizes = [1, 224], strides = [1, 1]} : vector<28x224xf32> to vector<1x224xf32>
    %202 = vector.extract_strided_slice %163 {offsets = [25, 0], sizes = [1, 224], strides = [1, 1]} : vector<28x224xf32> to vector<1x224xf32>
    %203 = arith.maximumf %201, %202 : vector<1x224xf32>
    %204 = vector.extract_strided_slice %163 {offsets = [26, 0], sizes = [1, 224], strides = [1, 1]} : vector<28x224xf32> to vector<1x224xf32>
    %205 = vector.extract_strided_slice %163 {offsets = [27, 0], sizes = [1, 224], strides = [1, 1]} : vector<28x224xf32> to vector<1x224xf32>
    %206 = arith.maximumf %204, %205 : vector<1x224xf32>
    %207 = tpu.concatenate %188, %191, %194, %197, %200, %203, %206 in 1 : vector<1x224xf32>, vector<1x224xf32>, vector<1x224xf32>, vector<1x224xf32>, vector<1x224xf32>, vector<1x224xf32>, vector<1x224xf32> -> vector<1x1568xf32>
    %208 = tpu.concatenate %185, %207 in 0 : vector<1x1568xf32>, vector<1x1568xf32> -> vector<2x1568xf32>
    %c0_85 = arith.constant 0 : index
    %c0_86 = arith.constant 0 : index
    %209 = vector.load %arg9[%c0_85, %c0_86] : memref<2x1568xf32, #tpu.memory_space<vmem>>, vector<2x1568xf32>
    tpu.vector_store %arg9[%c0_85, %c0_86], %208 {strides = array<i32>} : memref<2x1568xf32, #tpu.memory_space<vmem>>, vector<2x1568xf32>,
    %c0_87 = arith.constant 0 : index
    %c0_88 = arith.constant 0 : index
    %210 = vector.load %arg6[%c0_87, %c0_88] : memref<1568x10xf32, #tpu.memory_space<vmem>>, vector<1568x10xf32>
    %cst_89 = arith.constant dense<0.000000e+00> : vector<2x10xf32>
    %211 = tpu.matmul %208, %210, %cst_89 {dimension_numbers = #tpu.dot_dimension_numbers<[1], [0], [0], [1], [0, 0, 1, 1], [], []>} : vector<2x1568xf32>, vector<1568x10xf32>, vector<2x10xf32> -> vector<2x10xf32>
    %c0_90 = arith.constant 0 : index
    %c0_91 = arith.constant 0 : index
    %212 = vector.load %arg7[%c0_90, %c0_91] : memref<1x10xf32, #tpu.memory_space<vmem>>, vector<1x10xf32>
    %213 = vector.broadcast %212 : vector<1x10xf32> to vector<2x10xf32>
    %214 = arith.addf %211, %213 : vector<2x10xf32>
    %c0_92 = arith.constant 0 : index
    %c0_93 = arith.constant 0 : index
    %215 = vector.load %arg8[%c0_92, %c0_93] : memref<2x10xf32, #tpu.memory_space<vmem>>, vector<2x10xf32>
    tpu.vector_store %arg8[%c0_92, %c0_93], %214 {strides = array<i32>} : memref<2x10xf32, #tpu.memory_space<vmem>>, vector<2x10xf32>,
    return
  }
  func.func @transform_0(%arg0: i32) -> (i32, i32, i32) {
    %c0_i32 = arith.constant 0 : i32
    %c0_i32_0 = arith.constant 0 : i32
    %c0_i32_1 = arith.constant 0 : i32
    return %arg0, %c0_i32, %c0_i32_0 : i32, i32, i32
  }
  func.func @transform_1(%arg0: i32) -> (i32, i32) {
    %c0_i32 = arith.constant 0 : i32
    %c0_i32_0 = arith.constant 0 : i32
    %c0_i32_1 = arith.constant 0 : i32
    return %c0_i32, %c0_i32_0 : i32, i32
  }
  func.func @transform_2(%arg0: i32) -> (i32, i32) {
    %c0_i32 = arith.constant 0 : i32
    %c0_i32_0 = arith.constant 0 : i32
    %c0_i32_1 = arith.constant 0 : i32
    return %c0_i32, %c0_i32_0 : i32, i32
  }
  func.func @transform_3(%arg0: i32) -> (i32, i32) {
    %c0_i32 = arith.constant 0 : i32
    %c0_i32_0 = arith.constant 0 : i32
    %c0_i32_1 = arith.constant 0 : i32
    return %c0_i32, %c0_i32_0 : i32, i32
  }
  func.func @transform_4(%arg0: i32) -> (i32, i32) {
    %c0_i32 = arith.constant 0 : i32
    %c0_i32_0 = arith.constant 0 : i32
    %c0_i32_1 = arith.constant 0 : i32
    return %c0_i32, %c0_i32_0 : i32, i32
  }
  func.func @transform_5(%arg0: i32) -> (i32, i32) {
    %c0_i32 = arith.constant 0 : i32
    %c0_i32_0 = arith.constant 0 : i32
    %c0_i32_1 = arith.constant 0 : i32
    return %c0_i32, %c0_i32_0 : i32, i32
  }
  func.func @transform_6(%arg0: i32) -> (i32, i32) {
    %c0_i32 = arith.constant 0 : i32
    %c0_i32_0 = arith.constant 0 : i32
    %c0_i32_1 = arith.constant 0 : i32
    return %c0_i32, %c0_i32_0 : i32, i32
  }
  func.func @transform_7(%arg0: i32) -> (i32, i32) {
    %c0_i32 = arith.constant 0 : i32
    %c0_i32_0 = arith.constant 0 : i32
    return %arg0, %c0_i32 : i32, i32
  }
  func.func @transform_8(%arg0: i32) -> (i32, i32) {
    %c0_i32 = arith.constant 0 : i32
    %c0_i32_0 = arith.constant 0 : i32
    return %arg0, %c0_i32 : i32, i32
  }
}

</mosaic_0001>

<llo_original>
// kernel: cnn_forward.1
$region0: #{cnn_forward.1}
  #allocation0 [shape = 'u32[]', space=smem, size = 0x4, offset = 0x4, fixed_abs, tag = 'smem constant byte address 0x4 - core index']
  #allocation1 [shape = 'u32[144,128]{1,0:T(1,128)}', space=vmem, size = 0x12000, scoped, tag = 'internal scratch']
  #allocation2 [shape = 'f32[2,32,32]{2,1,0:T(8,128)}', space=vmem, size = 0x8000, scoped, tag = 'scratch operand']
  #allocation3 [shape = 'f32[2,18,288]{2,1,0:T(8,128)}', space=vmem, size = 0x12000, scoped, tag = 'scratch operand']
  %s0 = inlined_call_operand.vmem [shape: f32[2,28,28], index: 0, kind: input, shape index: {}]
  %s1 = inlined_call_operand.vmem [shape: f32[160,448], index: 1, kind: input, shape index: {}]
  %s2 = inlined_call_operand.vmem [shape: f32[1,448], index: 2, kind: input, shape index: {}]
  %s3 = inlined_call_operand.vmem [shape: f32[1440,448], index: 3, kind: input, shape index: {}]
  %s4 = inlined_call_operand.vmem [shape: f32[1,448], index: 4, kind: input, shape index: {}]
  %s5 = inlined_call_operand.vmem [shape: f32[1568,10], index: 5, kind: input, shape index: {}]
  %s6 = inlined_call_operand.vmem [shape: f32[1,10], index: 6, kind: input, shape index: {}]
  %s7 = inlined_call_operand.hbm [shape: f32[2,10], index: 7, kind: output, shape index: {0}]
  %s8 = inlined_call_operand.vmem [shape: f32[2,1568], index: 8, kind: output, shape index: {1}]
  %9 = xla_tuple %s7, %s8
  %s10 = sld [smem:[#allocation0]]
  $region46: #{cnn_forward.1} parent=0
    _
  %s12 = ssub.s32 1, %s10
  %s13 = scalar_select 0, %s12, %s10
  $region1: #{cnn_forward.1} parent=0
    #allocation4 [shape = 'u8[1024]{0}', space=vmem, size = 0x400, scoped, tag = 'output window, operand 0, single buffered']
    #allocation5 [shape = 's32[1]{0}', space=sflag, size = 0x4, scoped, tag = 'scoped memory for cnn_forward.1']
    %14 = vsyncpa [#allocation5], 0
    // Predicated region
    $region2: #{cnn_forward.1} parent=1 // pred_check
      _
    $region3: #{cnn_forward.1} parent=1 // pred_check_branch
      %16 = sbr.rel (0) target = $region5
    $region4: #{cnn_forward.1} parent=1 // pred_region
      _
    $region5: #{cnn_forward.1} parent=1 // pred_fallthru
      _
    // Predicated region
    $region6: #{cnn_forward.1} parent=1 // pred_check
      _
    $region7: #{cnn_forward.1} parent=1 // pred_check_branch
      %18 = sbr.rel (0) target = $region9
    $region8: #{cnn_forward.1} parent=1 // pred_region
      _
    $region9: #{cnn_forward.1} parent=1 // pred_fallthru
      _
    // Predicated region
    $region10: #{cnn_forward.1} parent=1 // pred_check
      _
    $region11: #{cnn_forward.1} parent=1 // pred_check_branch
      %20 = sbr.rel (0) target = $region13
    $region12: #{cnn_forward.1} parent=1 // pred_region
      _
    $region13: #{cnn_forward.1} parent=1 // pred_fallthru
      _
    // Predicated region
    $region14: #{cnn_forward.1} parent=1 // pred_check
      _
    $region15: #{cnn_forward.1} parent=1 // pred_check_branch
      %22 = sbr.rel (0) target = $region17
    $region16: #{cnn_forward.1} parent=1 // pred_region
      _
    $region17: #{cnn_forward.1} parent=1 // pred_fallthru
      _
    // Predicated region
    $region18: #{cnn_forward.1} parent=1 // pred_check
      _
    $region19: #{cnn_forward.1} parent=1 // pred_check_branch
      %24 = sbr.rel (0) target = $region21
    $region20: #{cnn_forward.1} parent=1 // pred_region
      _
    $region21: #{cnn_forward.1} parent=1 // pred_fallthru
      _
    // Predicated region
    $region22: #{cnn_forward.1} parent=1 // pred_check
      _
    $region23: #{cnn_forward.1} parent=1 // pred_check_branch
      %26 = sbr.rel (0) target = $region25
    $region24: #{cnn_forward.1} parent=1 // pred_region
      _
    $region25: #{cnn_forward.1} parent=1 // pred_fallthru
      _
    // Predicated region
    $region26: #{cnn_forward.1} parent=1 // pred_check
      _
    $region27: #{cnn_forward.1} parent=1 // pred_check_branch
      %28 = sbr.rel (0) target = $region29
    $region28: #{cnn_forward.1} parent=1 // pred_region
      _
    $region29: #{cnn_forward.1} parent=1 // pred_fallthru
      _
    %vm29 = vcmask 261120
    %30 = vst.msk [vmem:[#allocation2] sm:$0xff] %vm29, 0.0
    %31 = vst.msk [vmem:[#allocation2 + $0x8] sm:$0xff] %vm29, 0.0
    %32 = vst.msk [vmem:[#allocation2 + $0x10] sm:$0xff] %vm29, 0.0
    %33 = vst.msk [vmem:[#allocation2 + $0x18] sm:$0xff] %vm29, 0.0
    %34 = vst.msk [vmem:[#allocation2 + $0x20] sm:$0xff] %vm29, 0.0
    %35 = vst.msk [vmem:[#allocation2 + $0x28] sm:$0xff] %vm29, 0.0
    %36 = vst.msk [vmem:[#allocation2 + $0x30] sm:$0xff] %vm29, 0.0
    %37 = vst.msk [vmem:[#allocation2 + $0x38] sm:$0xff] %vm29, 0.0
    %v38 = vld [vmem:[%s0] sm:$0xff]
    %v39 = vld [vmem:[%s0 + $0x8] sm:$0xff]
    %v40 = vld [vmem:[%s0 + $0x10] sm:$0xff]
    %v41 = vld [vmem:[%s0 + $0x18] sm:$0xf]
    %v42 = vld [vmem:[%s0 + $0x20] sm:$0xff]
    %v43 = vld [vmem:[%s0 + $0x28] sm:$0xff]
    %v44 = vld [vmem:[%s0 + $0x30] sm:$0xff]
    %v45 = vld [vmem:[%s0 + $0x38] sm:$0xf]
    %54 = vrot.lane.b32.xlu0 %v38, 2
    %v55 = vpop.permute.xlu0 %54
    %56 = vrot.lane.b32.xlu0 %v39, 2
    %v57 = vpop.permute.xlu0 %56
    %58 = vrot.lane.b32.xlu0 %v40, 2
    %v59 = vpop.permute.xlu0 %58
    %60 = vrot.lane.b32.xlu0 %v41, 2
    %v61 = vpop.permute.xlu0 %60
    %62 = vrot.lane.b32.xlu0 %v42, 2
    %v63 = vpop.permute.xlu0 %62
    %64 = vrot.lane.b32.xlu0 %v43, 2
    %v65 = vpop.permute.xlu0 %64
    %66 = vrot.lane.b32.xlu0 %v44, 2
    %v67 = vpop.permute.xlu0 %66
    %68 = vrot.lane.b32.xlu0 %v45, 2
    %v69 = vpop.permute.xlu0 %68
    %vm78 = vcmask 244752
    %79 = vst.msk [vmem:[#allocation2 + $0x2] sm:$0xff] %vm78, %v55
    %80 = vst.msk [vmem:[#allocation2 + $0xa] sm:$0xff] %vm78, %v57
    %81 = vst.msk [vmem:[#allocation2 + $0x12] sm:$0xff] %vm78, %v59
    %vm82 = vcmask 240656
    %83 = vst.msk [vmem:[#allocation2 + $0x1a] sm:$0xf] %vm82, %v61
    %84 = vst.msk [vmem:[#allocation2 + $0x22] sm:$0xff] %vm78, %v63
    %85 = vst.msk [vmem:[#allocation2 + $0x2a] sm:$0xff] %vm78, %v65
    %86 = vst.msk [vmem:[#allocation2 + $0x32] sm:$0xff] %vm78, %v67
    %87 = vst.msk [vmem:[#allocation2 + $0x3a] sm:$0xf] %vm82, %v69
    %v88 = vld [vmem:[#allocation2] sm:$0xff]
    %v89 = vld [vmem:[#allocation2 + $0x8] sm:$0xff]
    %v90 = vld [vmem:[#allocation2 + $0x10] sm:$0xff]
    %v91 = vld [vmem:[#allocation2 + $0x18] sm:$0xf]
    %v92 = vld [vmem:[#allocation2 + $0x1] sm:$0xff]
    %v93 = vld [vmem:[#allocation2 + $0x9] sm:$0xff]
    %v94 = vld [vmem:[#allocation2 + $0x11] sm:$0xff]
    %v95 = vld [vmem:[#allocation2 + $0x19] sm:$0xf]
    %v96 = vld [vmem:[#allocation2 + $0x2] sm:$0xff]
    %v97 = vld [vmem:[#allocation2 + $0xa] sm:$0xff]
    %v98 = vld [vmem:[#allocation2 + $0x12] sm:$0xff]
    %v99 = vld [vmem:[#allocation2 + $0x1a] sm:$0xf]
    %v100 = vld [vmem:[#allocation2 + $0x3] sm:$0xff]
    %v101 = vld [vmem:[#allocation2 + $0xb] sm:$0xff]
    %v102 = vld [vmem:[#allocation2 + $0x13] sm:$0xff]
    %v103 = vld [vmem:[#allocation2 + $0x1b] sm:$0xf]
    %v104 = vld [vmem:[#allocation2 + $0x4] sm:$0xff]
    %v105 = vld [vmem:[#allocation2 + $0xc] sm:$0xff]
    %v106 = vld [vmem:[#allocation2 + $0x14] sm:$0xff]
    %v107 = vld [vmem:[#allocation2 + $0x1c] sm:$0xf]
    %112 = vrot.lane.b32.xlu0 %v92, 32
    %v113 = vpop.permute.xlu0 %112
    %114 = vrot.lane.b32.xlu0 %v93, 32
    %v115 = vpop.permute.xlu0 %114
    %116 = vrot.lane.b32.xlu0 %v94, 32
    %v117 = vpop.permute.xlu0 %116
    %118 = vrot.lane.b32.xlu0 %v95, 32
    %v119 = vpop.permute.xlu0 %118
    %128 = vrot.lane.b32.xlu0 %v96, 64
    %v129 = vpop.permute.xlu0 %128
    %130 = vrot.lane.b32.xlu0 %v97, 64
    %v131 = vpop.permute.xlu0 %130
    %132 = vrot.lane.b32.xlu0 %v98, 64
    %v133 = vpop.permute.xlu0 %132
    %134 = vrot.lane.b32.xlu0 %v99, 64
    %v135 = vpop.permute.xlu0 %134
    %144 = vrot.lane.b32.xlu0 %v100, 96
    %v145 = vpop.permute.xlu0 %144
    %146 = vrot.lane.b32.xlu0 %v101, 96
    %v147 = vpop.permute.xlu0 %146
    %148 = vrot.lane.b32.xlu0 %v102, 96
    %v149 = vpop.permute.xlu0 %148
    %150 = vrot.lane.b32.xlu0 %v103, 96
    %v151 = vpop.permute.xlu0 %150
    %v156 = vsel %vm29, %v88, %v113
    %v157 = vsel %vm29, %v89, %v115
    %v158 = vsel %vm29, %v90, %v117
    %v159 = vsel %vm29, %v91, %v119
    %vm160 = vcmask 523264
    %v161 = vsel %vm160, %v156, %v129
    %v162 = vsel %vm160, %v157, %v131
    %v163 = vsel %vm160, %v158, %v133
    %v164 = vsel %vm160, %v159, %v135
    %vm165 = vcmask 785408
    %v166 = vsel %vm165, %v161, %v145
    %v167 = vsel %vm165, %v162, %v147
    %v168 = vsel %vm165, %v163, %v149
    %v169 = vsel %vm165, %v164, %v151
    %s170 = scalar_lea.vmem [#allocation2], 32
    %v171 = vld [vmem:[%s170] sm:$0xff]
    %v172 = vld [vmem:[%s170 + $0x8] sm:$0xff]
    %v173 = vld [vmem:[%s170 + $0x10] sm:$0xff]
    %v174 = vld [vmem:[%s170 + $0x18] sm:$0xf]
    %v175 = vld [vmem:[%s170 + $0x1] sm:$0xff]
    %v176 = vld [vmem:[%s170 + $0x9] sm:$0xff]
    %v177 = vld [vmem:[%s170 + $0x11] sm:$0xff]
    %v178 = vld [vmem:[%s170 + $0x19] sm:$0xf]
    %v179 = vld [vmem:[%s170 + $0x2] sm:$0xff]
    %v180 = vld [vmem:[%s170 + $0xa] sm:$0xff]
    %v181 = vld [vmem:[%s170 + $0x12] sm:$0xff]
    %v182 = vld [vmem:[%s170 + $0x1a] sm:$0xf]
    %v183 = vld [vmem:[%s170 + $0x3] sm:$0xff]
    %v184 = vld [vmem:[%s170 + $0xb] sm:$0xff]
    %v185 = vld [vmem:[%s170 + $0x13] sm:$0xff]
    %v186 = vld [vmem:[%s170 + $0x1b] sm:$0xf]
    %v187 = vld [vmem:[%s170 + $0x4] sm:$0xff]
    %v188 = vld [vmem:[%s170 + $0xc] sm:$0xff]
    %v189 = vld [vmem:[%s170 + $0x14] sm:$0xff]
    %v190 = vld [vmem:[%s170 + $0x1c] sm:$0xf]
    %195 = vrot.lane.b32.xlu0 %v175, 32
    %v196 = vpop.permute.xlu0 %195
    %197 = vrot.lane.b32.xlu0 %v176, 32
    %v198 = vpop.permute.xlu0 %197
    %199 = vrot.lane.b32.xlu0 %v177, 32
    %v200 = vpop.permute.xlu0 %199
    %201 = vrot.lane.b32.xlu0 %v178, 32
    %v202 = vpop.permute.xlu0 %201
    %211 = vrot.lane.b32.xlu0 %v179, 64
    %v212 = vpop.permute.xlu0 %211
    %213 = vrot.lane.b32.xlu0 %v180, 64
    %v214 = vpop.permute.xlu0 %213
    %215 = vrot.lane.b32.xlu0 %v181, 64
    %v216 = vpop.permute.xlu0 %215
    %217 = vrot.lane.b32.xlu0 %v182, 64
    %v218 = vpop.permute.xlu0 %217
    %227 = vrot.lane.b32.xlu0 %v183, 96
    %v228 = vpop.permute.xlu0 %227
    %229 = vrot.lane.b32.xlu0 %v184, 96
    %v230 = vpop.permute.xlu0 %229
    %231 = vrot.lane.b32.xlu0 %v185, 96
    %v232 = vpop.permute.xlu0 %231
    %233 = vrot.lane.b32.xlu0 %v186, 96
    %v234 = vpop.permute.xlu0 %233
    %v239 = vsel %vm29, %v171, %v196
    %v240 = vsel %vm29, %v172, %v198
    %v241 = vsel %vm29, %v173, %v200
    %v242 = vsel %vm29, %v174, %v202
    %v243 = vsel %vm160, %v239, %v212
    %v244 = vsel %vm160, %v240, %v214
    %v245 = vsel %vm160, %v241, %v216
    %v246 = vsel %vm160, %v242, %v218
    %v247 = vsel %vm165, %v243, %v228
    %v248 = vsel %vm165, %v244, %v230
    %v249 = vsel %vm165, %v245, %v232
    %v250 = vsel %vm165, %v246, %v234
    %vm259 = vcmask 1043456
    %v260 = vrot.slane %v247, 4
    %v261 = vrot.slane %v187, 4
    %v262 = vrot.slane %v248, 4
    %v263 = vsel %vm259, %v260, %v262
    %v264 = vrot.slane %v188, 4
    %v265 = vsel %vm259, %v261, %v264
    %v266 = vrot.slane %v249, 4
    %v267 = vsel %vm259, %v262, %v266
    %v268 = vrot.slane %v189, 4
    %v269 = vsel %vm259, %v264, %v268
    %v270 = vrot.slane %v250, 4
    %v271 = vsel %vm259, %v266, %v270
    %v272 = vrot.slane %v190, 4
    %v273 = vsel %vm259, %v268, %v272
    %v279 = vsel %vm259, %v169, %v260
    %v280 = vsel %vm259, %v107, %v261
    %v281 = vld [vmem:[%s1] sm:$0xff]
    %v282 = vld [vmem:[%s1 + $0x8] sm:$0xff]
    %v283 = vld [vmem:[%s1 + $0x10] sm:$0xff]
    %v284 = vld [vmem:[%s1 + $0x18] sm:$0xff]
    %v285 = vld [vmem:[%s1 + $0x20] sm:$0xff]
    %v286 = vld [vmem:[%s1 + $0x28] sm:$0xff]
    %v287 = vld [vmem:[%s1 + $0x30] sm:$0xff]
    %v288 = vld [vmem:[%s1 + $0x38] sm:$0xff]
    %v289 = vld [vmem:[%s1 + $0x40] sm:$0xff]
    %v290 = vld [vmem:[%s1 + $0x48] sm:$0xff]
    %v291 = vld [vmem:[%s1 + $0x50] sm:$0xff]
    %v292 = vld [vmem:[%s1 + $0x58] sm:$0xff]
    %v293 = vld [vmem:[%s1 + $0x60] sm:$0xff]
    %v294 = vld [vmem:[%s1 + $0x68] sm:$0xff]
    %v295 = vld [vmem:[%s1 + $0x70] sm:$0xff]
    %v296 = vld [vmem:[%s1 + $0x78] sm:$0xff]
    %v297 = vld [vmem:[%s1 + $0x80] sm:$0xff]
    %v298 = vld [vmem:[%s1 + $0x88] sm:$0xff]
    %v299 = vld [vmem:[%s1 + $0x90] sm:$0xff]
    %v300 = vld [vmem:[%s1 + $0x98] sm:$0xff]
    %v301 = vld [vmem:[%s1 + $0xa0] sm:$0xff]
    %v302 = vld [vmem:[%s1 + $0xa8] sm:$0xff]
    %v303 = vld [vmem:[%s1 + $0xb0] sm:$0xff]
    %v304 = vld [vmem:[%s1 + $0xb8] sm:$0xff]
    %v305 = vld [vmem:[%s1 + $0xc0] sm:$0xff]
    %v306 = vld [vmem:[%s1 + $0xc8] sm:$0xff]
    %v307 = vld [vmem:[%s1 + $0xd0] sm:$0xff]
    %v308 = vld [vmem:[%s1 + $0xd8] sm:$0xff]
    %v309 = vld [vmem:[%s1 + $0xe0] sm:$0xff]
    %v310 = vld [vmem:[%s1 + $0xe8] sm:$0xff]
    %v311 = vld [vmem:[%s1 + $0xf0] sm:$0xff]
    %v312 = vld [vmem:[%s1 + $0xf8] sm:$0xff]
    %v313 = vld [vmem:[%s1 + $0x100] sm:$0xff]
    %v314 = vld [vmem:[%s1 + $0x108] sm:$0xff]
    %v315 = vld [vmem:[%s1 + $0x110] sm:$0xff]
    %v316 = vld [vmem:[%s1 + $0x118] sm:$0xff]
    %v317 = vld [vmem:[%s1 + $0x120] sm:$0xff]
    %v318 = vld [vmem:[%s1 + $0x128] sm:$0xff]
    %v319 = vld [vmem:[%s1 + $0x130] sm:$0xff]
    %v320 = vld [vmem:[%s1 + $0x138] sm:$0xff]
    %v321 = vld [vmem:[%s1 + $0x140] sm:$0xff]
    %v322 = vld [vmem:[%s1 + $0x148] sm:$0xff]
    %v323 = vld [vmem:[%s1 + $0x150] sm:$0xff]
    %v324 = vld [vmem:[%s1 + $0x158] sm:$0xff]
    %v325 = vld [vmem:[%s1 + $0x160] sm:$0xff]
    %v326 = vld [vmem:[%s1 + $0x168] sm:$0xff]
    %v327 = vld [vmem:[%s1 + $0x170] sm:$0xff]
    %v328 = vld [vmem:[%s1 + $0x178] sm:$0xff]
    %v329 = vld [vmem:[%s1 + $0x180] sm:$0xff]
    %v330 = vld [vmem:[%s1 + $0x188] sm:$0xff]
    %v331 = vld [vmem:[%s1 + $0x190] sm:$0xff]
    %v332 = vld [vmem:[%s1 + $0x198] sm:$0xff]
    %v333 = vld [vmem:[%s1 + $0x1a0] sm:$0xff]
    %v334 = vld [vmem:[%s1 + $0x1a8] sm:$0xff]
    %v335 = vld [vmem:[%s1 + $0x1b0] sm:$0xff]
    %v336 = vld [vmem:[%s1 + $0x1b8] sm:$0xff]
    %v337 = vld [vmem:[%s1 + $0x1c0] sm:$0xff]
    %v338 = vld [vmem:[%s1 + $0x1c8] sm:$0xff]
    %v339 = vld [vmem:[%s1 + $0x1d0] sm:$0xff]
    %v340 = vld [vmem:[%s1 + $0x1d8] sm:$0xff]
    %v341 = vld [vmem:[%s1 + $0x1e0] sm:$0xff]
    %v342 = vld [vmem:[%s1 + $0x1e8] sm:$0xff]
    %v343 = vld [vmem:[%s1 + $0x1f0] sm:$0xff]
    %v344 = vld [vmem:[%s1 + $0x1f8] sm:$0xff]
    %v345 = vld [vmem:[%s1 + $0x200] sm:$0xff]
    %v346 = vld [vmem:[%s1 + $0x208] sm:$0xff]
    %v347 = vld [vmem:[%s1 + $0x210] sm:$0xff]
    %v348 = vld [vmem:[%s1 + $0x218] sm:$0xff]
    %v349 = vld [vmem:[%s1 + $0x220] sm:$0xff]
    %v350 = vld [vmem:[%s1 + $0x228] sm:$0xff]
    %v351 = vld [vmem:[%s1 + $0x230] sm:$0xff]
    %v352 = vld [vmem:[%s1 + $0x238] sm:$0xff]
    %v353 = vld [vmem:[%s1 + $0x240] sm:$0xff]
    %v354 = vld [vmem:[%s1 + $0x248] sm:$0xff]
    %v355 = vld [vmem:[%s1 + $0x250] sm:$0xff]
    %v356 = vld [vmem:[%s1 + $0x258] sm:$0xff]
    %v357 = vld [vmem:[%s1 + $0x260] sm:$0xff]
    %v358 = vld [vmem:[%s1 + $0x268] sm:$0xff]
    %v359 = vld [vmem:[%s1 + $0x270] sm:$0xff]
    %v360 = vld [vmem:[%s1 + $0x278] sm:$0xff]
    %v361 = vld [vmem:[%s2] sm:$0xf]
    %v363 = vlaneseq
    %v364 = vshrl.u32 %v363, 7
    %v365 = vsub.s32 0, %v364
    %v366 = vrot.slane %v361, %v365
    %v367 = vlaneseq
    %v368 = vshrl.u32 %v367, 7
    %v369 = vsub.s32 1, %v368
    %v370 = vrot.slane %v361, %v369
    %v371 = vlaneseq
    %v372 = vshrl.u32 %v371, 7
    %v373 = vsub.s32 2, %v372
    %v374 = vrot.slane %v361, %v373
    %v375 = vlaneseq
    %v376 = vshrl.u32 %v375, 7
    %v377 = vsub.s32 3, %v376
    %v378 = vrot.slane %v361, %v377
    %v384 = vsel %vm29, %v104, 0
    %v387 = vsel %vm29, %v105, 0
    %v390 = vsel %vm29, %v106, 0
    %v393 = vsel %vm29, %v280, 0
    %v395 = vsel %vm29, %v265, 0
    %v397 = vsel %vm29, %v269, 0
    %v399 = vsel %vm29, %v273, 0
    %401 = vmatprep.subr.mxu0 %v282
    %402 = vmatpush1.msra.mxu0 %v281
    %403 = vmatprep.subr.mxu0 %v286
    %404 = vmatpush1.msra.mxu0 %v285
    %405 = vmatprep.subr.mxu0 %v290
    %406 = vmatpush1.msra.mxu0 %v289
    %407 = vmatprep.subr.mxu0 %v294
    %408 = vmatpush1.msra.mxu0 %v293
    %409 = vmatprep.subr.mxu0 %v298
    %410 = vmatpush1.msra.mxu0 %v297
    %411 = vmatprep.subr.mxu0 %v302
    %412 = vmatpush1.msra.mxu0 %v301
    %413 = vmatprep.subr.mxu0 %v306
    %414 = vmatpush1.msra.mxu0 %v305
    %415 = vmatprep.subr.mxu0 %v310
    %416 = vmatpush1.msra.mxu0 %v309
    %417 = vmatprep.subr.mxu0 %v314
    %418 = vmatpush1.msra.mxu0 %v313
    %419 = vmatprep.subr.mxu0 %v318
    %420 = vmatpush1.msra.mxu0 %v317
    %421 = vmatprep.subr.mxu0 %v322
    %422 = vmatpush1.msra.mxu0 %v321
    %423 = vmatprep.subr.mxu0 %v326
    %424 = vmatpush1.msra.mxu0 %v325
    %425 = vmatprep.subr.mxu0 %v330
    %426 = vmatpush1.msra.mxu0 %v329
    %427 = vmatprep.subr.mxu0 %v334
    %428 = vmatpush1.msra.mxu0 %v333
    %429 = vmatprep.subr.mxu0 %v338
    %430 = vmatpush1.msra.mxu0 %v337
    %431 = vmatprep.subr.mxu0 %v342
    %432 = vmatpush1.msra.mxu0 %v341
    %433 = vmatprep.subr.mxu0 %v346
    %434 = vmatpush1.msra.mxu0 %v345
    %435 = vmatprep.subr.mxu0 %v350
    %436 = vmatpush1.msra.mxu0 %v349
    %437 = vmatprep.subr.mxu0 %v354
    %438 = vmatpush1.msra.mxu0 %v353
    %439 = vmatprep.subr.mxu0 %v358
    %440 = vmatpush1.msra.mxu0 %v357
    %441 = vmatprep.subr.mxu0 0.0
    %442 = vmatpush1.msra.mxu0 0.0
    %443 = vmatprep.subr.mxu0 0.0
    %444 = vmatpush1.msra.mxu0 0.0
    %445 = vmatprep.subr.mxu0 0.0
    %446 = vmatpush1.msra.mxu0 0.0
    %447 = vmatprep.subr.mxu0 0.0
    %448 = vmatpush1.msra.mxu0 0.0
    %449 = vmatprep.subr.mxu0 0.0
    %450 = vmatpush1.msra.mxu0 0.0
    %451 = vmatprep.subr.mxu0 0.0
    %452 = vmatpush1.msra.mxu0 0.0
    %453 = vmatprep.subr.mxu0 0.0
    %454 = vmatpush1.msra.mxu0 0.0
    %455 = vmatprep.subr.mxu0 0.0
    %456 = vmatpush1.msra.mxu0 0.0
    %457 = vmatprep.subr.mxu0 0.0
    %458 = vmatpush1.msra.mxu0 0.0
    %459 = vmatprep.subr.mxu0 0.0
    %460 = vmatpush1.msra.mxu0 0.0
    %461 = vmatprep.subr.mxu0 0.0
    %462 = vmatpush1.msra.mxu0 0.0
    %463 = vmatprep.subr.mxu0 0.0
    %464 = vmatpush1.msra.mxu0 0.0
    %465 = vmatprep.mubr.f32.mxu0 %v384
    %466 = vmatmul.mubr.f32.gmra.mrb[0].mxu0 %v166
    %v467 = vpop.f32.mrb[0].mxu0
    %v468 = vadd.f32 %v366, %v467
    %v469 = vpop.f32.mrb[0].mxu0
    %v470 = vadd.f32 %v370, %v469
    %471 = vmatprep.mubr.f32.mxu0 %v387
    %472 = vmatmul.mubr.f32.gmra.mrb[0].mxu0 %v167
    %v473 = vpop.f32.mrb[0].mxu0
    %v474 = vadd.f32 %v366, %v473
    %v475 = vpop.f32.mrb[0].mxu0
    %v476 = vadd.f32 %v370, %v475
    %477 = vmatprep.mubr.f32.mxu0 %v390
    %478 = vmatmul.mubr.f32.gmra.mrb[0].mxu0 %v168
    %v479 = vpop.f32.mrb[0].mxu0
    %v480 = vadd.f32 %v366, %v479
    %v481 = vpop.f32.mrb[0].mxu0
    %v482 = vadd.f32 %v370, %v481
    %483 = vmatprep.mubr.f32.mxu0 %v393
    %484 = vmatmul.mubr.f32.gmra.mrb[0].mxu0 %v279
    %v485 = vpop.f32.mrb[0].mxu0
    %v486 = vadd.f32 %v366, %v485
    %v487 = vpop.f32.mrb[0].mxu0
    %v488 = vadd.f32 %v370, %v487
    %489 = vmatprep.mubr.f32.mxu0 %v395
    %490 = vmatmul.mubr.f32.gmra.mrb[0].mxu0 %v263
    %v491 = vpop.f32.mrb[0].mxu0
    %v492 = vadd.f32 %v366, %v491
    %v493 = vpop.f32.mrb[0].mxu0
    %v494 = vadd.f32 %v370, %v493
    %495 = vmatprep.mubr.f32.mxu0 %v397
    %496 = vmatmul.mubr.f32.gmra.mrb[0].mxu0 %v267
    %v497 = vpop.f32.mrb[0].mxu0
    %v498 = vadd.f32 %v366, %v497
    %v499 = vpop.f32.mrb[0].mxu0
    %v500 = vadd.f32 %v370, %v499
    %501 = vmatprep.mubr.f32.mxu0 %v399
    %502 = vmatmul.mubr.f32.gmra.mrb[0].mxu0 %v271
    %v503 = vpop.f32.mrb[0].mxu0
    %v504 = vadd.f32 %v366, %v503
    %v505 = vpop.f32.mrb[0].mxu0
    %v506 = vadd.f32 %v370, %v505
    %507 = vdwg.mxu0
    %508 = vmatprep.subr.mxu0 %v284
    %509 = vmatpush1.msra.mxu0 %v283
    %510 = vmatprep.subr.mxu0 %v288
    %511 = vmatpush1.msra.mxu0 %v287
    %512 = vmatprep.subr.mxu0 %v292
    %513 = vmatpush1.msra.mxu0 %v291
    %514 = vmatprep.subr.mxu0 %v296
    %515 = vmatpush1.msra.mxu0 %v295
    %516 = vmatprep.subr.mxu0 %v300
    %517 = vmatpush1.msra.mxu0 %v299
    %518 = vmatprep.subr.mxu0 %v304
    %519 = vmatpush1.msra.mxu0 %v303
    %520 = vmatprep.subr.mxu0 %v308
    %521 = vmatpush1.msra.mxu0 %v307
    %522 = vmatprep.subr.mxu0 %v312
    %523 = vmatpush1.msra.mxu0 %v311
    %524 = vmatprep.subr.mxu0 %v316
    %525 = vmatpush1.msra.mxu0 %v315
    %526 = vmatprep.subr.mxu0 %v320
    %527 = vmatpush1.msra.mxu0 %v319
    %528 = vmatprep.subr.mxu0 %v324
    %529 = vmatpush1.msra.mxu0 %v323
    %530 = vmatprep.subr.mxu0 %v328
    %531 = vmatpush1.msra.mxu0 %v327
    %532 = vmatprep.subr.mxu0 %v332
    %533 = vmatpush1.msra.mxu0 %v331
    %534 = vmatprep.subr.mxu0 %v336
    %535 = vmatpush1.msra.mxu0 %v335
    %536 = vmatprep.subr.mxu0 %v340
    %537 = vmatpush1.msra.mxu0 %v339
    %538 = vmatprep.subr.mxu0 %v344
    %539 = vmatpush1.msra.mxu0 %v343
    %540 = vmatprep.subr.mxu0 %v348
    %541 = vmatpush1.msra.mxu0 %v347
    %542 = vmatprep.subr.mxu0 %v352
    %543 = vmatpush1.msra.mxu0 %v351
    %544 = vmatprep.subr.mxu0 %v356
    %545 = vmatpush1.msra.mxu0 %v355
    %546 = vmatprep.subr.mxu0 %v360
    %547 = vmatpush1.msra.mxu0 %v359
    %548 = vmatprep.subr.mxu0 0.0
    %549 = vmatpush1.msra.mxu0 0.0
    %550 = vmatprep.subr.mxu0 0.0
    %551 = vmatpush1.msra.mxu0 0.0
    %552 = vmatprep.subr.mxu0 0.0
    %553 = vmatpush1.msra.mxu0 0.0
    %554 = vmatprep.subr.mxu0 0.0
    %555 = vmatpush1.msra.mxu0 0.0
    %556 = vmatprep.subr.mxu0 0.0
    %557 = vmatpush1.msra.mxu0 0.0
    %558 = vmatprep.subr.mxu0 0.0
    %559 = vmatpush1.msra.mxu0 0.0
    %560 = vmatprep.subr.mxu0 0.0
    %561 = vmatpush1.msra.mxu0 0.0
    %562 = vmatprep.subr.mxu0 0.0
    %563 = vmatpush1.msra.mxu0 0.0
    %564 = vmatprep.subr.mxu0 0.0
    %565 = vmatpush1.msra.mxu0 0.0
    %566 = vmatprep.subr.mxu0 0.0
    %567 = vmatpush1.msra.mxu0 0.0
    %568 = vmatprep.subr.mxu0 0.0
    %569 = vmatpush1.msra.mxu0 0.0
    %570 = vmatprep.subr.mxu0 0.0
    %571 = vmatpush1.msra.mxu0 0.0
    %572 = vmatprep.mubr.f32.mxu0 %v384
    %573 = vmatmul.mubr.f32.gmra.mrb[0].mxu0 %v166
    %v574 = vpop.f32.mrb[0].mxu0
    %v575 = vadd.f32 %v374, %v574
    %v576 = vpop.f32.mrb[0].mxu0
    %v577 = vadd.f32 %v378, %v576
    %578 = vmatprep.mubr.f32.mxu0 %v387
    %579 = vmatmul.mubr.f32.gmra.mrb[0].mxu0 %v167
    %v580 = vpop.f32.mrb[0].mxu0
    %v581 = vadd.f32 %v374, %v580
    %v582 = vpop.f32.mrb[0].mxu0
    %v583 = vadd.f32 %v378, %v582
    %584 = vmatprep.mubr.f32.mxu0 %v390
    %585 = vmatmul.mubr.f32.gmra.mrb[0].mxu0 %v168
    %v586 = vpop.f32.mrb[0].mxu0
    %v587 = vadd.f32 %v374, %v586
    %v588 = vpop.f32.mrb[0].mxu0
    %v589 = vadd.f32 %v378, %v588
    %590 = vmatprep.mubr.f32.mxu0 %v393
    %591 = vmatmul.mubr.f32.gmra.mrb[0].mxu0 %v279
    %v592 = vpop.f32.mrb[0].mxu0
    %v593 = vadd.f32 %v374, %v592
    %v594 = vpop.f32.mrb[0].mxu0
    %v595 = vadd.f32 %v378, %v594
    %596 = vmatprep.mubr.f32.mxu0 %v395
    %597 = vmatmul.mubr.f32.gmra.mrb[0].mxu0 %v263
    %v598 = vpop.f32.mrb[0].mxu0
    %v599 = vadd.f32 %v374, %v598
    %v600 = vpop.f32.mrb[0].mxu0
    %v601 = vadd.f32 %v378, %v600
    %602 = vmatprep.mubr.f32.mxu0 %v397
    %603 = vmatmul.mubr.f32.gmra.mrb[0].mxu0 %v267
    %v604 = vpop.f32.mrb[0].mxu0
    %v605 = vadd.f32 %v374, %v604
    %v606 = vpop.f32.mrb[0].mxu0
    %v607 = vadd.f32 %v378, %v606
    %608 = vmatprep.mubr.f32.mxu0 %v399
    %609 = vmatmul.mubr.f32.gmra.mrb[0].mxu0 %v271
    %v610 = vpop.f32.mrb[0].mxu0
    %v611 = vadd.f32 %v374, %v610
    %v612 = vpop.f32.mrb[0].mxu0
    %v613 = vadd.f32 %v378, %v612
    %614 = vdwg.mxu0
    %v615 = vmax.f32 %v468, 0.0
    %v616 = vmax.f32 %v470, 0.0
    %v617 = vmax.f32 %v575, 0.0
    %v618 = vmax.f32 %v577, 0.0
    %v619 = vmax.f32 %v474, 0.0
    %v620 = vmax.f32 %v476, 0.0
    %v621 = vmax.f32 %v581, 0.0
    %v622 = vmax.f32 %v583, 0.0
    %v623 = vmax.f32 %v480, 0.0
    %v624 = vmax.f32 %v482, 0.0
    %v625 = vmax.f32 %v587, 0.0
    %v626 = vmax.f32 %v589, 0.0
    %v627 = vmax.f32 %v486, 0.0
    %v628 = vmax.f32 %v488, 0.0
    %v629 = vmax.f32 %v593, 0.0
    %v630 = vmax.f32 %v595, 0.0
    %v631 = vmax.f32 %v492, 0.0
    %v632 = vmax.f32 %v494, 0.0
    %v633 = vmax.f32 %v599, 0.0
    %v634 = vmax.f32 %v601, 0.0
    %v635 = vmax.f32 %v498, 0.0
    %v636 = vmax.f32 %v500, 0.0
    %v637 = vmax.f32 %v605, 0.0
    %v638 = vmax.f32 %v607, 0.0
    %v639 = vmax.f32 %v504, 0.0
    %v640 = vmax.f32 %v506, 0.0
    %v641 = vmax.f32 %v611, 0.0
    %v642 = vmax.f32 %v613, 0.0
    %664 = vrot.lane.b32.xlu0 %v616, 32
    %v665 = vpop.permute.xlu0 %664
    %666 = vrot.lane.b32.xlu0 %v617, 32
    %v667 = vpop.permute.xlu0 %666
    %668 = vrot.lane.b32.xlu0 %v618, 32
    %v669 = vpop.permute.xlu0 %668
    %670 = vrot.lane.b32.xlu0 %v620, 32
    %v671 = vpop.permute.xlu0 %670
    %672 = vrot.lane.b32.xlu0 %v621, 32
    %v673 = vpop.permute.xlu0 %672
    %674 = vrot.lane.b32.xlu0 %v622, 32
    %v675 = vpop.permute.xlu0 %674
    %676 = vrot.lane.b32.xlu0 %v624, 32
    %v677 = vpop.permute.xlu0 %676
    %678 = vrot.lane.b32.xlu0 %v625, 32
    %v679 = vpop.permute.xlu0 %678
    %680 = vrot.lane.b32.xlu0 %v626, 32
    %v681 = vpop.permute.xlu0 %680
    %682 = vrot.lane.b32.xlu0 %v628, 32
    %v683 = vpop.permute.xlu0 %682
    %684 = vrot.lane.b32.xlu0 %v629, 32
    %v685 = vpop.permute.xlu0 %684
    %686 = vrot.lane.b32.xlu0 %v630, 32
    %v687 = vpop.permute.xlu0 %686
    %688 = vrot.lane.b32.xlu0 %v632, 32
    %v689 = vpop.permute.xlu0 %688
    %690 = vrot.lane.b32.xlu0 %v633, 32
    %v691 = vpop.permute.xlu0 %690
    %692 = vrot.lane.b32.xlu0 %v634, 32
    %v693 = vpop.permute.xlu0 %692
    %694 = vrot.lane.b32.xlu0 %v636, 32
    %v695 = vpop.permute.xlu0 %694
    %696 = vrot.lane.b32.xlu0 %v637, 32
    %v697 = vpop.permute.xlu0 %696
    %698 = vrot.lane.b32.xlu0 %v638, 32
    %v699 = vpop.permute.xlu0 %698
    %700 = vrot.lane.b32.xlu0 %v640, 32
    %v701 = vpop.permute.xlu0 %700
    %702 = vrot.lane.b32.xlu0 %v641, 32
    %v703 = vpop.permute.xlu0 %702
    %704 = vrot.lane.b32.xlu0 %v642, 32
    %v705 = vpop.permute.xlu0 %704
    %v706 = vsel %vm29, %v665, %v667
    %v707 = vsel %vm29, %v667, %v669
    %v708 = vsel %vm29, %v671, %v673
    %v709 = vsel %vm29, %v673, %v675
    %v710 = vsel %vm29, %v677, %v679
    %v711 = vsel %vm29, %v679, %v681
    %v712 = vsel %vm29, %v683, %v685
    %v713 = vsel %vm29, %v685, %v687
    %v714 = vsel %vm29, %v689, %v691
    %v715 = vsel %vm29, %v691, %v693
    %v716 = vsel %vm29, %v695, %v697
    %v717 = vsel %vm29, %v697, %v699
    %v718 = vsel %vm29, %v701, %v703
    %v719 = vsel %vm29, %v703, %v705
    %v734 = vmax.f32 %v615, %v706
    %v735 = vmax.f32 %v616, %v707
    %v736 = vmax.f32 %v619, %v708
    %v737 = vmax.f32 %v620, %v709
    %v738 = vmax.f32 %v623, %v710
    %v739 = vmax.f32 %v624, %v711
    %v740 = vmax.f32 %v627, %v712
    %v741 = vmax.f32 %v628, %v713
    %v742 = vmax.f32 %v631, %v714
    %v743 = vmax.f32 %v632, %v715
    %v744 = vmax.f32 %v635, %v716
    %v745 = vmax.f32 %v636, %v717
    %v746 = vmax.f32 %v639, %v718
    %v747 = vmax.f32 %v640, %v719
    %748 = vst [vmem:[#allocation3] sm:$0xff] 0.0
    %749 = vst [vmem:[#allocation3 + $0x8] sm:$0xff] 0.0
    %750 = vst.msk [vmem:[#allocation3 + $0x10] sm:$0xff] %vm29, 0.0
    %751 = vst [vmem:[#allocation3 + $0x18] sm:$0xff] 0.0
    %752 = vst [vmem:[#allocation3 + $0x20] sm:$0xff] 0.0
    %753 = vst.msk [vmem:[#allocation3 + $0x28] sm:$0xff] %vm29, 0.0
    %754 = vst [vmem:[#allocation3 + $0x30] sm:$0x3] 0.0
    %755 = vst [vmem:[#allocation3 + $0x38] sm:$0x3] 0.0
    %vm756 = vcmask 254976
    %757 = vst.msk [vmem:[#allocation3 + $0x40] sm:$0x3] %vm756, 0.0
    %758 = vst [vmem:[#allocation3 + $0x48] sm:$0xff] 0.0
    %759 = vst [vmem:[#allocation3 + $0x50] sm:$0xff] 0.0
    %760 = vst.msk [vmem:[#allocation3 + $0x58] sm:$0xff] %vm29, 0.0
    %761 = vst [vmem:[#allocation3 + $0x60] sm:$0xff] 0.0
    %762 = vst [vmem:[#allocation3 + $0x68] sm:$0xff] 0.0
    %763 = vst.msk [vmem:[#allocation3 + $0x70] sm:$0xff] %vm29, 0.0
    %764 = vst [vmem:[#allocation3 + $0x78] sm:$0x3] 0.0
    %765 = vst [vmem:[#allocation3 + $0x80] sm:$0x3] 0.0
    %766 = vst.msk [vmem:[#allocation3 + $0x88] sm:$0x3] %vm756, 0.0
    %v769 = vrot.slane %v734, 1
    %v770 = vrot.slane %v735, 1
    %v773 = vmax.f32 %v734, %v769
    %v774 = vmax.f32 %v735, %v770
    %v777 = vrot.slane %v736, 1
    %v778 = vrot.slane %v737, 1
    %v781 = vmax.f32 %v736, %v777
    %v782 = vmax.f32 %v737, %v778
    %v785 = vrot.slane %v738, 1
    %v786 = vrot.slane %v739, 1
    %v789 = vmax.f32 %v738, %v785
    %v790 = vmax.f32 %v739, %v786
    %v793 = vrot.slane %v740, 1
    %v794 = vrot.slane %v741, 1
    %v797 = vmax.f32 %v740, %v793
    %v798 = vmax.f32 %v741, %v794
    %v801 = vrot.slane %v773, 1
    %v802 = vrot.slane %v774, 1
    %v805 = vrot.slane %v773, 2
    %v806 = vrot.slane %v774, 2
    %v809 = vrot.slane %v773, 3
    %v810 = vrot.slane %v774, 3
    %v815 = vrot.slane %v781, 4
    %v816 = vrot.slane %v782, 4
    %v819 = vrot.slane %v781, 5
    %v820 = vrot.slane %v782, 5
    %v823 = vrot.slane %v781, 6
    %v824 = vrot.slane %v782, 6
    %v827 = vrot.slane %v781, 7
    %v828 = vrot.slane %v782, 7
    %v833 = vrot.slane %v789, 1
    %v834 = vrot.slane %v790, 1
    %v837 = vrot.slane %v789, 2
    %v838 = vrot.slane %v790, 2
    %v841 = vrot.slane %v789, 3
    %v842 = vrot.slane %v790, 3
    %v847 = vrot.slane %v797, 4
    %v848 = vrot.slane %v798, 4
    %v851 = vrot.slane %v797, 5
    %v852 = vrot.slane %v798, 5
    %vm855 = vcmask 1040384
    %v856 = vsel %vm855, %v773, %v801
    %v857 = vsel %vm855, %v774, %v802
    %vm858 = vcmask 1041408
    %v859 = vsel %vm858, %v856, %v805
    %v860 = vsel %vm858, %v857, %v806
    %vm861 = vcmask 1042432
    %v862 = vsel %vm861, %v859, %v809
    %v863 = vsel %vm861, %v860, %v810
    %v864 = vsel %vm259, %v862, %v815
    %v865 = vsel %vm259, %v863, %v816
    %vm866 = vcmask 1044480
    %v867 = vsel %vm866, %v864, %v819
    %v868 = vsel %vm866, %v865, %v820
    %vm869 = vcmask 1045504
    %v870 = vsel %vm869, %v867, %v823
    %v871 = vsel %vm869, %v868, %v824
    %vm872 = vcmask 1046528
    %v873 = vsel %vm872, %v870, %v827
    %v874 = vsel %vm872, %v871, %v828
    %v875 = vsel %vm855, %v789, %v833
    %v876 = vsel %vm855, %v790, %v834
    %v877 = vsel %vm858, %v875, %v837
    %v878 = vsel %vm858, %v876, %v838
    %v879 = vsel %vm861, %v877, %v841
    %v880 = vsel %vm861, %v878, %v842
    %v881 = vsel %vm259, %v879, %v847
    %v882 = vsel %vm259, %v880, %v848
    %v883 = vsel %vm866, %v881, %v851
    %v884 = vsel %vm866, %v882, %v852
    %v889 = vrot.slane %v873, 6
    %v890 = vrot.slane %v874, 6
    %v891 = vrot.slane %v883, 6
    %v892 = vsel %vm858, %v889, %v891
    %v893 = vrot.slane %v884, 6
    %v894 = vsel %vm858, %v890, %v893
    %895 = vrot.lane.b32.xlu0 %v889, 32
    %v896 = vpop.permute.xlu0 %895
    %897 = vrot.lane.b32.xlu0 %v890, 32
    %v898 = vpop.permute.xlu0 %897
    %899 = vrot.lane.b32.xlu0 %v892, 32
    %v900 = vpop.permute.xlu0 %899
    %901 = vrot.lane.b32.xlu0 %v894, 32
    %v902 = vpop.permute.xlu0 %901
    %v903 = vsel %vm29, %v896, %v898
    %v904 = vsel %vm29, %v900, %v902
    %vm909 = vcmask 1047810
    %910 = vst.msk [vmem:[#allocation3] sm:$0xfc] %vm909, %v896
    %911 = vst [vmem:[#allocation3 + $0x8] sm:$0xfc] %v903
    %vm912 = vcmask 1047808
    %913 = vst.msk [vmem:[#allocation3 + $0x18] sm:$0xff] %vm912, %v900
    %914 = vst [vmem:[#allocation3 + $0x20] sm:$0xff] %v904
    %v917 = vrot.slane %v742, 1
    %v918 = vrot.slane %v743, 1
    %v921 = vmax.f32 %v742, %v917
    %v922 = vmax.f32 %v743, %v918
    %v925 = vrot.slane %v744, 1
    %v926 = vrot.slane %v745, 1
    %v929 = vmax.f32 %v744, %v925
    %v930 = vmax.f32 %v745, %v926
    %v933 = vrot.slane %v746, 1
    %v934 = vrot.slane %v747, 1
    %v937 = vmax.f32 %v746, %v933
    %v938 = vmax.f32 %v747, %v934
    %v941 = vrot.slane %v921, 6
    %v942 = vrot.slane %v922, 6
    %v945 = vrot.slane %v921, 7
    %v946 = vrot.slane %v922, 7
    %v949 = vrot.slane %v921, 1
    %v950 = vrot.slane %v922, 1
    %v955 = vrot.slane %v929, 2
    %v956 = vrot.slane %v930, 2
    %v959 = vrot.slane %v929, 3
    %v960 = vrot.slane %v930, 3
    %v963 = vrot.slane %v929, 4
    %v964 = vrot.slane %v930, 4
    %v967 = vrot.slane %v929, 5
    %v968 = vrot.slane %v930, 5
    %v973 = vrot.slane %v937, 6
    %v974 = vrot.slane %v938, 6
    %v977 = vrot.slane %v937, 7
    %v978 = vrot.slane %v938, 7
    %v981 = vrot.slane %v937, 1
    %v982 = vrot.slane %v938, 1
    %v985 = vsel %vm855, %v847, %v851
    %v986 = vsel %vm855, %v848, %v852
    %v987 = vsel %vm858, %v985, %v941
    %v988 = vsel %vm858, %v986, %v942
    %v989 = vsel %vm861, %v987, %v945
    %v990 = vsel %vm861, %v988, %v946
    %v991 = vsel %vm259, %v989, %v921
    %v992 = vsel %vm259, %v990, %v922
    %v993 = vsel %vm866, %v991, %v949
    %v994 = vsel %vm866, %v992, %v950
    %v995 = vsel %vm869, %v993, %v955
    %v996 = vsel %vm869, %v994, %v956
    %v997 = vsel %vm872, %v995, %v959
    %v998 = vsel %vm872, %v996, %v960
    %v999 = vsel %vm855, %v963, %v967
    %v1000 = vsel %vm855, %v964, %v968
    %v1001 = vsel %vm858, %v999, %v973
    %v1002 = vsel %vm858, %v1000, %v974
    %v1003 = vsel %vm861, %v1001, %v977
    %v1004 = vsel %vm861, %v1002, %v978
    %v1005 = vsel %vm259, %v1003, %v937
    %v1006 = vsel %vm259, %v1004, %v938
    %v1007 = vsel %vm866, %v1005, %v981
    %v1008 = vsel %vm866, %v1006, %v982
    %v1013 = vrot.slane %v997, 6
    %v1014 = vrot.slane %v998, 6
    %v1015 = vrot.slane %v1007, 6
    %v1016 = vsel %vm858, %v1013, %v1015
    %v1017 = vrot.slane %v1008, 6
    %v1018 = vsel %vm858, %v1014, %v1017
    %1019 = vrot.lane.b32.xlu0 %v1013, 32
    %v1020 = vpop.permute.xlu0 %1019
    %1021 = vrot.lane.b32.xlu0 %v1014, 32
    %v1022 = vpop.permute.xlu0 %1021
    %1023 = vrot.lane.b32.xlu0 %v1016, 32
    %v1024 = vpop.permute.xlu0 %1023
    %1025 = vrot.lane.b32.xlu0 %v1018, 32
    %v1026 = vpop.permute.xlu0 %1025
    %v1027 = vsel %vm29, %v1020, %v1022
    %v1028 = vsel %vm29, %v1024, %v1026
    %s1033 = scalar_lea.vmem [#allocation3], 72
    %1034 = vst.msk [vmem:[%s1033] sm:$0xfc] %vm909, %v1020
    %1035 = vst [vmem:[%s1033 + $0x8] sm:$0xfc] %v1027
    %1036 = vst.msk [vmem:[%s1033 + $0x18] sm:$0xff] %vm912, %v1024
    %1037 = vst [vmem:[%s1033 + $0x20] sm:$0xff] %v1028
    %v1038 = vld [vmem:[#allocation3] sm:$0xff]
    %v1039 = vld [vmem:[#allocation3 + $0x8] sm:$0xff]
    %v1040 = vld [vmem:[#allocation3 + $0x10] sm:$0xff]
    %v1041 = vld [vmem:[#allocation3 + $0x18] sm:$0x3f]
    %v1042 = vld [vmem:[#allocation3 + $0x20] sm:$0x3f]
    %v1043 = vld [vmem:[#allocation3 + $0x28] sm:$0x3f]
    %v1044 = vld [vmem:[#allocation3] sm:$0xfe]
    %v1045 = vld [vmem:[#allocation3 + $0x8] sm:$0xfe]
    %v1046 = vld [vmem:[#allocation3 + $0x10] sm:$0xfe]
    %v1047 = vld [vmem:[#allocation3 + $0x18] sm:$0x7f]
    %v1048 = vld [vmem:[#allocation3 + $0x20] sm:$0x7f]
    %v1049 = vld [vmem:[#allocation3 + $0x28] sm:$0x7f]
    %v1050 = vld [vmem:[#allocation3] sm:$0xfc]
    %v1051 = vld [vmem:[#allocation3 + $0x8] sm:$0xfc]
    %v1052 = vld [vmem:[#allocation3 + $0x10] sm:$0xfc]
    %v1053 = vld [vmem:[#allocation3 + $0x18] sm:$0xff]
    %v1054 = vld [vmem:[#allocation3 + $0x20] sm:$0xff]
    %v1055 = vld [vmem:[#allocation3 + $0x28] sm:$0xff]
    %v1056 = vld [vmem:[#allocation3] sm:$0xf8]
    %v1057 = vld [vmem:[#allocation3 + $0x8] sm:$0xf8]
    %v1058 = vld [vmem:[#allocation3 + $0x10] sm:$0xf8]
    %v1059 = vld [vmem:[#allocation3 + $0x30] sm:$0x1]
    %v1060 = vld [vmem:[#allocation3 + $0x38] sm:$0x1]
    %v1061 = vld [vmem:[#allocation3 + $0x40] sm:$0x1]
    %v1062 = vld [vmem:[#allocation3] sm:$0xf0]
    %v1063 = vld [vmem:[#allocation3 + $0x8] sm:$0xf0]
    %v1064 = vld [vmem:[#allocation3 + $0x10] sm:$0xf0]
    %v1065 = vld [vmem:[#allocation3 + $0x30] sm:$0x3]
    %v1066 = vld [vmem:[#allocation3 + $0x38] sm:$0x3]
    %v1067 = vld [vmem:[#allocation3 + $0x40] sm:$0x3]
    %v1074 = vrot.slane %v1044, 1
    %v1075 = vrot.slane %v1047, 1
    %v1076 = vsel %vm872, %v1074, %v1075
    %v1077 = vrot.slane %v1045, 1
    %v1078 = vrot.slane %v1048, 1
    %v1079 = vsel %vm872, %v1077, %v1078
    %v1080 = vrot.slane %v1046, 1
    %v1081 = vrot.slane %v1049, 1
    %v1082 = vsel %vm872, %v1080, %v1081
    %1083 = vrot.lane.b32.xlu0 %v1076, 32
    %v1084 = vpop.permute.xlu0 %1083
    %1085 = vrot.lane.b32.xlu0 %v1079, 32
    %v1086 = vpop.permute.xlu0 %1085
    %1087 = vrot.lane.b32.xlu0 %v1082, 32
    %v1088 = vpop.permute.xlu0 %1087
    %1089 = vrot.lane.b32.xlu0 %v1075, 32
    %v1090 = vpop.permute.xlu0 %1089
    %1091 = vrot.lane.b32.xlu0 %v1078, 32
    %v1092 = vpop.permute.xlu0 %1091
    %1093 = vrot.lane.b32.xlu0 %v1081, 32
    %v1094 = vpop.permute.xlu0 %1093
    %v1095 = vsel %vm29, %v1084, %v1086
    %v1096 = vsel %vm29, %v1086, %v1088
    %v1097 = vsel %vm29, %v1090, %v1092
    %v1098 = vsel %vm29, %v1092, %v1094
    %v1111 = vrot.slane %v1050, 2
    %v1112 = vrot.slane %v1053, 2
    %v1113 = vsel %vm869, %v1111, %v1112
    %v1114 = vrot.slane %v1051, 2
    %v1115 = vrot.slane %v1054, 2
    %v1116 = vsel %vm869, %v1114, %v1115
    %v1117 = vrot.slane %v1052, 2
    %v1118 = vrot.slane %v1055, 2
    %v1119 = vsel %vm869, %v1117, %v1118
    %1120 = vrot.lane.b32.xlu0 %v1113, 64
    %v1121 = vpop.permute.xlu0 %1120
    %1122 = vrot.lane.b32.xlu0 %v1116, 64
    %v1123 = vpop.permute.xlu0 %1122
    %1124 = vrot.lane.b32.xlu0 %v1119, 64
    %v1125 = vpop.permute.xlu0 %1124
    %1126 = vrot.lane.b32.xlu0 %v1112, 64
    %v1127 = vpop.permute.xlu0 %1126
    %1128 = vrot.lane.b32.xlu0 %v1115, 64
    %v1129 = vpop.permute.xlu0 %1128
    %1130 = vrot.lane.b32.xlu0 %v1118, 64
    %v1131 = vpop.permute.xlu0 %1130
    %v1132 = vsel %vm160, %v1121, %v1123
    %v1133 = vsel %vm160, %v1123, %v1125
    %v1134 = vsel %vm160, %v1127, %v1129
    %v1135 = vsel %vm160, %v1129, %v1131
    %v1148 = vrot.slane %v1056, 3
    %v1149 = vrot.slane %v1053, 3
    %v1150 = vsel %vm866, %v1148, %v1149
    %v1151 = vrot.slane %v1057, 3
    %v1152 = vrot.slane %v1054, 3
    %v1153 = vsel %vm866, %v1151, %v1152
    %v1154 = vrot.slane %v1058, 3
    %v1155 = vrot.slane %v1055, 3
    %v1156 = vsel %vm866, %v1154, %v1155
    %v1157 = vrot.slane %v1059, 3
    %v1158 = vsel %vm866, %v1149, %v1157
    %v1159 = vrot.slane %v1060, 3
    %v1160 = vsel %vm866, %v1152, %v1159
    %v1161 = vrot.slane %v1061, 3
    %v1162 = vsel %vm866, %v1155, %v1161
    %1163 = vrot.lane.b32.xlu0 %v1150, 96
    %v1164 = vpop.permute.xlu0 %1163
    %1165 = vrot.lane.b32.xlu0 %v1153, 96
    %v1166 = vpop.permute.xlu0 %1165
    %1167 = vrot.lane.b32.xlu0 %v1156, 96
    %v1168 = vpop.permute.xlu0 %1167
    %1169 = vrot.lane.b32.xlu0 %v1158, 96
    %v1170 = vpop.permute.xlu0 %1169
    %1171 = vrot.lane.b32.xlu0 %v1160, 96
    %v1172 = vpop.permute.xlu0 %1171
    %1173 = vrot.lane.b32.xlu0 %v1162, 96
    %v1174 = vpop.permute.xlu0 %1173
    %v1175 = vsel %vm165, %v1164, %v1166
    %v1176 = vsel %vm165, %v1166, %v1168
    %v1177 = vsel %vm165, %v1170, %v1172
    %v1178 = vsel %vm165, %v1172, %v1174
    %v1191 = vrot.slane %v1062, 4
    %v1192 = vrot.slane %v1053, 4
    %v1193 = vsel %vm259, %v1191, %v1192
    %v1194 = vrot.slane %v1063, 4
    %v1195 = vrot.slane %v1054, 4
    %v1196 = vsel %vm259, %v1194, %v1195
    %v1197 = vrot.slane %v1064, 4
    %v1198 = vrot.slane %v1055, 4
    %v1199 = vsel %vm259, %v1197, %v1198
    %v1200 = vrot.slane %v1065, 4
    %v1201 = vsel %vm259, %v1192, %v1200
    %v1202 = vrot.slane %v1066, 4
    %v1203 = vsel %vm259, %v1195, %v1202
    %v1204 = vrot.slane %v1067, 4
    %v1205 = vsel %vm259, %v1198, %v1204
    %v1211 = vsel %vm29, %v1040, %v1084
    %v1212 = vsel %vm29, %v1043, %v1090
    %v1213 = vsel %vm160, %v1096, %v1121
    %v1214 = vsel %vm160, %v1098, %v1127
    %v1215 = vsel %vm165, %v1133, %v1164
    %v1216 = vsel %vm165, %v1135, %v1170
    %v1217 = vld [vmem:[%s1033] sm:$0xff]
    %v1218 = vld [vmem:[%s1033 + $0x8] sm:$0xff]
    %v1219 = vld [vmem:[%s1033 + $0x10] sm:$0xff]
    %v1220 = vld [vmem:[%s1033 + $0x18] sm:$0x3f]
    %v1221 = vld [vmem:[%s1033 + $0x20] sm:$0x3f]
    %v1222 = vld [vmem:[%s1033 + $0x28] sm:$0x3f]
    %v1223 = vld [vmem:[%s1033] sm:$0xfe]
    %v1224 = vld [vmem:[%s1033 + $0x8] sm:$0xfe]
    %v1225 = vld [vmem:[%s1033 + $0x10] sm:$0xfe]
    %v1226 = vld [vmem:[%s1033 + $0x18] sm:$0x7f]
    %v1227 = vld [vmem:[%s1033 + $0x20] sm:$0x7f]
    %v1228 = vld [vmem:[%s1033 + $0x28] sm:$0x7f]
    %v1229 = vld [vmem:[%s1033] sm:$0xfc]
    %v1230 = vld [vmem:[%s1033 + $0x8] sm:$0xfc]
    %v1231 = vld [vmem:[%s1033 + $0x10] sm:$0xfc]
    %v1232 = vld [vmem:[%s1033 + $0x18] sm:$0xff]
    %v1233 = vld [vmem:[%s1033 + $0x20] sm:$0xff]
    %v1234 = vld [vmem:[%s1033 + $0x28] sm:$0xff]
    %v1235 = vld [vmem:[%s1033] sm:$0xf8]
    %v1236 = vld [vmem:[%s1033 + $0x8] sm:$0xf8]
    %v1237 = vld [vmem:[%s1033 + $0x10] sm:$0xf8]
    %v1238 = vld [vmem:[%s1033 + $0x30] sm:$0x1]
    %v1239 = vld [vmem:[%s1033 + $0x38] sm:$0x1]
    %v1240 = vld [vmem:[%s1033 + $0x40] sm:$0x1]
    %v1241 = vld [vmem:[%s1033] sm:$0xf0]
    %v1242 = vld [vmem:[%s1033 + $0x8] sm:$0xf0]
    %v1243 = vld [vmem:[%s1033 + $0x10] sm:$0xf0]
    %v1244 = vld [vmem:[%s1033 + $0x30] sm:$0x3]
    %v1245 = vld [vmem:[%s1033 + $0x38] sm:$0x3]
    %v1246 = vld [vmem:[%s1033 + $0x40] sm:$0x3]
    %v1253 = vrot.slane %v1223, 1
    %v1254 = vrot.slane %v1226, 1
    %v1255 = vsel %vm872, %v1253, %v1254
    %v1256 = vrot.slane %v1224, 1
    %v1257 = vrot.slane %v1227, 1
    %v1258 = vsel %vm872, %v1256, %v1257
    %v1259 = vrot.slane %v1225, 1
    %v1260 = vrot.slane %v1228, 1
    %v1261 = vsel %vm872, %v1259, %v1260
    %1262 = vrot.lane.b32.xlu0 %v1255, 32
    %v1263 = vpop.permute.xlu0 %1262
    %1264 = vrot.lane.b32.xlu0 %v1258, 32
    %v1265 = vpop.permute.xlu0 %1264
    %1266 = vrot.lane.b32.xlu0 %v1261, 32
    %v1267 = vpop.permute.xlu0 %1266
    %1268 = vrot.lane.b32.xlu0 %v1254, 32
    %v1269 = vpop.permute.xlu0 %1268
    %1270 = vrot.lane.b32.xlu0 %v1257, 32
    %v1271 = vpop.permute.xlu0 %1270
    %1272 = vrot.lane.b32.xlu0 %v1260, 32
    %v1273 = vpop.permute.xlu0 %1272
    %v1274 = vsel %vm29, %v1263, %v1265
    %v1275 = vsel %vm29, %v1265, %v1267
    %v1276 = vsel %vm29, %v1269, %v1271
    %v1277 = vsel %vm29, %v1271, %v1273
    %v1288 = vrot.slane %v1229, 2
    %v1289 = vrot.slane %v1232, 2
    %v1290 = vsel %vm869, %v1288, %v1289
    %v1291 = vrot.slane %v1230, 2
    %v1292 = vrot.slane %v1233, 2
    %v1293 = vsel %vm869, %v1291, %v1292
    %v1294 = vrot.slane %v1231, 2
    %v1295 = vrot.slane %v1234, 2
    %v1296 = vsel %vm869, %v1294, %v1295
    %1297 = vrot.lane.b32.xlu0 %v1290, 64
    %v1298 = vpop.permute.xlu0 %1297
    %1299 = vrot.lane.b32.xlu0 %v1293, 64
    %v1300 = vpop.permute.xlu0 %1299
    %1301 = vrot.lane.b32.xlu0 %v1296, 64
    %v1302 = vpop.permute.xlu0 %1301
    %1303 = vrot.lane.b32.xlu0 %v1289, 64
    %v1304 = vpop.permute.xlu0 %1303
    %1305 = vrot.lane.b32.xlu0 %v1292, 64
    %v1306 = vpop.permute.xlu0 %1305
    %1307 = vrot.lane.b32.xlu0 %v1295, 64
    %v1308 = vpop.permute.xlu0 %1307
    %v1309 = vsel %vm160, %v1298, %v1300
    %v1310 = vsel %vm160, %v1300, %v1302
    %v1311 = vsel %vm160, %v1304, %v1306
    %v1312 = vsel %vm160, %v1306, %v1308
    %v1323 = vrot.slane %v1235, 3
    %v1324 = vrot.slane %v1232, 3
    %v1325 = vsel %vm866, %v1323, %v1324
    %v1326 = vrot.slane %v1236, 3
    %v1327 = vrot.slane %v1233, 3
    %v1328 = vsel %vm866, %v1326, %v1327
    %v1329 = vrot.slane %v1237, 3
    %v1330 = vrot.slane %v1234, 3
    %v1331 = vsel %vm866, %v1329, %v1330
    %v1332 = vrot.slane %v1238, 3
    %v1333 = vsel %vm866, %v1324, %v1332
    %v1334 = vrot.slane %v1239, 3
    %v1335 = vsel %vm866, %v1327, %v1334
    %v1336 = vrot.slane %v1240, 3
    %v1337 = vsel %vm866, %v1330, %v1336
    %1338 = vrot.lane.b32.xlu0 %v1325, 96
    %v1339 = vpop.permute.xlu0 %1338
    %1340 = vrot.lane.b32.xlu0 %v1328, 96
    %v1341 = vpop.permute.xlu0 %1340
    %1342 = vrot.lane.b32.xlu0 %v1331, 96
    %v1343 = vpop.permute.xlu0 %1342
    %1344 = vrot.lane.b32.xlu0 %v1333, 96
    %v1345 = vpop.permute.xlu0 %1344
    %1346 = vrot.lane.b32.xlu0 %v1335, 96
    %v1347 = vpop.permute.xlu0 %1346
    %1348 = vrot.lane.b32.xlu0 %v1337, 96
    %v1349 = vpop.permute.xlu0 %1348
    %v1350 = vsel %vm165, %v1339, %v1341
    %v1351 = vsel %vm165, %v1341, %v1343
    %v1352 = vsel %vm165, %v1345, %v1347
    %v1353 = vsel %vm165, %v1347, %v1349
    %v1362 = vrot.slane %v1241, 4
    %v1363 = vrot.slane %v1232, 4
    %v1364 = vsel %vm259, %v1362, %v1363
    %v1365 = vrot.slane %v1242, 4
    %v1366 = vrot.slane %v1233, 4
    %v1367 = vsel %vm259, %v1365, %v1366
    %v1368 = vrot.slane %v1243, 4
    %v1369 = vrot.slane %v1234, 4
    %v1370 = vsel %vm259, %v1368, %v1369
    %v1371 = vrot.slane %v1244, 4
    %v1372 = vsel %vm259, %v1363, %v1371
    %v1373 = vrot.slane %v1245, 4
    %v1374 = vsel %vm259, %v1366, %v1373
    %v1375 = vrot.slane %v1246, 4
    %v1376 = vsel %vm259, %v1369, %v1375
    %v1377 = vsel %vm29, %v1219, %v1263
    %v1378 = vsel %vm29, %v1222, %v1269
    %v1379 = vsel %vm160, %v1275, %v1298
    %v1380 = vsel %vm160, %v1277, %v1304
    %v1381 = vsel %vm165, %v1310, %v1339
    %v1382 = vsel %vm165, %v1312, %v1345
    %v1393 = vrot.slane %v1217, 2
    %v1394 = vrot.slane %v1218, 2
    %v1395 = vrot.slane %v1377, 2
    %v1396 = vrot.slane %v1274, 2
    %v1397 = vrot.slane %v1379, 2
    %v1398 = vrot.slane %v1309, 2
    %v1399 = vrot.slane %v1381, 2
    %v1400 = vrot.slane %v1350, 2
    %v1401 = vrot.slane %v1351, 2
    %v1402 = vrot.slane %v1364, 2
    %v1403 = vrot.slane %v1367, 2
    %v1404 = vrot.slane %v1370, 2
    %v1405 = vrot.slane %v1220, 2
    %v1406 = vsel %vm869, %v1393, %v1405
    %v1407 = vrot.slane %v1221, 2
    %v1408 = vsel %vm869, %v1394, %v1407
    %v1409 = vrot.slane %v1378, 2
    %v1410 = vsel %vm869, %v1395, %v1409
    %v1411 = vrot.slane %v1276, 2
    %v1412 = vsel %vm869, %v1396, %v1411
    %v1413 = vrot.slane %v1380, 2
    %v1414 = vsel %vm869, %v1397, %v1413
    %v1415 = vrot.slane %v1311, 2
    %v1416 = vsel %vm869, %v1398, %v1415
    %v1417 = vrot.slane %v1382, 2
    %v1418 = vsel %vm869, %v1399, %v1417
    %v1419 = vrot.slane %v1352, 2
    %v1420 = vsel %vm869, %v1400, %v1419
    %v1421 = vrot.slane %v1353, 2
    %v1422 = vsel %vm869, %v1401, %v1421
    %v1423 = vrot.slane %v1372, 2
    %v1424 = vsel %vm869, %v1402, %v1423
    %v1425 = vrot.slane %v1374, 2
    %v1426 = vsel %vm869, %v1403, %v1425
    %v1427 = vrot.slane %v1376, 2
    %v1428 = vsel %vm869, %v1404, %v1427
    %v1463 = vsel %vm869, %v1041, %v1393
    %v1464 = vsel %vm869, %v1042, %v1394
    %v1465 = vsel %vm869, %v1212, %v1395
    %v1466 = vsel %vm869, %v1097, %v1396
    %v1467 = vsel %vm869, %v1214, %v1397
    %v1468 = vsel %vm869, %v1134, %v1398
    %v1469 = vsel %vm869, %v1216, %v1399
    %v1470 = vsel %vm869, %v1177, %v1400
    %v1471 = vsel %vm869, %v1178, %v1401
    %v1472 = vsel %vm869, %v1201, %v1402
    %v1473 = vsel %vm869, %v1203, %v1403
    %v1474 = vsel %vm869, %v1205, %v1404
    %v1475 = vld [vmem:[%s3] sm:$0xff]
    %v1476 = vld [vmem:[%s3 + $0x8] sm:$0xff]
    %v1477 = vld [vmem:[%s3 + $0x10] sm:$0xff]
    %v1478 = vld [vmem:[%s3 + $0x18] sm:$0xff]
    %v1479 = vld [vmem:[%s3 + $0x20] sm:$0xff]
    %v1480 = vld [vmem:[%s3 + $0x28] sm:$0xff]
    %v1481 = vld [vmem:[%s3 + $0x30] sm:$0xff]
    %v1482 = vld [vmem:[%s3 + $0x38] sm:$0xff]
    %v1483 = vld [vmem:[%s3 + $0x40] sm:$0xff]
    %v1484 = vld [vmem:[%s3 + $0x48] sm:$0xff]
    %v1485 = vld [vmem:[%s3 + $0x50] sm:$0xff]
    %v1486 = vld [vmem:[%s3 + $0x58] sm:$0xff]
    %v1487 = vld [vmem:[%s3 + $0x60] sm:$0xff]
    %v1488 = vld [vmem:[%s3 + $0x68] sm:$0xff]
    %v1489 = vld [vmem:[%s3 + $0x70] sm:$0xff]
    %v1490 = vld [vmem:[%s3 + $0x78] sm:$0xff]
    %v1491 = vld [vmem:[%s3 + $0x80] sm:$0xff]
    %v1492 = vld [vmem:[%s3 + $0x88] sm:$0xff]
    %v1493 = vld [vmem:[%s3 + $0x90] sm:$0xff]
    %v1494 = vld [vmem:[%s3 + $0x98] sm:$0xff]
    %v1495 = vld [vmem:[%s3 + $0xa0] sm:$0xff]
    %v1496 = vld [vmem:[%s3 + $0xa8] sm:$0xff]
    %v1497 = vld [vmem:[%s3 + $0xb0] sm:$0xff]
    %v1498 = vld [vmem:[%s3 + $0xb8] sm:$0xff]
    %v1499 = vld [vmem:[%s3 + $0xc0] sm:$0xff]
    %v1500 = vld [vmem:[%s3 + $0xc8] sm:$0xff]
    %v1501 = vld [vmem:[%s3 + $0xd0] sm:$0xff]
    %v1502 = vld [vmem:[%s3 + $0xd8] sm:$0xff]
    %v1503 = vld [vmem:[%s3 + $0xe0] sm:$0xff]
    %v1504 = vld [vmem:[%s3 + $0xe8] sm:$0xff]
    %v1505 = vld [vmem:[%s3 + $0xf0] sm:$0xff]
    %v1506 = vld [vmem:[%s3 + $0xf8] sm:$0xff]
    %v1507 = vld [vmem:[%s3 + $0x100] sm:$0xff]
    %v1508 = vld [vmem:[%s3 + $0x108] sm:$0xff]
    %v1509 = vld [vmem:[%s3 + $0x110] sm:$0xff]
    %v1510 = vld [vmem:[%s3 + $0x118] sm:$0xff]
    %v1511 = vld [vmem:[%s3 + $0x120] sm:$0xff]
    %v1512 = vld [vmem:[%s3 + $0x128] sm:$0xff]
    %v1513 = vld [vmem:[%s3 + $0x130] sm:$0xff]
    %v1514 = vld [vmem:[%s3 + $0x138] sm:$0xff]
    %v1515 = vld [vmem:[%s3 + $0x140] sm:$0xff]
    %v1516 = vld [vmem:[%s3 + $0x148] sm:$0xff]
    %v1517 = vld [vmem:[%s3 + $0x150] sm:$0xff]
    %v1518 = vld [vmem:[%s3 + $0x158] sm:$0xff]
    %v1519 = vld [vmem:[%s3 + $0x160] sm:$0xff]
    %v1520 = vld [vmem:[%s3 + $0x168] sm:$0xff]
    %v1521 = vld [vmem:[%s3 + $0x170] sm:$0xff]
    %v1522 = vld [vmem:[%s3 + $0x178] sm:$0xff]
    %v1523 = vld [vmem:[%s3 + $0x180] sm:$0xff]
    %v1524 = vld [vmem:[%s3 + $0x188] sm:$0xff]
    %v1525 = vld [vmem:[%s3 + $0x190] sm:$0xff]
    %v1526 = vld [vmem:[%s3 + $0x198] sm:$0xff]
    %v1527 = vld [vmem:[%s3 + $0x1a0] sm:$0xff]
    %v1528 = vld [vmem:[%s3 + $0x1a8] sm:$0xff]
    %v1529 = vld [vmem:[%s3 + $0x1b0] sm:$0xff]
    %v1530 = vld [vmem:[%s3 + $0x1b8] sm:$0xff]
    %v1531 = vld [vmem:[%s3 + $0x1c0] sm:$0xff]
    %v1532 = vld [vmem:[%s3 + $0x1c8] sm:$0xff]
    %v1533 = vld [vmem:[%s3 + $0x1d0] sm:$0xff]
    %v1534 = vld [vmem:[%s3 + $0x1d8] sm:$0xff]
    %v1535 = vld [vmem:[%s3 + $0x1e0] sm:$0xff]
    %v1536 = vld [vmem:[%s3 + $0x1e8] sm:$0xff]
    %v1537 = vld [vmem:[%s3 + $0x1f0] sm:$0xff]
    %v1538 = vld [vmem:[%s3 + $0x1f8] sm:$0xff]
    %v1539 = vld [vmem:[%s3 + $0x200] sm:$0xff]
    %v1540 = vld [vmem:[%s3 + $0x208] sm:$0xff]
    %v1541 = vld [vmem:[%s3 + $0x210] sm:$0xff]
    %v1542 = vld [vmem:[%s3 + $0x218] sm:$0xff]
    %v1543 = vld [vmem:[%s3 + $0x220] sm:$0xff]
    %v1544 = vld [vmem:[%s3 + $0x228] sm:$0xff]
    %v1545 = vld [vmem:[%s3 + $0x230] sm:$0xff]
    %v1546 = vld [vmem:[%s3 + $0x238] sm:$0xff]
    %v1547 = vld [vmem:[%s3 + $0x240] sm:$0xff]
    %v1548 = vld [vmem:[%s3 + $0x248] sm:$0xff]
    %v1549 = vld [vmem:[%s3 + $0x250] sm:$0xff]
    %v1550 = vld [vmem:[%s3 + $0x258] sm:$0xff]
    %v1551 = vld [vmem:[%s3 + $0x260] sm:$0xff]
    %v1552 = vld [vmem:[%s3 + $0x268] sm:$0xff]
    %v1553 = vld [vmem:[%s3 + $0x270] sm:$0xff]
    %v1554 = vld [vmem:[%s3 + $0x278] sm:$0xff]
    %v1555 = vld [vmem:[%s3 + $0x280] sm:$0xff]
    %v1556 = vld [vmem:[%s3 + $0x288] sm:$0xff]
    %v1557 = vld [vmem:[%s3 + $0x290] sm:$0xff]
    %v1558 = vld [vmem:[%s3 + $0x298] sm:$0xff]
    %v1559 = vld [vmem:[%s3 + $0x2a0] sm:$0xff]
    %v1560 = vld [vmem:[%s3 + $0x2a8] sm:$0xff]
    %v1561 = vld [vmem:[%s3 + $0x2b0] sm:$0xff]
    %v1562 = vld [vmem:[%s3 + $0x2b8] sm:$0xff]
    %v1563 = vld [vmem:[%s3 + $0x2c0] sm:$0xff]
    %v1564 = vld [vmem:[%s3 + $0x2c8] sm:$0xff]
    %v1565 = vld [vmem:[%s3 + $0x2d0] sm:$0xff]
    %v1566 = vld [vmem:[%s3 + $0x2d8] sm:$0xff]
    %v1567 = vld [vmem:[%s3 + $0x2e0] sm:$0xff]
    %v1568 = vld [vmem:[%s3 + $0x2e8] sm:$0xff]
    %v1569 = vld [vmem:[%s3 + $0x2f0] sm:$0xff]
    %v1570 = vld [vmem:[%s3 + $0x2f8] sm:$0xff]
    %v1571 = vld [vmem:[%s3 + $0x300] sm:$0xff]
    %v1572 = vld [vmem:[%s3 + $0x308] sm:$0xff]
    %v1573 = vld [vmem:[%s3 + $0x310] sm:$0xff]
    %v1574 = vld [vmem:[%s3 + $0x318] sm:$0xff]
    %v1575 = vld [vmem:[%s3 + $0x320] sm:$0xff]
    %v1576 = vld [vmem:[%s3 + $0x328] sm:$0xff]
    %v1577 = vld [vmem:[%s3 + $0x330] sm:$0xff]
    %v1578 = vld [vmem:[%s3 + $0x338] sm:$0xff]
    %v1579 = vld [vmem:[%s3 + $0x340] sm:$0xff]
    %v1580 = vld [vmem:[%s3 + $0x348] sm:$0xff]
    %v1581 = vld [vmem:[%s3 + $0x350] sm:$0xff]
    %v1582 = vld [vmem:[%s3 + $0x358] sm:$0xff]
    %v1583 = vld [vmem:[%s3 + $0x360] sm:$0xff]
    %v1584 = vld [vmem:[%s3 + $0x368] sm:$0xff]
    %v1585 = vld [vmem:[%s3 + $0x370] sm:$0xff]
    %v1586 = vld [vmem:[%s3 + $0x378] sm:$0xff]
    %v1587 = vld [vmem:[%s3 + $0x380] sm:$0xff]
    %v1588 = vld [vmem:[%s3 + $0x388] sm:$0xff]
    %v1589 = vld [vmem:[%s3 + $0x390] sm:$0xff]
    %v1590 = vld [vmem:[%s3 + $0x398] sm:$0xff]
    %v1591 = vld [vmem:[%s3 + $0x3a0] sm:$0xff]
    %v1592 = vld [vmem:[%s3 + $0x3a8] sm:$0xff]
    %v1593 = vld [vmem:[%s3 + $0x3b0] sm:$0xff]
    %v1594 = vld [vmem:[%s3 + $0x3b8] sm:$0xff]
    %v1595 = vld [vmem:[%s3 + $0x3c0] sm:$0xff]
    %v1596 = vld [vmem:[%s3 + $0x3c8] sm:$0xff]
    %v1597 = vld [vmem:[%s3 + $0x3d0] sm:$0xff]
    %v1598 = vld [vmem:[%s3 + $0x3d8] sm:$0xff]
    %v1599 = vld [vmem:[%s3 + $0x3e0] sm:$0xff]
    %v1600 = vld [vmem:[%s3 + $0x3e8] sm:$0xff]
    %v1601 = vld [vmem:[%s3 + $0x3f0] sm:$0xff]
    %v1602 = vld [vmem:[%s3 + $0x3f8] sm:$0xff]
    %v1603 = vld [vmem:[%s3 + $0x400] sm:$0xff]
    %v1604 = vld [vmem:[%s3 + $0x408] sm:$0xff]
    %v1605 = vld [vmem:[%s3 + $0x410] sm:$0xff]
    %v1606 = vld [vmem:[%s3 + $0x418] sm:$0xff]
    %v1607 = vld [vmem:[%s3 + $0x420] sm:$0xff]
    %v1608 = vld [vmem:[%s3 + $0x428] sm:$0xff]
    %v1609 = vld [vmem:[%s3 + $0x430] sm:$0xff]
    %v1610 = vld [vmem:[%s3 + $0x438] sm:$0xff]
    %v1611 = vld [vmem:[%s3 + $0x440] sm:$0xff]
    %v1612 = vld [vmem:[%s3 + $0x448] sm:$0xff]
    %v1613 = vld [vmem:[%s3 + $0x450] sm:$0xff]
    %v1614 = vld [vmem:[%s3 + $0x458] sm:$0xff]
    %v1615 = vld [vmem:[%s3 + $0x460] sm:$0xff]
    %v1616 = vld [vmem:[%s3 + $0x468] sm:$0xff]
    %v1617 = vld [vmem:[%s3 + $0x470] sm:$0xff]
    %v1618 = vld [vmem:[%s3 + $0x478] sm:$0xff]
    %v1619 = vld [vmem:[%s3 + $0x480] sm:$0xff]
    %v1620 = vld [vmem:[%s3 + $0x488] sm:$0xff]
    %v1621 = vld [vmem:[%s3 + $0x490] sm:$0xff]
    %v1622 = vld [vmem:[%s3 + $0x498] sm:$0xff]
    %v1623 = vld [vmem:[%s3 + $0x4a0] sm:$0xff]
    %v1624 = vld [vmem:[%s3 + $0x4a8] sm:$0xff]
    %v1625 = vld [vmem:[%s3 + $0x4b0] sm:$0xff]
    %v1626 = vld [vmem:[%s3 + $0x4b8] sm:$0xff]
    %v1627 = vld [vmem:[%s3 + $0x4c0] sm:$0xff]
    %v1628 = vld [vmem:[%s3 + $0x4c8] sm:$0xff]
    %v1629 = vld [vmem:[%s3 + $0x4d0] sm:$0xff]
    %v1630 = vld [vmem:[%s3 + $0x4d8] sm:$0xff]
    %v1631 = vld [vmem:[%s3 + $0x4e0] sm:$0xff]
    %v1632 = vld [vmem:[%s3 + $0x4e8] sm:$0xff]
    %v1633 = vld [vmem:[%s3 + $0x4f0] sm:$0xff]
    %v1634 = vld [vmem:[%s3 + $0x4f8] sm:$0xff]
    %v1635 = vld [vmem:[%s3 + $0x500] sm:$0xff]
    %v1636 = vld [vmem:[%s3 + $0x508] sm:$0xff]
    %v1637 = vld [vmem:[%s3 + $0x510] sm:$0xff]
    %v1638 = vld [vmem:[%s3 + $0x518] sm:$0xff]
    %v1639 = vld [vmem:[%s3 + $0x520] sm:$0xff]
    %v1640 = vld [vmem:[%s3 + $0x528] sm:$0xff]
    %v1641 = vld [vmem:[%s3 + $0x530] sm:$0xff]
    %v1642 = vld [vmem:[%s3 + $0x538] sm:$0xff]
    %v1643 = vld [vmem:[%s3 + $0x540] sm:$0xff]
    %v1644 = vld [vmem:[%s3 + $0x548] sm:$0xff]
    %v1645 = vld [vmem:[%s3 + $0x550] sm:$0xff]
    %v1646 = vld [vmem:[%s3 + $0x558] sm:$0xff]
    %v1647 = vld [vmem:[%s3 + $0x560] sm:$0xff]
    %v1648 = vld [vmem:[%s3 + $0x568] sm:$0xff]
    %v1649 = vld [vmem:[%s3 + $0x570] sm:$0xff]
    %v1650 = vld [vmem:[%s3 + $0x578] sm:$0xff]
    %v1651 = vld [vmem:[%s3 + $0x580] sm:$0xff]
    %v1652 = vld [vmem:[%s3 + $0x588] sm:$0xff]
    %v1653 = vld [vmem:[%s3 + $0x590] sm:$0xff]
    %v1654 = vld [vmem:[%s3 + $0x598] sm:$0xff]
    %v1655 = vld [vmem:[%s3 + $0x5a0] sm:$0xff]
    %v1656 = vld [vmem:[%s3 + $0x5a8] sm:$0xff]
    %v1657 = vld [vmem:[%s3 + $0x5b0] sm:$0xff]
    %v1658 = vld [vmem:[%s3 + $0x5b8] sm:$0xff]
    %v1659 = vld [vmem:[%s3 + $0x5c0] sm:$0xff]
    %v1660 = vld [vmem:[%s3 + $0x5c8] sm:$0xff]
    %v1661 = vld [vmem:[%s3 + $0x5d0] sm:$0xff]
    %v1662 = vld [vmem:[%s3 + $0x5d8] sm:$0xff]
    %v1663 = vld [vmem:[%s3 + $0x5e0] sm:$0xff]
    %v1664 = vld [vmem:[%s3 + $0x5e8] sm:$0xff]
    %v1665 = vld [vmem:[%s3 + $0x5f0] sm:$0xff]
    %v1666 = vld [vmem:[%s3 + $0x5f8] sm:$0xff]
    %v1667 = vld [vmem:[%s3 + $0x600] sm:$0xff]
    %v1668 = vld [vmem:[%s3 + $0x608] sm:$0xff]
    %v1669 = vld [vmem:[%s3 + $0x610] sm:$0xff]
    %v1670 = vld [vmem:[%s3 + $0x618] sm:$0xff]
    %v1671 = vld [vmem:[%s3 + $0x620] sm:$0xff]
    %v1672 = vld [vmem:[%s3 + $0x628] sm:$0xff]
    %v1673 = vld [vmem:[%s3 + $0x630] sm:$0xff]
    %v1674 = vld [vmem:[%s3 + $0x638] sm:$0xff]
    %v1675 = vld [vmem:[%s3 + $0x640] sm:$0xff]
    %v1676 = vld [vmem:[%s3 + $0x648] sm:$0xff]
    %v1677 = vld [vmem:[%s3 + $0x650] sm:$0xff]
    %v1678 = vld [vmem:[%s3 + $0x658] sm:$0xff]
    %v1679 = vld [vmem:[%s3 + $0x660] sm:$0xff]
    %v1680 = vld [vmem:[%s3 + $0x668] sm:$0xff]
    %v1681 = vld [vmem:[%s3 + $0x670] sm:$0xff]
    %v1682 = vld [vmem:[%s3 + $0x678] sm:$0xff]
    %v1683 = vld [vmem:[%s3 + $0x680] sm:$0xff]
    %v1684 = vld [vmem:[%s3 + $0x688] sm:$0xff]
    %v1685 = vld [vmem:[%s3 + $0x690] sm:$0xff]
    %v1686 = vld [vmem:[%s3 + $0x698] sm:$0xff]
    %v1687 = vld [vmem:[%s3 + $0x6a0] sm:$0xff]
    %v1688 = vld [vmem:[%s3 + $0x6a8] sm:$0xff]
    %v1689 = vld [vmem:[%s3 + $0x6b0] sm:$0xff]
    %v1690 = vld [vmem:[%s3 + $0x6b8] sm:$0xff]
    %v1691 = vld [vmem:[%s3 + $0x6c0] sm:$0xff]
    %v1692 = vld [vmem:[%s3 + $0x6c8] sm:$0xff]
    %v1693 = vld [vmem:[%s3 + $0x6d0] sm:$0xff]
    %v1694 = vld [vmem:[%s3 + $0x6d8] sm:$0xff]
    %v1695 = vld [vmem:[%s3 + $0x6e0] sm:$0xff]
    %v1696 = vld [vmem:[%s3 + $0x6e8] sm:$0xff]
    %v1697 = vld [vmem:[%s3 + $0x6f0] sm:$0xff]
    %v1698 = vld [vmem:[%s3 + $0x6f8] sm:$0xff]
    %v1699 = vld [vmem:[%s3 + $0x700] sm:$0xff]
    %v1700 = vld [vmem:[%s3 + $0x708] sm:$0xff]
    %v1701 = vld [vmem:[%s3 + $0x710] sm:$0xff]
    %v1702 = vld [vmem:[%s3 + $0x718] sm:$0xff]
    %v1703 = vld [vmem:[%s3 + $0x720] sm:$0xff]
    %v1704 = vld [vmem:[%s3 + $0x728] sm:$0xff]
    %v1705 = vld [vmem:[%s3 + $0x730] sm:$0xff]
    %v1706 = vld [vmem:[%s3 + $0x738] sm:$0xff]
    %v1707 = vld [vmem:[%s3 + $0x740] sm:$0xff]
    %v1708 = vld [vmem:[%s3 + $0x748] sm:$0xff]
    %v1709 = vld [vmem:[%s3 + $0x750] sm:$0xff]
    %v1710 = vld [vmem:[%s3 + $0x758] sm:$0xff]
    %v1711 = vld [vmem:[%s3 + $0x760] sm:$0xff]
    %v1712 = vld [vmem:[%s3 + $0x768] sm:$0xff]
    %v1713 = vld [vmem:[%s3 + $0x770] sm:$0xff]
    %v1714 = vld [vmem:[%s3 + $0x778] sm:$0xff]
    %v1715 = vld [vmem:[%s3 + $0x780] sm:$0xff]
    %v1716 = vld [vmem:[%s3 + $0x788] sm:$0xff]
    %v1717 = vld [vmem:[%s3 + $0x790] sm:$0xff]
    %v1718 = vld [vmem:[%s3 + $0x798] sm:$0xff]
    %v1719 = vld [vmem:[%s3 + $0x7a0] sm:$0xff]
    %v1720 = vld [vmem:[%s3 + $0x7a8] sm:$0xff]
    %v1721 = vld [vmem:[%s3 + $0x7b0] sm:$0xff]
    %v1722 = vld [vmem:[%s3 + $0x7b8] sm:$0xff]
    %v1723 = vld [vmem:[%s3 + $0x7c0] sm:$0xff]
    %v1724 = vld [vmem:[%s3 + $0x7c8] sm:$0xff]
    %v1725 = vld [vmem:[%s3 + $0x7d0] sm:$0xff]
    %v1726 = vld [vmem:[%s3 + $0x7d8] sm:$0xff]
    %v1727 = vld [vmem:[%s3 + $0x7e0] sm:$0xff]
    %v1728 = vld [vmem:[%s3 + $0x7e8] sm:$0xff]
    %v1729 = vld [vmem:[%s3 + $0x7f0] sm:$0xff]
    %v1730 = vld [vmem:[%s3 + $0x7f8] sm:$0xff]
    %v1731 = vld [vmem:[%s3 + $0x800] sm:$0xff]
    %v1732 = vld [vmem:[%s3 + $0x808] sm:$0xff]
    %v1733 = vld [vmem:[%s3 + $0x810] sm:$0xff]
    %v1734 = vld [vmem:[%s3 + $0x818] sm:$0xff]
    %v1735 = vld [vmem:[%s3 + $0x820] sm:$0xff]
    %v1736 = vld [vmem:[%s3 + $0x828] sm:$0xff]
    %v1737 = vld [vmem:[%s3 + $0x830] sm:$0xff]
    %v1738 = vld [vmem:[%s3 + $0x838] sm:$0xff]
    %v1739 = vld [vmem:[%s3 + $0x840] sm:$0xff]
    %v1740 = vld [vmem:[%s3 + $0x848] sm:$0xff]
    %v1741 = vld [vmem:[%s3 + $0x850] sm:$0xff]
    %v1742 = vld [vmem:[%s3 + $0x858] sm:$0xff]
    %v1743 = vld [vmem:[%s3 + $0x860] sm:$0xff]
    %v1744 = vld [vmem:[%s3 + $0x868] sm:$0xff]
    %v1745 = vld [vmem:[%s3 + $0x870] sm:$0xff]
    %v1746 = vld [vmem:[%s3 + $0x878] sm:$0xff]
    %v1747 = vld [vmem:[%s3 + $0x880] sm:$0xff]
    %v1748 = vld [vmem:[%s3 + $0x888] sm:$0xff]
    %v1749 = vld [vmem:[%s3 + $0x890] sm:$0xff]
    %v1750 = vld [vmem:[%s3 + $0x898] sm:$0xff]
    %v1751 = vld [vmem:[%s3 + $0x8a0] sm:$0xff]
    %v1752 = vld [vmem:[%s3 + $0x8a8] sm:$0xff]
    %v1753 = vld [vmem:[%s3 + $0x8b0] sm:$0xff]
    %v1754 = vld [vmem:[%s3 + $0x8b8] sm:$0xff]
    %v1755 = vld [vmem:[%s3 + $0x8c0] sm:$0xff]
    %v1756 = vld [vmem:[%s3 + $0x8c8] sm:$0xff]
    %v1757 = vld [vmem:[%s3 + $0x8d0] sm:$0xff]
    %v1758 = vld [vmem:[%s3 + $0x8d8] sm:$0xff]
    %v1759 = vld [vmem:[%s3 + $0x8e0] sm:$0xff]
    %v1760 = vld [vmem:[%s3 + $0x8e8] sm:$0xff]
    %v1761 = vld [vmem:[%s3 + $0x8f0] sm:$0xff]
    %v1762 = vld [vmem:[%s3 + $0x8f8] sm:$0xff]
    %v1763 = vld [vmem:[%s3 + $0x900] sm:$0xff]
    %v1764 = vld [vmem:[%s3 + $0x908] sm:$0xff]
    %v1765 = vld [vmem:[%s3 + $0x910] sm:$0xff]
    %v1766 = vld [vmem:[%s3 + $0x918] sm:$0xff]
    %v1767 = vld [vmem:[%s3 + $0x920] sm:$0xff]
    %v1768 = vld [vmem:[%s3 + $0x928] sm:$0xff]
    %v1769 = vld [vmem:[%s3 + $0x930] sm:$0xff]
    %v1770 = vld [vmem:[%s3 + $0x938] sm:$0xff]
    %v1771 = vld [vmem:[%s3 + $0x940] sm:$0xff]
    %v1772 = vld [vmem:[%s3 + $0x948] sm:$0xff]
    %v1773 = vld [vmem:[%s3 + $0x950] sm:$0xff]
    %v1774 = vld [vmem:[%s3 + $0x958] sm:$0xff]
    %v1775 = vld [vmem:[%s3 + $0x960] sm:$0xff]
    %v1776 = vld [vmem:[%s3 + $0x968] sm:$0xff]
    %v1777 = vld [vmem:[%s3 + $0x970] sm:$0xff]
    %v1778 = vld [vmem:[%s3 + $0x978] sm:$0xff]
    %v1779 = vld [vmem:[%s3 + $0x980] sm:$0xff]
    %v1780 = vld [vmem:[%s3 + $0x988] sm:$0xff]
    %v1781 = vld [vmem:[%s3 + $0x990] sm:$0xff]
    %v1782 = vld [vmem:[%s3 + $0x998] sm:$0xff]
    %v1783 = vld [vmem:[%s3 + $0x9a0] sm:$0xff]
    %v1784 = vld [vmem:[%s3 + $0x9a8] sm:$0xff]
    %v1785 = vld [vmem:[%s3 + $0x9b0] sm:$0xff]
    %v1786 = vld [vmem:[%s3 + $0x9b8] sm:$0xff]
    %v1787 = vld [vmem:[%s3 + $0x9c0] sm:$0xff]
    %v1788 = vld [vmem:[%s3 + $0x9c8] sm:$0xff]
    %v1789 = vld [vmem:[%s3 + $0x9d0] sm:$0xff]
    %v1790 = vld [vmem:[%s3 + $0x9d8] sm:$0xff]
    %v1791 = vld [vmem:[%s3 + $0x9e0] sm:$0xff]
    %v1792 = vld [vmem:[%s3 + $0x9e8] sm:$0xff]
    %v1793 = vld [vmem:[%s3 + $0x9f0] sm:$0xff]
    %v1794 = vld [vmem:[%s3 + $0x9f8] sm:$0xff]
    %v1795 = vld [vmem:[%s3 + $0xa00] sm:$0xff]
    %v1796 = vld [vmem:[%s3 + $0xa08] sm:$0xff]
    %v1797 = vld [vmem:[%s3 + $0xa10] sm:$0xff]
    %v1798 = vld [vmem:[%s3 + $0xa18] sm:$0xff]
    %v1799 = vld [vmem:[%s3 + $0xa20] sm:$0xff]
    %v1800 = vld [vmem:[%s3 + $0xa28] sm:$0xff]
    %v1801 = vld [vmem:[%s3 + $0xa30] sm:$0xff]
    %v1802 = vld [vmem:[%s3 + $0xa38] sm:$0xff]
    %v1803 = vld [vmem:[%s3 + $0xa40] sm:$0xff]
    %v1804 = vld [vmem:[%s3 + $0xa48] sm:$0xff]
    %v1805 = vld [vmem:[%s3 + $0xa50] sm:$0xff]
    %v1806 = vld [vmem:[%s3 + $0xa58] sm:$0xff]
    %v1807 = vld [vmem:[%s3 + $0xa60] sm:$0xff]
    %v1808 = vld [vmem:[%s3 + $0xa68] sm:$0xff]
    %v1809 = vld [vmem:[%s3 + $0xa70] sm:$0xff]
    %v1810 = vld [vmem:[%s3 + $0xa78] sm:$0xff]
    %v1811 = vld [vmem:[%s3 + $0xa80] sm:$0xff]
    %v1812 = vld [vmem:[%s3 + $0xa88] sm:$0xff]
    %v1813 = vld [vmem:[%s3 + $0xa90] sm:$0xff]
    %v1814 = vld [vmem:[%s3 + $0xa98] sm:$0xff]
    %v1815 = vld [vmem:[%s3 + $0xaa0] sm:$0xff]
    %v1816 = vld [vmem:[%s3 + $0xaa8] sm:$0xff]
    %v1817 = vld [vmem:[%s3 + $0xab0] sm:$0xff]
    %v1818 = vld [vmem:[%s3 + $0xab8] sm:$0xff]
    %v1819 = vld [vmem:[%s3 + $0xac0] sm:$0xff]
    %v1820 = vld [vmem:[%s3 + $0xac8] sm:$0xff]
    %v1821 = vld [vmem:[%s3 + $0xad0] sm:$0xff]
    %v1822 = vld [vmem:[%s3 + $0xad8] sm:$0xff]
    %v1823 = vld [vmem:[%s3 + $0xae0] sm:$0xff]
    %v1824 = vld [vmem:[%s3 + $0xae8] sm:$0xff]
    %v1825 = vld [vmem:[%s3 + $0xaf0] sm:$0xff]
    %v1826 = vld [vmem:[%s3 + $0xaf8] sm:$0xff]
    %v1827 = vld [vmem:[%s3 + $0xb00] sm:$0xff]
    %v1828 = vld [vmem:[%s3 + $0xb08] sm:$0xff]
    %v1829 = vld [vmem:[%s3 + $0xb10] sm:$0xff]
    %v1830 = vld [vmem:[%s3 + $0xb18] sm:$0xff]
    %v1831 = vld [vmem:[%s3 + $0xb20] sm:$0xff]
    %v1832 = vld [vmem:[%s3 + $0xb28] sm:$0xff]
    %v1833 = vld [vmem:[%s3 + $0xb30] sm:$0xff]
    %v1834 = vld [vmem:[%s3 + $0xb38] sm:$0xff]
    %v1835 = vld [vmem:[%s3 + $0xb40] sm:$0xff]
    %v1836 = vld [vmem:[%s3 + $0xb48] sm:$0xff]
    %v1837 = vld [vmem:[%s3 + $0xb50] sm:$0xff]
    %v1838 = vld [vmem:[%s3 + $0xb58] sm:$0xff]
    %v1839 = vld [vmem:[%s3 + $0xb60] sm:$0xff]
    %v1840 = vld [vmem:[%s3 + $0xb68] sm:$0xff]
    %v1841 = vld [vmem:[%s3 + $0xb70] sm:$0xff]
    %v1842 = vld [vmem:[%s3 + $0xb78] sm:$0xff]
    %v1843 = vld [vmem:[%s3 + $0xb80] sm:$0xff]
    %v1844 = vld [vmem:[%s3 + $0xb88] sm:$0xff]
    %v1845 = vld [vmem:[%s3 + $0xb90] sm:$0xff]
    %v1846 = vld [vmem:[%s3 + $0xb98] sm:$0xff]
    %v1847 = vld [vmem:[%s3 + $0xba0] sm:$0xff]
    %v1848 = vld [vmem:[%s3 + $0xba8] sm:$0xff]
    %v1849 = vld [vmem:[%s3 + $0xbb0] sm:$0xff]
    %v1850 = vld [vmem:[%s3 + $0xbb8] sm:$0xff]
    %v1851 = vld [vmem:[%s3 + $0xbc0] sm:$0xff]
    %v1852 = vld [vmem:[%s3 + $0xbc8] sm:$0xff]
    %v1853 = vld [vmem:[%s3 + $0xbd0] sm:$0xff]
    %v1854 = vld [vmem:[%s3 + $0xbd8] sm:$0xff]
    %v1855 = vld [vmem:[%s3 + $0xbe0] sm:$0xff]
    %v1856 = vld [vmem:[%s3 + $0xbe8] sm:$0xff]
    %v1857 = vld [vmem:[%s3 + $0xbf0] sm:$0xff]
    %v1858 = vld [vmem:[%s3 + $0xbf8] sm:$0xff]
    %v1859 = vld [vmem:[%s3 + $0xc00] sm:$0xff]
    %v1860 = vld [vmem:[%s3 + $0xc08] sm:$0xff]
    %v1861 = vld [vmem:[%s3 + $0xc10] sm:$0xff]
    %v1862 = vld [vmem:[%s3 + $0xc18] sm:$0xff]
    %v1863 = vld [vmem:[%s3 + $0xc20] sm:$0xff]
    %v1864 = vld [vmem:[%s3 + $0xc28] sm:$0xff]
    %v1865 = vld [vmem:[%s3 + $0xc30] sm:$0xff]
    %v1866 = vld [vmem:[%s3 + $0xc38] sm:$0xff]
    %v1867 = vld [vmem:[%s3 + $0xc40] sm:$0xff]
    %v1868 = vld [vmem:[%s3 + $0xc48] sm:$0xff]
    %v1869 = vld [vmem:[%s3 + $0xc50] sm:$0xff]
    %v1870 = vld [vmem:[%s3 + $0xc58] sm:$0xff]
    %v1871 = vld [vmem:[%s3 + $0xc60] sm:$0xff]
    %v1872 = vld [vmem:[%s3 + $0xc68] sm:$0xff]
    %v1873 = vld [vmem:[%s3 + $0xc70] sm:$0xff]
    %v1874 = vld [vmem:[%s3 + $0xc78] sm:$0xff]
    %v1875 = vld [vmem:[%s3 + $0xc80] sm:$0xff]
    %v1876 = vld [vmem:[%s3 + $0xc88] sm:$0xff]
    %v1877 = vld [vmem:[%s3 + $0xc90] sm:$0xff]
    %v1878 = vld [vmem:[%s3 + $0xc98] sm:$0xff]
    %v1879 = vld [vmem:[%s3 + $0xca0] sm:$0xff]
    %v1880 = vld [vmem:[%s3 + $0xca8] sm:$0xff]
    %v1881 = vld [vmem:[%s3 + $0xcb0] sm:$0xff]
    %v1882 = vld [vmem:[%s3 + $0xcb8] sm:$0xff]
    %v1883 = vld [vmem:[%s3 + $0xcc0] sm:$0xff]
    %v1884 = vld [vmem:[%s3 + $0xcc8] sm:$0xff]
    %v1885 = vld [vmem:[%s3 + $0xcd0] sm:$0xff]
    %v1886 = vld [vmem:[%s3 + $0xcd8] sm:$0xff]
    %v1887 = vld [vmem:[%s3 + $0xce0] sm:$0xff]
    %v1888 = vld [vmem:[%s3 + $0xce8] sm:$0xff]
    %v1889 = vld [vmem:[%s3 + $0xcf0] sm:$0xff]
    %v1890 = vld [vmem:[%s3 + $0xcf8] sm:$0xff]
    %v1891 = vld [vmem:[%s3 + $0xd00] sm:$0xff]
    %v1892 = vld [vmem:[%s3 + $0xd08] sm:$0xff]
    %v1893 = vld [vmem:[%s3 + $0xd10] sm:$0xff]
    %v1894 = vld [vmem:[%s3 + $0xd18] sm:$0xff]
    %v1895 = vld [vmem:[%s3 + $0xd20] sm:$0xff]
    %v1896 = vld [vmem:[%s3 + $0xd28] sm:$0xff]
    %v1897 = vld [vmem:[%s3 + $0xd30] sm:$0xff]
    %v1898 = vld [vmem:[%s3 + $0xd38] sm:$0xff]
    %v1899 = vld [vmem:[%s3 + $0xd40] sm:$0xff]
    %v1900 = vld [vmem:[%s3 + $0xd48] sm:$0xff]
    %v1901 = vld [vmem:[%s3 + $0xd50] sm:$0xff]
    %v1902 = vld [vmem:[%s3 + $0xd58] sm:$0xff]
    %v1903 = vld [vmem:[%s3 + $0xd60] sm:$0xff]
    %v1904 = vld [vmem:[%s3 + $0xd68] sm:$0xff]
    %v1905 = vld [vmem:[%s3 + $0xd70] sm:$0xff]
    %v1906 = vld [vmem:[%s3 + $0xd78] sm:$0xff]
    %v1907 = vld [vmem:[%s3 + $0xd80] sm:$0xff]
    %v1908 = vld [vmem:[%s3 + $0xd88] sm:$0xff]
    %v1909 = vld [vmem:[%s3 + $0xd90] sm:$0xff]
    %v1910 = vld [vmem:[%s3 + $0xd98] sm:$0xff]
    %v1911 = vld [vmem:[%s3 + $0xda0] sm:$0xff]
    %v1912 = vld [vmem:[%s3 + $0xda8] sm:$0xff]
    %v1913 = vld [vmem:[%s3 + $0xdb0] sm:$0xff]
    %v1914 = vld [vmem:[%s3 + $0xdb8] sm:$0xff]
    %v1915 = vld [vmem:[%s3 + $0xdc0] sm:$0xff]
    %v1916 = vld [vmem:[%s3 + $0xdc8] sm:$0xff]
    %v1917 = vld [vmem:[%s3 + $0xdd0] sm:$0xff]
    %v1918 = vld [vmem:[%s3 + $0xdd8] sm:$0xff]
    %v1919 = vld [vmem:[%s3 + $0xde0] sm:$0xff]
    %v1920 = vld [vmem:[%s3 + $0xde8] sm:$0xff]
    %v1921 = vld [vmem:[%s3 + $0xdf0] sm:$0xff]
    %v1922 = vld [vmem:[%s3 + $0xdf8] sm:$0xff]
    %v1923 = vld [vmem:[%s3 + $0xe00] sm:$0xff]
    %v1924 = vld [vmem:[%s3 + $0xe08] sm:$0xff]
    %v1925 = vld [vmem:[%s3 + $0xe10] sm:$0xff]
    %v1926 = vld [vmem:[%s3 + $0xe18] sm:$0xff]
    %v1927 = vld [vmem:[%s3 + $0xe20] sm:$0xff]
    %v1928 = vld [vmem:[%s3 + $0xe28] sm:$0xff]
    %v1929 = vld [vmem:[%s3 + $0xe30] sm:$0xff]
    %v1930 = vld [vmem:[%s3 + $0xe38] sm:$0xff]
    %v1931 = vld [vmem:[%s3 + $0xe40] sm:$0xff]
    %v1932 = vld [vmem:[%s3 + $0xe48] sm:$0xff]
    %v1933 = vld [vmem:[%s3 + $0xe50] sm:$0xff]
    %v1934 = vld [vmem:[%s3 + $0xe58] sm:$0xff]
    %v1935 = vld [vmem:[%s3 + $0xe60] sm:$0xff]
    %v1936 = vld [vmem:[%s3 + $0xe68] sm:$0xff]
    %v1937 = vld [vmem:[%s3 + $0xe70] sm:$0xff]
    %v1938 = vld [vmem:[%s3 + $0xe78] sm:$0xff]
    %v1939 = vld [vmem:[%s3 + $0xe80] sm:$0xff]
    %v1940 = vld [vmem:[%s3 + $0xe88] sm:$0xff]
    %v1941 = vld [vmem:[%s3 + $0xe90] sm:$0xff]
    %v1942 = vld [vmem:[%s3 + $0xe98] sm:$0xff]
    %v1943 = vld [vmem:[%s3 + $0xea0] sm:$0xff]
    %v1944 = vld [vmem:[%s3 + $0xea8] sm:$0xff]
    %v1945 = vld [vmem:[%s3 + $0xeb0] sm:$0xff]
    %v1946 = vld [vmem:[%s3 + $0xeb8] sm:$0xff]
    %v1947 = vld [vmem:[%s3 + $0xec0] sm:$0xff]
    %v1948 = vld [vmem:[%s3 + $0xec8] sm:$0xff]
    %v1949 = vld [vmem:[%s3 + $0xed0] sm:$0xff]
    %v1950 = vld [vmem:[%s3 + $0xed8] sm:$0xff]
    %v1951 = vld [vmem:[%s3 + $0xee0] sm:$0xff]
    %v1952 = vld [vmem:[%s3 + $0xee8] sm:$0xff]
    %v1953 = vld [vmem:[%s3 + $0xef0] sm:$0xff]
    %v1954 = vld [vmem:[%s3 + $0xef8] sm:$0xff]
    %v1955 = vld [vmem:[%s3 + $0xf00] sm:$0xff]
    %v1956 = vld [vmem:[%s3 + $0xf08] sm:$0xff]
    %v1957 = vld [vmem:[%s3 + $0xf10] sm:$0xff]
    %v1958 = vld [vmem:[%s3 + $0xf18] sm:$0xff]
    %v1959 = vld [vmem:[%s3 + $0xf20] sm:$0xff]
    %v1960 = vld [vmem:[%s3 + $0xf28] sm:$0xff]
    %v1961 = vld [vmem:[%s3 + $0xf30] sm:$0xff]
    %v1962 = vld [vmem:[%s3 + $0xf38] sm:$0xff]
    %v1963 = vld [vmem:[%s3 + $0xf40] sm:$0xff]
    %v1964 = vld [vmem:[%s3 + $0xf48] sm:$0xff]
    %v1965 = vld [vmem:[%s3 + $0xf50] sm:$0xff]
    %v1966 = vld [vmem:[%s3 + $0xf58] sm:$0xff]
    %v1967 = vld [vmem:[%s3 + $0xf60] sm:$0xff]
    %v1968 = vld [vmem:[%s3 + $0xf68] sm:$0xff]
    %v1969 = vld [vmem:[%s3 + $0xf70] sm:$0xff]
    %v1970 = vld [vmem:[%s3 + $0xf78] sm:$0xff]
    %v1971 = vld [vmem:[%s3 + $0xf80] sm:$0xff]
    %v1972 = vld [vmem:[%s3 + $0xf88] sm:$0xff]
    %v1973 = vld [vmem:[%s3 + $0xf90] sm:$0xff]
    %v1974 = vld [vmem:[%s3 + $0xf98] sm:$0xff]
    %v1975 = vld [vmem:[%s3 + $0xfa0] sm:$0xff]
    %v1976 = vld [vmem:[%s3 + $0xfa8] sm:$0xff]
    %v1977 = vld [vmem:[%s3 + $0xfb0] sm:$0xff]
    %v1978 = vld [vmem:[%s3 + $0xfb8] sm:$0xff]
    %v1979 = vld [vmem:[%s3 + $0xfc0] sm:$0xff]
    %v1980 = vld [vmem:[%s3 + $0xfc8] sm:$0xff]
    %v1981 = vld [vmem:[%s3 + $0xfd0] sm:$0xff]
    %v1982 = vld [vmem:[%s3 + $0xfd8] sm:$0xff]
    %v1983 = vld [vmem:[%s3 + $0xfe0] sm:$0xff]
    %v1984 = vld [vmem:[%s3 + $0xfe8] sm:$0xff]
    %v1985 = vld [vmem:[%s3 + $0xff0] sm:$0xff]
    %v1986 = vld [vmem:[%s3 + $0xff8] sm:$0xff]
    %v1987 = vld [vmem:[%s3 + $0x1000] sm:$0xff]
    %v1988 = vld [vmem:[%s3 + $0x1008] sm:$0xff]
    %v1989 = vld [vmem:[%s3 + $0x1010] sm:$0xff]
    %v1990 = vld [vmem:[%s3 + $0x1018] sm:$0xff]
    %v1991 = vld [vmem:[%s3 + $0x1020] sm:$0xff]
    %v1992 = vld [vmem:[%s3 + $0x1028] sm:$0xff]
    %v1993 = vld [vmem:[%s3 + $0x1030] sm:$0xff]
    %v1994 = vld [vmem:[%s3 + $0x1038] sm:$0xff]
    %v1995 = vld [vmem:[%s3 + $0x1040] sm:$0xff]
    %v1996 = vld [vmem:[%s3 + $0x1048] sm:$0xff]
    %v1997 = vld [vmem:[%s3 + $0x1050] sm:$0xff]
    %v1998 = vld [vmem:[%s3 + $0x1058] sm:$0xff]
    %v1999 = vld [vmem:[%s3 + $0x1060] sm:$0xff]
    %v2000 = vld [vmem:[%s3 + $0x1068] sm:$0xff]
    %v2001 = vld [vmem:[%s3 + $0x1070] sm:$0xff]
    %v2002 = vld [vmem:[%s3 + $0x1078] sm:$0xff]
    %v2003 = vld [vmem:[%s3 + $0x1080] sm:$0xff]
    %v2004 = vld [vmem:[%s3 + $0x1088] sm:$0xff]
    %v2005 = vld [vmem:[%s3 + $0x1090] sm:$0xff]
    %v2006 = vld [vmem:[%s3 + $0x1098] sm:$0xff]
    %v2007 = vld [vmem:[%s3 + $0x10a0] sm:$0xff]
    %v2008 = vld [vmem:[%s3 + $0x10a8] sm:$0xff]
    %v2009 = vld [vmem:[%s3 + $0x10b0] sm:$0xff]
    %v2010 = vld [vmem:[%s3 + $0x10b8] sm:$0xff]
    %v2011 = vld [vmem:[%s3 + $0x10c0] sm:$0xff]
    %v2012 = vld [vmem:[%s3 + $0x10c8] sm:$0xff]
    %v2013 = vld [vmem:[%s3 + $0x10d0] sm:$0xff]
    %v2014 = vld [vmem:[%s3 + $0x10d8] sm:$0xff]
    %v2015 = vld [vmem:[%s3 + $0x10e0] sm:$0xff]
    %v2016 = vld [vmem:[%s3 + $0x10e8] sm:$0xff]
    %v2017 = vld [vmem:[%s3 + $0x10f0] sm:$0xff]
    %v2018 = vld [vmem:[%s3 + $0x10f8] sm:$0xff]
    %v2019 = vld [vmem:[%s3 + $0x1100] sm:$0xff]
    %v2020 = vld [vmem:[%s3 + $0x1108] sm:$0xff]
    %v2021 = vld [vmem:[%s3 + $0x1110] sm:$0xff]
    %v2022 = vld [vmem:[%s3 + $0x1118] sm:$0xff]
    %v2023 = vld [vmem:[%s3 + $0x1120] sm:$0xff]
    %v2024 = vld [vmem:[%s3 + $0x1128] sm:$0xff]
    %v2025 = vld [vmem:[%s3 + $0x1130] sm:$0xff]
    %v2026 = vld [vmem:[%s3 + $0x1138] sm:$0xff]
    %v2027 = vld [vmem:[%s3 + $0x1140] sm:$0xff]
    %v2028 = vld [vmem:[%s3 + $0x1148] sm:$0xff]
    %v2029 = vld [vmem:[%s3 + $0x1150] sm:$0xff]
    %v2030 = vld [vmem:[%s3 + $0x1158] sm:$0xff]
    %v2031 = vld [vmem:[%s3 + $0x1160] sm:$0xff]
    %v2032 = vld [vmem:[%s3 + $0x1168] sm:$0xff]
    %v2033 = vld [vmem:[%s3 + $0x1170] sm:$0xff]
    %v2034 = vld [vmem:[%s3 + $0x1178] sm:$0xff]
    %v2035 = vld [vmem:[%s3 + $0x1180] sm:$0xff]
    %v2036 = vld [vmem:[%s3 + $0x1188] sm:$0xff]
    %v2037 = vld [vmem:[%s3 + $0x1190] sm:$0xff]
    %v2038 = vld [vmem:[%s3 + $0x1198] sm:$0xff]
    %v2039 = vld [vmem:[%s3 + $0x11a0] sm:$0xff]
    %v2040 = vld [vmem:[%s3 + $0x11a8] sm:$0xff]
    %v2041 = vld [vmem:[%s3 + $0x11b0] sm:$0xff]
    %v2042 = vld [vmem:[%s3 + $0x11b8] sm:$0xff]
    %v2043 = vld [vmem:[%s3 + $0x11c0] sm:$0xff]
    %v2044 = vld [vmem:[%s3 + $0x11c8] sm:$0xff]
    %v2045 = vld [vmem:[%s3 + $0x11d0] sm:$0xff]
    %v2046 = vld [vmem:[%s3 + $0x11d8] sm:$0xff]
    %v2047 = vld [vmem:[%s3 + $0x11e0] sm:$0xff]
    %v2048 = vld [vmem:[%s3 + $0x11e8] sm:$0xff]
    %v2049 = vld [vmem:[%s3 + $0x11f0] sm:$0xff]
    %v2050 = vld [vmem:[%s3 + $0x11f8] sm:$0xff]
    %v2051 = vld [vmem:[%s3 + $0x1200] sm:$0xff]
    %v2052 = vld [vmem:[%s3 + $0x1208] sm:$0xff]
    %v2053 = vld [vmem:[%s3 + $0x1210] sm:$0xff]
    %v2054 = vld [vmem:[%s3 + $0x1218] sm:$0xff]
    %v2055 = vld [vmem:[%s3 + $0x1220] sm:$0xff]
    %v2056 = vld [vmem:[%s3 + $0x1228] sm:$0xff]
    %v2057 = vld [vmem:[%s3 + $0x1230] sm:$0xff]
    %v2058 = vld [vmem:[%s3 + $0x1238] sm:$0xff]
    %v2059 = vld [vmem:[%s3 + $0x1240] sm:$0xff]
    %v2060 = vld [vmem:[%s3 + $0x1248] sm:$0xff]
    %v2061 = vld [vmem:[%s3 + $0x1250] sm:$0xff]
    %v2062 = vld [vmem:[%s3 + $0x1258] sm:$0xff]
    %v2063 = vld [vmem:[%s3 + $0x1260] sm:$0xff]
    %v2064 = vld [vmem:[%s3 + $0x1268] sm:$0xff]
    %v2065 = vld [vmem:[%s3 + $0x1270] sm:$0xff]
    %v2066 = vld [vmem:[%s3 + $0x1278] sm:$0xff]
    %v2067 = vld [vmem:[%s3 + $0x1280] sm:$0xff]
    %v2068 = vld [vmem:[%s3 + $0x1288] sm:$0xff]
    %v2069 = vld [vmem:[%s3 + $0x1290] sm:$0xff]
    %v2070 = vld [vmem:[%s3 + $0x1298] sm:$0xff]
    %v2071 = vld [vmem:[%s3 + $0x12a0] sm:$0xff]
    %v2072 = vld [vmem:[%s3 + $0x12a8] sm:$0xff]
    %v2073 = vld [vmem:[%s3 + $0x12b0] sm:$0xff]
    %v2074 = vld [vmem:[%s3 + $0x12b8] sm:$0xff]
    %v2075 = vld [vmem:[%s3 + $0x12c0] sm:$0xff]
    %v2076 = vld [vmem:[%s3 + $0x12c8] sm:$0xff]
    %v2077 = vld [vmem:[%s3 + $0x12d0] sm:$0xff]
    %v2078 = vld [vmem:[%s3 + $0x12d8] sm:$0xff]
    %v2079 = vld [vmem:[%s3 + $0x12e0] sm:$0xff]
    %v2080 = vld [vmem:[%s3 + $0x12e8] sm:$0xff]
    %v2081 = vld [vmem:[%s3 + $0x12f0] sm:$0xff]
    %v2082 = vld [vmem:[%s3 + $0x12f8] sm:$0xff]
    %v2083 = vld [vmem:[%s3 + $0x1300] sm:$0xff]
    %v2084 = vld [vmem:[%s3 + $0x1308] sm:$0xff]
    %v2085 = vld [vmem:[%s3 + $0x1310] sm:$0xff]
    %v2086 = vld [vmem:[%s3 + $0x1318] sm:$0xff]
    %v2087 = vld [vmem:[%s3 + $0x1320] sm:$0xff]
    %v2088 = vld [vmem:[%s3 + $0x1328] sm:$0xff]
    %v2089 = vld [vmem:[%s3 + $0x1330] sm:$0xff]
    %v2090 = vld [vmem:[%s3 + $0x1338] sm:$0xff]
    %v2091 = vld [vmem:[%s3 + $0x1340] sm:$0xff]
    %v2092 = vld [vmem:[%s3 + $0x1348] sm:$0xff]
    %v2093 = vld [vmem:[%s3 + $0x1350] sm:$0xff]
    %v2094 = vld [vmem:[%s3 + $0x1358] sm:$0xff]
    %v2095 = vld [vmem:[%s3 + $0x1360] sm:$0xff]
    %v2096 = vld [vmem:[%s3 + $0x1368] sm:$0xff]
    %v2097 = vld [vmem:[%s3 + $0x1370] sm:$0xff]
    %v2098 = vld [vmem:[%s3 + $0x1378] sm:$0xff]
    %v2099 = vld [vmem:[%s3 + $0x1380] sm:$0xff]
    %v2100 = vld [vmem:[%s3 + $0x1388] sm:$0xff]
    %v2101 = vld [vmem:[%s3 + $0x1390] sm:$0xff]
    %v2102 = vld [vmem:[%s3 + $0x1398] sm:$0xff]
    %v2103 = vld [vmem:[%s3 + $0x13a0] sm:$0xff]
    %v2104 = vld [vmem:[%s3 + $0x13a8] sm:$0xff]
    %v2105 = vld [vmem:[%s3 + $0x13b0] sm:$0xff]
    %v2106 = vld [vmem:[%s3 + $0x13b8] sm:$0xff]
    %v2107 = vld [vmem:[%s3 + $0x13c0] sm:$0xff]
    %v2108 = vld [vmem:[%s3 + $0x13c8] sm:$0xff]
    %v2109 = vld [vmem:[%s3 + $0x13d0] sm:$0xff]
    %v2110 = vld [vmem:[%s3 + $0x13d8] sm:$0xff]
    %v2111 = vld [vmem:[%s3 + $0x13e0] sm:$0xff]
    %v2112 = vld [vmem:[%s3 + $0x13e8] sm:$0xff]
    %v2113 = vld [vmem:[%s3 + $0x13f0] sm:$0xff]
    %v2114 = vld [vmem:[%s3 + $0x13f8] sm:$0xff]
    %v2115 = vld [vmem:[%s3 + $0x1400] sm:$0xff]
    %v2116 = vld [vmem:[%s3 + $0x1408] sm:$0xff]
    %v2117 = vld [vmem:[%s3 + $0x1410] sm:$0xff]
    %v2118 = vld [vmem:[%s3 + $0x1418] sm:$0xff]
    %v2119 = vld [vmem:[%s3 + $0x1420] sm:$0xff]
    %v2120 = vld [vmem:[%s3 + $0x1428] sm:$0xff]
    %v2121 = vld [vmem:[%s3 + $0x1430] sm:$0xff]
    %v2122 = vld [vmem:[%s3 + $0x1438] sm:$0xff]
    %v2123 = vld [vmem:[%s3 + $0x1440] sm:$0xff]
    %v2124 = vld [vmem:[%s3 + $0x1448] sm:$0xff]
    %v2125 = vld [vmem:[%s3 + $0x1450] sm:$0xff]
    %v2126 = vld [vmem:[%s3 + $0x1458] sm:$0xff]
    %v2127 = vld [vmem:[%s3 + $0x1460] sm:$0xff]
    %v2128 = vld [vmem:[%s3 + $0x1468] sm:$0xff]
    %v2129 = vld [vmem:[%s3 + $0x1470] sm:$0xff]
    %v2130 = vld [vmem:[%s3 + $0x1478] sm:$0xff]
    %v2131 = vld [vmem:[%s3 + $0x1480] sm:$0xff]
    %v2132 = vld [vmem:[%s3 + $0x1488] sm:$0xff]
    %v2133 = vld [vmem:[%s3 + $0x1490] sm:$0xff]
    %v2134 = vld [vmem:[%s3 + $0x1498] sm:$0xff]
    %v2135 = vld [vmem:[%s3 + $0x14a0] sm:$0xff]
    %v2136 = vld [vmem:[%s3 + $0x14a8] sm:$0xff]
    %v2137 = vld [vmem:[%s3 + $0x14b0] sm:$0xff]
    %v2138 = vld [vmem:[%s3 + $0x14b8] sm:$0xff]
    %v2139 = vld [vmem:[%s3 + $0x14c0] sm:$0xff]
    %v2140 = vld [vmem:[%s3 + $0x14c8] sm:$0xff]
    %v2141 = vld [vmem:[%s3 + $0x14d0] sm:$0xff]
    %v2142 = vld [vmem:[%s3 + $0x14d8] sm:$0xff]
    %v2143 = vld [vmem:[%s3 + $0x14e0] sm:$0xff]
    %v2144 = vld [vmem:[%s3 + $0x14e8] sm:$0xff]
    %v2145 = vld [vmem:[%s3 + $0x14f0] sm:$0xff]
    %v2146 = vld [vmem:[%s3 + $0x14f8] sm:$0xff]
    %v2147 = vld [vmem:[%s3 + $0x1500] sm:$0xff]
    %v2148 = vld [vmem:[%s3 + $0x1508] sm:$0xff]
    %v2149 = vld [vmem:[%s3 + $0x1510] sm:$0xff]
    %v2150 = vld [vmem:[%s3 + $0x1518] sm:$0xff]
    %v2151 = vld [vmem:[%s3 + $0x1520] sm:$0xff]
    %v2152 = vld [vmem:[%s3 + $0x1528] sm:$0xff]
    %v2153 = vld [vmem:[%s3 + $0x1530] sm:$0xff]
    %v2154 = vld [vmem:[%s3 + $0x1538] sm:$0xff]
    %v2155 = vld [vmem:[%s3 + $0x1540] sm:$0xff]
    %v2156 = vld [vmem:[%s3 + $0x1548] sm:$0xff]
    %v2157 = vld [vmem:[%s3 + $0x1550] sm:$0xff]
    %v2158 = vld [vmem:[%s3 + $0x1558] sm:$0xff]
    %v2159 = vld [vmem:[%s3 + $0x1560] sm:$0xff]
    %v2160 = vld [vmem:[%s3 + $0x1568] sm:$0xff]
    %v2161 = vld [vmem:[%s3 + $0x1570] sm:$0xff]
    %v2162 = vld [vmem:[%s3 + $0x1578] sm:$0xff]
    %v2163 = vld [vmem:[%s3 + $0x1580] sm:$0xff]
    %v2164 = vld [vmem:[%s3 + $0x1588] sm:$0xff]
    %v2165 = vld [vmem:[%s3 + $0x1590] sm:$0xff]
    %v2166 = vld [vmem:[%s3 + $0x1598] sm:$0xff]
    %v2167 = vld [vmem:[%s3 + $0x15a0] sm:$0xff]
    %v2168 = vld [vmem:[%s3 + $0x15a8] sm:$0xff]
    %v2169 = vld [vmem:[%s3 + $0x15b0] sm:$0xff]
    %v2170 = vld [vmem:[%s3 + $0x15b8] sm:$0xff]
    %v2171 = vld [vmem:[%s3 + $0x15c0] sm:$0xff]
    %v2172 = vld [vmem:[%s3 + $0x15c8] sm:$0xff]
    %v2173 = vld [vmem:[%s3 + $0x15d0] sm:$0xff]
    %v2174 = vld [vmem:[%s3 + $0x15d8] sm:$0xff]
    %v2175 = vld [vmem:[%s3 + $0x15e0] sm:$0xff]
    %v2176 = vld [vmem:[%s3 + $0x15e8] sm:$0xff]
    %v2177 = vld [vmem:[%s3 + $0x15f0] sm:$0xff]
    %v2178 = vld [vmem:[%s3 + $0x15f8] sm:$0xff]
    %v2179 = vld [vmem:[%s3 + $0x1600] sm:$0xff]
    %v2180 = vld [vmem:[%s3 + $0x1608] sm:$0xff]
    %v2181 = vld [vmem:[%s3 + $0x1610] sm:$0xff]
    %v2182 = vld [vmem:[%s3 + $0x1618] sm:$0xff]
    %v2183 = vld [vmem:[%s3 + $0x1620] sm:$0xff]
    %v2184 = vld [vmem:[%s3 + $0x1628] sm:$0xff]
    %v2185 = vld [vmem:[%s3 + $0x1630] sm:$0xff]
    %v2186 = vld [vmem:[%s3 + $0x1638] sm:$0xff]
    %v2187 = vld [vmem:[%s3 + $0x1640] sm:$0xff]
    %v2188 = vld [vmem:[%s3 + $0x1648] sm:$0xff]
    %v2189 = vld [vmem:[%s3 + $0x1650] sm:$0xff]
    %v2190 = vld [vmem:[%s3 + $0x1658] sm:$0xff]
    %v2191 = vld [vmem:[%s3 + $0x1660] sm:$0xff]
    %v2192 = vld [vmem:[%s3 + $0x1668] sm:$0xff]
    %v2193 = vld [vmem:[%s3 + $0x1670] sm:$0xff]
    %v2194 = vld [vmem:[%s3 + $0x1678] sm:$0xff]
    %v2195 = vld [vmem:[%s4] sm:$0xf]
    %v2197 = vlaneseq
    %v2198 = vshrl.u32 %v2197, 7
    %v2199 = vsub.s32 0, %v2198
    %v2200 = vrot.slane %v2195, %v2199
    %v2201 = vlaneseq
    %v2202 = vshrl.u32 %v2201, 7
    %v2203 = vsub.s32 1, %v2202
    %v2204 = vrot.slane %v2195, %v2203
    %v2205 = vlaneseq
    %v2206 = vshrl.u32 %v2205, 7
    %v2207 = vsub.s32 2, %v2206
    %v2208 = vrot.slane %v2195, %v2207
    %v2209 = vlaneseq
    %v2210 = vshrl.u32 %v2209, 7
    %v2211 = vsub.s32 3, %v2210
    %v2212 = vrot.slane %v2195, %v2211
    %v2217 = vsel %vm29, %v1199, 0
    %v2220 = vsel %vm29, %v1474, 0
    %v2222 = vsel %vm29, %v1428, 0
    %v2224 = vsel %vm29, %v1427, 0
    %2226 = vmatprep.subr.mxu0 %v1476
    %2227 = vmatpush1.msra.mxu0 %v1475
    %2228 = vmatprep.subr.mxu0 %v1480
    %2229 = vmatpush1.msra.mxu0 %v1479
    %2230 = vmatprep.subr.mxu0 %v1484
    %2231 = vmatpush1.msra.mxu0 %v1483
    %2232 = vmatprep.subr.mxu0 %v1488
    %2233 = vmatpush1.msra.mxu0 %v1487
    %2234 = vmatprep.subr.mxu0 %v1492
    %2235 = vmatpush1.msra.mxu0 %v1491
    %2236 = vmatprep.subr.mxu0 %v1496
    %2237 = vmatpush1.msra.mxu0 %v1495
    %2238 = vmatprep.subr.mxu0 %v1500
    %2239 = vmatpush1.msra.mxu0 %v1499
    %2240 = vmatprep.subr.mxu0 %v1504
    %2241 = vmatpush1.msra.mxu0 %v1503
    %2242 = vmatprep.subr.mxu0 %v1508
    %2243 = vmatpush1.msra.mxu0 %v1507
    %2244 = vmatprep.subr.mxu0 %v1512
    %2245 = vmatpush1.msra.mxu0 %v1511
    %2246 = vmatprep.subr.mxu0 %v1516
    %2247 = vmatpush1.msra.mxu0 %v1515
    %2248 = vmatprep.subr.mxu0 %v1520
    %2249 = vmatpush1.msra.mxu0 %v1519
    %2250 = vmatprep.subr.mxu0 %v1524
    %2251 = vmatpush1.msra.mxu0 %v1523
    %2252 = vmatprep.subr.mxu0 %v1528
    %2253 = vmatpush1.msra.mxu0 %v1527
    %2254 = vmatprep.subr.mxu0 %v1532
    %2255 = vmatpush1.msra.mxu0 %v1531
    %2256 = vmatprep.subr.mxu0 %v1536
    %2257 = vmatpush1.msra.mxu0 %v1535
    %2258 = vmatprep.subr.mxu0 %v1540
    %2259 = vmatpush1.msra.mxu0 %v1539
    %2260 = vmatprep.subr.mxu0 %v1544
    %2261 = vmatpush1.msra.mxu0 %v1543
    %2262 = vmatprep.subr.mxu0 %v1548
    %2263 = vmatpush1.msra.mxu0 %v1547
    %2264 = vmatprep.subr.mxu0 %v1552
    %2265 = vmatpush1.msra.mxu0 %v1551
    %2266 = vmatprep.subr.mxu0 %v1556
    %2267 = vmatpush1.msra.mxu0 %v1555
    %2268 = vmatprep.subr.mxu0 %v1560
    %2269 = vmatpush1.msra.mxu0 %v1559
    %2270 = vmatprep.subr.mxu0 %v1564
    %2271 = vmatpush1.msra.mxu0 %v1563
    %2272 = vmatprep.subr.mxu0 %v1568
    %2273 = vmatpush1.msra.mxu0 %v1567
    %2274 = vmatprep.subr.mxu0 %v1572
    %2275 = vmatpush1.msra.mxu0 %v1571
    %2276 = vmatprep.subr.mxu0 %v1576
    %2277 = vmatpush1.msra.mxu0 %v1575
    %2278 = vmatprep.subr.mxu0 %v1580
    %2279 = vmatpush1.msra.mxu0 %v1579
    %2280 = vmatprep.subr.mxu0 %v1584
    %2281 = vmatpush1.msra.mxu0 %v1583
    %2282 = vmatprep.subr.mxu0 %v1588
    %2283 = vmatpush1.msra.mxu0 %v1587
    %2284 = vmatprep.subr.mxu0 %v1592
    %2285 = vmatpush1.msra.mxu0 %v1591
    %2286 = vmatprep.subr.mxu0 %v1596
    %2287 = vmatpush1.msra.mxu0 %v1595
    %2288 = vmatprep.subr.mxu0 %v1600
    %2289 = vmatpush1.msra.mxu0 %v1599
    %2290 = vmatprep.mubr.f32.mxu0 %v1039
    %2291 = vmatmul.mubr.f32.gmra.mrb[0].mxu0 %v1038
    %v2292 = vpop.f32.mrb[0].mxu0
    %v2293 = vadd.f32 %v2200, %v2292
    %v2294 = vpop.f32.mrb[0].mxu0
    %v2295 = vadd.f32 %v2204, %v2294
    %2296 = vmatprep.mubr.f32.mxu0 %v1464
    %2297 = vmatmul.mubr.f32.gmra.mrb[0].mxu0 %v1463
    %v2298 = vpop.f32.mrb[0].mxu0
    %v2299 = vadd.f32 %v2200, %v2298
    %v2300 = vpop.f32.mrb[0].mxu0
    %v2301 = vadd.f32 %v2204, %v2300
    %2302 = vmatprep.mubr.f32.mxu0 %v1408
    %2303 = vmatmul.mubr.f32.gmra.mrb[0].mxu0 %v1406
    %v2304 = vpop.f32.mrb[0].mxu0
    %v2305 = vadd.f32 %v2200, %v2304
    %v2306 = vpop.f32.mrb[0].mxu0
    %v2307 = vadd.f32 %v2204, %v2306
    %2308 = vmatprep.mubr.f32.mxu0 %v1407
    %2309 = vmatmul.mubr.f32.gmra.mrb[0].mxu0 %v1405
    %v2310 = vpop.f32.mrb[0].mxu0
    %v2311 = vadd.f32 %v2200, %v2310
    %v2312 = vpop.f32.mrb[0].mxu0
    %v2313 = vadd.f32 %v2204, %v2312
    %2314 = vdwg.mxu0
    %2315 = vmatprep.subr.mxu0 %v1604
    %2316 = vmatpush1.msra.mxu0 %v1603
    %2317 = vmatprep.subr.mxu0 %v1608
    %2318 = vmatpush1.msra.mxu0 %v1607
    %2319 = vmatprep.subr.mxu0 %v1612
    %2320 = vmatpush1.msra.mxu0 %v1611
    %2321 = vmatprep.subr.mxu0 %v1616
    %2322 = vmatpush1.msra.mxu0 %v1615
    %2323 = vmatprep.subr.mxu0 %v1620
    %2324 = vmatpush1.msra.mxu0 %v1619
    %2325 = vmatprep.subr.mxu0 %v1624
    %2326 = vmatpush1.msra.mxu0 %v1623
    %2327 = vmatprep.subr.mxu0 %v1628
    %2328 = vmatpush1.msra.mxu0 %v1627
    %2329 = vmatprep.subr.mxu0 %v1632
    %2330 = vmatpush1.msra.mxu0 %v1631
    %2331 = vmatprep.subr.mxu0 %v1636
    %2332 = vmatpush1.msra.mxu0 %v1635
    %2333 = vmatprep.subr.mxu0 %v1640
    %2334 = vmatpush1.msra.mxu0 %v1639
    %2335 = vmatprep.subr.mxu0 %v1644
    %2336 = vmatpush1.msra.mxu0 %v1643
    %2337 = vmatprep.subr.mxu0 %v1648
    %2338 = vmatpush1.msra.mxu0 %v1647
    %2339 = vmatprep.subr.mxu0 %v1652
    %2340 = vmatpush1.msra.mxu0 %v1651
    %2341 = vmatprep.subr.mxu0 %v1656
    %2342 = vmatpush1.msra.mxu0 %v1655
    %2343 = vmatprep.subr.mxu0 %v1660
    %2344 = vmatpush1.msra.mxu0 %v1659
    %2345 = vmatprep.subr.mxu0 %v1664
    %2346 = vmatpush1.msra.mxu0 %v1663
    %2347 = vmatprep.subr.mxu0 %v1668
    %2348 = vmatpush1.msra.mxu0 %v1667
    %2349 = vmatprep.subr.mxu0 %v1672
    %2350 = vmatpush1.msra.mxu0 %v1671
    %2351 = vmatprep.subr.mxu0 %v1676
    %2352 = vmatpush1.msra.mxu0 %v1675
    %2353 = vmatprep.subr.mxu0 %v1680
    %2354 = vmatpush1.msra.mxu0 %v1679
    %2355 = vmatprep.subr.mxu0 %v1684
    %2356 = vmatpush1.msra.mxu0 %v1683
    %2357 = vmatprep.subr.mxu0 %v1688
    %2358 = vmatpush1.msra.mxu0 %v1687
    %2359 = vmatprep.subr.mxu0 %v1692
    %2360 = vmatpush1.msra.mxu0 %v1691
    %2361 = vmatprep.subr.mxu0 %v1696
    %2362 = vmatpush1.msra.mxu0 %v1695
    %2363 = vmatprep.subr.mxu0 %v1700
    %2364 = vmatpush1.msra.mxu0 %v1699
    %2365 = vmatprep.subr.mxu0 %v1704
    %2366 = vmatpush1.msra.mxu0 %v1703
    %2367 = vmatprep.subr.mxu0 %v1708
    %2368 = vmatpush1.msra.mxu0 %v1707
    %2369 = vmatprep.subr.mxu0 %v1712
    %2370 = vmatpush1.msra.mxu0 %v1711
    %2371 = vmatprep.subr.mxu0 %v1716
    %2372 = vmatpush1.msra.mxu0 %v1715
    %2373 = vmatprep.subr.mxu0 %v1720
    %2374 = vmatpush1.msra.mxu0 %v1719
    %2375 = vmatprep.subr.mxu0 %v1724
    %2376 = vmatpush1.msra.mxu0 %v1723
    %2377 = vmatprep.subr.mxu0 %v1728
    %2378 = vmatpush1.msra.mxu0 %v1727
    %2379 = vmatprep.mubr.f32.mxu0 %v1095
    %2380 = vmatmul.mubr.f32.gmra.mrb[0].mxu0 %v1211
    %v2381 = vpop.f32.mrb[0].mxu0
    %v2382 = vadd.f32 %v2293, %v2381
    %v2383 = vpop.f32.mrb[0].mxu0
    %v2384 = vadd.f32 %v2295, %v2383
    %2385 = vmatprep.mubr.f32.mxu0 %v1466
    %2386 = vmatmul.mubr.f32.gmra.mrb[0].mxu0 %v1465
    %v2387 = vpop.f32.mrb[0].mxu0
    %v2388 = vadd.f32 %v2299, %v2387
    %v2389 = vpop.f32.mrb[0].mxu0
    %v2390 = vadd.f32 %v2301, %v2389
    %2391 = vmatprep.mubr.f32.mxu0 %v1412
    %2392 = vmatmul.mubr.f32.gmra.mrb[0].mxu0 %v1410
    %v2393 = vpop.f32.mrb[0].mxu0
    %v2394 = vadd.f32 %v2305, %v2393
    %v2395 = vpop.f32.mrb[0].mxu0
    %v2396 = vadd.f32 %v2307, %v2395
    %2397 = vmatprep.mubr.f32.mxu0 %v1411
    %2398 = vmatmul.mubr.f32.gmra.mrb[0].mxu0 %v1409
    %v2399 = vpop.f32.mrb[0].mxu0
    %v2400 = vadd.f32 %v2311, %v2399
    %v2401 = vpop.f32.mrb[0].mxu0
    %v2402 = vadd.f32 %v2313, %v2401
    %2403 = vdwg.mxu0
    %2404 = vmatprep.subr.mxu0 %v1732
    %2405 = vmatpush1.msra.mxu0 %v1731
    %2406 = vmatprep.subr.mxu0 %v1736
    %2407 = vmatpush1.msra.mxu0 %v1735
    %2408 = vmatprep.subr.mxu0 %v1740
    %2409 = vmatpush1.msra.mxu0 %v1739
    %2410 = vmatprep.subr.mxu0 %v1744
    %2411 = vmatpush1.msra.mxu0 %v1743
    %2412 = vmatprep.subr.mxu0 %v1748
    %2413 = vmatpush1.msra.mxu0 %v1747
    %2414 = vmatprep.subr.mxu0 %v1752
    %2415 = vmatpush1.msra.mxu0 %v1751
    %2416 = vmatprep.subr.mxu0 %v1756
    %2417 = vmatpush1.msra.mxu0 %v1755
    %2418 = vmatprep.subr.mxu0 %v1760
    %2419 = vmatpush1.msra.mxu0 %v1759
    %2420 = vmatprep.subr.mxu0 %v1764
    %2421 = vmatpush1.msra.mxu0 %v1763
    %2422 = vmatprep.subr.mxu0 %v1768
    %2423 = vmatpush1.msra.mxu0 %v1767
    %2424 = vmatprep.subr.mxu0 %v1772
    %2425 = vmatpush1.msra.mxu0 %v1771
    %2426 = vmatprep.subr.mxu0 %v1776
    %2427 = vmatpush1.msra.mxu0 %v1775
    %2428 = vmatprep.subr.mxu0 %v1780
    %2429 = vmatpush1.msra.mxu0 %v1779
    %2430 = vmatprep.subr.mxu0 %v1784
    %2431 = vmatpush1.msra.mxu0 %v1783
    %2432 = vmatprep.subr.mxu0 %v1788
    %2433 = vmatpush1.msra.mxu0 %v1787
    %2434 = vmatprep.subr.mxu0 %v1792
    %2435 = vmatpush1.msra.mxu0 %v1791
    %2436 = vmatprep.subr.mxu0 %v1796
    %2437 = vmatpush1.msra.mxu0 %v1795
    %2438 = vmatprep.subr.mxu0 %v1800
    %2439 = vmatpush1.msra.mxu0 %v1799
    %2440 = vmatprep.subr.mxu0 %v1804
    %2441 = vmatpush1.msra.mxu0 %v1803
    %2442 = vmatprep.subr.mxu0 %v1808
    %2443 = vmatpush1.msra.mxu0 %v1807
    %2444 = vmatprep.subr.mxu0 %v1812
    %2445 = vmatpush1.msra.mxu0 %v1811
    %2446 = vmatprep.subr.mxu0 %v1816
    %2447 = vmatpush1.msra.mxu0 %v1815
    %2448 = vmatprep.subr.mxu0 %v1820
    %2449 = vmatpush1.msra.mxu0 %v1819
    %2450 = vmatprep.subr.mxu0 %v1824
    %2451 = vmatpush1.msra.mxu0 %v1823
    %2452 = vmatprep.subr.mxu0 %v1828
    %2453 = vmatpush1.msra.mxu0 %v1827
    %2454 = vmatprep.subr.mxu0 %v1832
    %2455 = vmatpush1.msra.mxu0 %v1831
    %2456 = vmatprep.subr.mxu0 %v1836
    %2457 = vmatpush1.msra.mxu0 %v1835
    %2458 = vmatprep.subr.mxu0 %v1840
    %2459 = vmatpush1.msra.mxu0 %v1839
    %2460 = vmatprep.subr.mxu0 %v1844
    %2461 = vmatpush1.msra.mxu0 %v1843
    %2462 = vmatprep.subr.mxu0 %v1848
    %2463 = vmatpush1.msra.mxu0 %v1847
    %2464 = vmatprep.subr.mxu0 %v1852
    %2465 = vmatpush1.msra.mxu0 %v1851
    %2466 = vmatprep.subr.mxu0 %v1856
    %2467 = vmatpush1.msra.mxu0 %v1855
    %2468 = vmatprep.mubr.f32.mxu0 %v1132
    %2469 = vmatmul.mubr.f32.gmra.mrb[0].mxu0 %v1213
    %v2470 = vpop.f32.mrb[0].mxu0
    %v2471 = vadd.f32 %v2382, %v2470
    %v2472 = vpop.f32.mrb[0].mxu0
    %v2473 = vadd.f32 %v2384, %v2472
    %2474 = vmatprep.mubr.f32.mxu0 %v1468
    %2475 = vmatmul.mubr.f32.gmra.mrb[0].mxu0 %v1467
    %v2476 = vpop.f32.mrb[0].mxu0
    %v2477 = vadd.f32 %v2388, %v2476
    %v2478 = vpop.f32.mrb[0].mxu0
    %v2479 = vadd.f32 %v2390, %v2478
    %2480 = vmatprep.mubr.f32.mxu0 %v1416
    %2481 = vmatmul.mubr.f32.gmra.mrb[0].mxu0 %v1414
    %v2482 = vpop.f32.mrb[0].mxu0
    %v2483 = vadd.f32 %v2394, %v2482
    %v2484 = vpop.f32.mrb[0].mxu0
    %v2485 = vadd.f32 %v2396, %v2484
    %2486 = vmatprep.mubr.f32.mxu0 %v1415
    %2487 = vmatmul.mubr.f32.gmra.mrb[0].mxu0 %v1413
    %v2488 = vpop.f32.mrb[0].mxu0
    %v2489 = vadd.f32 %v2400, %v2488
    %v2490 = vpop.f32.mrb[0].mxu0
    %v2491 = vadd.f32 %v2402, %v2490
    %2492 = vdwg.mxu0
    %2493 = vmatprep.subr.mxu0 %v1860
    %2494 = vmatpush1.msra.mxu0 %v1859
    %2495 = vmatprep.subr.mxu0 %v1864
    %2496 = vmatpush1.msra.mxu0 %v1863
    %2497 = vmatprep.subr.mxu0 %v1868
    %2498 = vmatpush1.msra.mxu0 %v1867
    %2499 = vmatprep.subr.mxu0 %v1872
    %2500 = vmatpush1.msra.mxu0 %v1871
    %2501 = vmatprep.subr.mxu0 %v1876
    %2502 = vmatpush1.msra.mxu0 %v1875
    %2503 = vmatprep.subr.mxu0 %v1880
    %2504 = vmatpush1.msra.mxu0 %v1879
    %2505 = vmatprep.subr.mxu0 %v1884
    %2506 = vmatpush1.msra.mxu0 %v1883
    %2507 = vmatprep.subr.mxu0 %v1888
    %2508 = vmatpush1.msra.mxu0 %v1887
    %2509 = vmatprep.subr.mxu0 %v1892
    %2510 = vmatpush1.msra.mxu0 %v1891
    %2511 = vmatprep.subr.mxu0 %v1896
    %2512 = vmatpush1.msra.mxu0 %v1895
    %2513 = vmatprep.subr.mxu0 %v1900
    %2514 = vmatpush1.msra.mxu0 %v1899
    %2515 = vmatprep.subr.mxu0 %v1904
    %2516 = vmatpush1.msra.mxu0 %v1903
    %2517 = vmatprep.subr.mxu0 %v1908
    %2518 = vmatpush1.msra.mxu0 %v1907
    %2519 = vmatprep.subr.mxu0 %v1912
    %2520 = vmatpush1.msra.mxu0 %v1911
    %2521 = vmatprep.subr.mxu0 %v1916
    %2522 = vmatpush1.msra.mxu0 %v1915
    %2523 = vmatprep.subr.mxu0 %v1920
    %2524 = vmatpush1.msra.mxu0 %v1919
    %2525 = vmatprep.subr.mxu0 %v1924
    %2526 = vmatpush1.msra.mxu0 %v1923
    %2527 = vmatprep.subr.mxu0 %v1928
    %2528 = vmatpush1.msra.mxu0 %v1927
    %2529 = vmatprep.subr.mxu0 %v1932
    %2530 = vmatpush1.msra.mxu0 %v1931
    %2531 = vmatprep.subr.mxu0 %v1936
    %2532 = vmatpush1.msra.mxu0 %v1935
    %2533 = vmatprep.subr.mxu0 %v1940
    %2534 = vmatpush1.msra.mxu0 %v1939
    %2535 = vmatprep.subr.mxu0 %v1944
    %2536 = vmatpush1.msra.mxu0 %v1943
    %2537 = vmatprep.subr.mxu0 %v1948
    %2538 = vmatpush1.msra.mxu0 %v1947
    %2539 = vmatprep.subr.mxu0 %v1952
    %2540 = vmatpush1.msra.mxu0 %v1951
    %2541 = vmatprep.subr.mxu0 %v1956
    %2542 = vmatpush1.msra.mxu0 %v1955
    %2543 = vmatprep.subr.mxu0 %v1960
    %2544 = vmatpush1.msra.mxu0 %v1959
    %2545 = vmatprep.subr.mxu0 %v1964
    %2546 = vmatpush1.msra.mxu0 %v1963
    %2547 = vmatprep.subr.mxu0 %v1968
    %2548 = vmatpush1.msra.mxu0 %v1967
    %2549 = vmatprep.subr.mxu0 %v1972
    %2550 = vmatpush1.msra.mxu0 %v1971
    %2551 = vmatprep.subr.mxu0 %v1976
    %2552 = vmatpush1.msra.mxu0 %v1975
    %2553 = vmatprep.subr.mxu0 %v1980
    %2554 = vmatpush1.msra.mxu0 %v1979
    %2555 = vmatprep.subr.mxu0 %v1984
    %2556 = vmatpush1.msra.mxu0 %v1983
    %2557 = vmatprep.mubr.f32.mxu0 %v1175
    %2558 = vmatmul.mubr.f32.gmra.mrb[0].mxu0 %v1215
    %v2559 = vpop.f32.mrb[0].mxu0
    %v2560 = vadd.f32 %v2471, %v2559
    %v2561 = vpop.f32.mrb[0].mxu0
    %v2562 = vadd.f32 %v2473, %v2561
    %2563 = vmatprep.mubr.f32.mxu0 %v1470
    %2564 = vmatmul.mubr.f32.gmra.mrb[0].mxu0 %v1469
    %v2565 = vpop.f32.mrb[0].mxu0
    %v2566 = vadd.f32 %v2477, %v2565
    %v2567 = vpop.f32.mrb[0].mxu0
    %v2568 = vadd.f32 %v2479, %v2567
    %2569 = vmatprep.mubr.f32.mxu0 %v1420
    %2570 = vmatmul.mubr.f32.gmra.mrb[0].mxu0 %v1418
    %v2571 = vpop.f32.mrb[0].mxu0
    %v2572 = vadd.f32 %v2483, %v2571
    %v2573 = vpop.f32.mrb[0].mxu0
    %v2574 = vadd.f32 %v2485, %v2573
    %2575 = vmatprep.mubr.f32.mxu0 %v1419
    %2576 = vmatmul.mubr.f32.gmra.mrb[0].mxu0 %v1417
    %v2577 = vpop.f32.mrb[0].mxu0
    %v2578 = vadd.f32 %v2489, %v2577
    %v2579 = vpop.f32.mrb[0].mxu0
    %v2580 = vadd.f32 %v2491, %v2579
    %2581 = vdwg.mxu0
    %2582 = vmatprep.subr.mxu0 %v1988
    %2583 = vmatpush1.msra.mxu0 %v1987
    %2584 = vmatprep.subr.mxu0 %v1992
    %2585 = vmatpush1.msra.mxu0 %v1991
    %2586 = vmatprep.subr.mxu0 %v1996
    %2587 = vmatpush1.msra.mxu0 %v1995
    %2588 = vmatprep.subr.mxu0 %v2000
    %2589 = vmatpush1.msra.mxu0 %v1999
    %2590 = vmatprep.subr.mxu0 %v2004
    %2591 = vmatpush1.msra.mxu0 %v2003
    %2592 = vmatprep.subr.mxu0 %v2008
    %2593 = vmatpush1.msra.mxu0 %v2007
    %2594 = vmatprep.subr.mxu0 %v2012
    %2595 = vmatpush1.msra.mxu0 %v2011
    %2596 = vmatprep.subr.mxu0 %v2016
    %2597 = vmatpush1.msra.mxu0 %v2015
    %2598 = vmatprep.subr.mxu0 %v2020
    %2599 = vmatpush1.msra.mxu0 %v2019
    %2600 = vmatprep.subr.mxu0 %v2024
    %2601 = vmatpush1.msra.mxu0 %v2023
    %2602 = vmatprep.subr.mxu0 %v2028
    %2603 = vmatpush1.msra.mxu0 %v2027
    %2604 = vmatprep.subr.mxu0 %v2032
    %2605 = vmatpush1.msra.mxu0 %v2031
    %2606 = vmatprep.subr.mxu0 %v2036
    %2607 = vmatpush1.msra.mxu0 %v2035
    %2608 = vmatprep.subr.mxu0 %v2040
    %2609 = vmatpush1.msra.mxu0 %v2039
    %2610 = vmatprep.subr.mxu0 %v2044
    %2611 = vmatpush1.msra.mxu0 %v2043
    %2612 = vmatprep.subr.mxu0 %v2048
    %2613 = vmatpush1.msra.mxu0 %v2047
    %2614 = vmatprep.subr.mxu0 %v2052
    %2615 = vmatpush1.msra.mxu0 %v2051
    %2616 = vmatprep.subr.mxu0 %v2056
    %2617 = vmatpush1.msra.mxu0 %v2055
    %2618 = vmatprep.subr.mxu0 %v2060
    %2619 = vmatpush1.msra.mxu0 %v2059
    %2620 = vmatprep.subr.mxu0 %v2064
    %2621 = vmatpush1.msra.mxu0 %v2063
    %2622 = vmatprep.subr.mxu0 %v2068
    %2623 = vmatpush1.msra.mxu0 %v2067
    %2624 = vmatprep.subr.mxu0 %v2072
    %2625 = vmatpush1.msra.mxu0 %v2071
    %2626 = vmatprep.subr.mxu0 %v2076
    %2627 = vmatpush1.msra.mxu0 %v2075
    %2628 = vmatprep.subr.mxu0 %v2080
    %2629 = vmatpush1.msra.mxu0 %v2079
    %2630 = vmatprep.subr.mxu0 %v2084
    %2631 = vmatpush1.msra.mxu0 %v2083
    %2632 = vmatprep.subr.mxu0 %v2088
    %2633 = vmatpush1.msra.mxu0 %v2087
    %2634 = vmatprep.subr.mxu0 %v2092
    %2635 = vmatpush1.msra.mxu0 %v2091
    %2636 = vmatprep.subr.mxu0 %v2096
    %2637 = vmatpush1.msra.mxu0 %v2095
    %2638 = vmatprep.subr.mxu0 %v2100
    %2639 = vmatpush1.msra.mxu0 %v2099
    %2640 = vmatprep.subr.mxu0 %v2104
    %2641 = vmatpush1.msra.mxu0 %v2103
    %2642 = vmatprep.subr.mxu0 %v2108
    %2643 = vmatpush1.msra.mxu0 %v2107
    %2644 = vmatprep.subr.mxu0 %v2112
    %2645 = vmatpush1.msra.mxu0 %v2111
    %2646 = vmatprep.mubr.f32.mxu0 %v1193
    %2647 = vmatmul.mubr.f32.gmra.mrb[0].mxu0 %v1176
    %v2648 = vpop.f32.mrb[0].mxu0
    %v2649 = vadd.f32 %v2560, %v2648
    %v2650 = vpop.f32.mrb[0].mxu0
    %v2651 = vadd.f32 %v2562, %v2650
    %2652 = vmatprep.mubr.f32.mxu0 %v1472
    %2653 = vmatmul.mubr.f32.gmra.mrb[0].mxu0 %v1471
    %v2654 = vpop.f32.mrb[0].mxu0
    %v2655 = vadd.f32 %v2566, %v2654
    %v2656 = vpop.f32.mrb[0].mxu0
    %v2657 = vadd.f32 %v2568, %v2656
    %2658 = vmatprep.mubr.f32.mxu0 %v1424
    %2659 = vmatmul.mubr.f32.gmra.mrb[0].mxu0 %v1422
    %v2660 = vpop.f32.mrb[0].mxu0
    %v2661 = vadd.f32 %v2572, %v2660
    %v2662 = vpop.f32.mrb[0].mxu0
    %v2663 = vadd.f32 %v2574, %v2662
    %2664 = vmatprep.mubr.f32.mxu0 %v1423
    %2665 = vmatmul.mubr.f32.gmra.mrb[0].mxu0 %v1421
    %v2666 = vpop.f32.mrb[0].mxu0
    %v2667 = vadd.f32 %v2578, %v2666
    %v2668 = vpop.f32.mrb[0].mxu0
    %v2669 = vadd.f32 %v2580, %v2668
    %2670 = vdwg.mxu0
    %2671 = vmatprep.subr.mxu0 %v2116
    %2672 = vmatpush1.msra.mxu0 %v2115
    %2673 = vmatprep.subr.mxu0 %v2120
    %2674 = vmatpush1.msra.mxu0 %v2119
    %2675 = vmatprep.subr.mxu0 %v2124
    %2676 = vmatpush1.msra.mxu0 %v2123
    %2677 = vmatprep.subr.mxu0 %v2128
    %2678 = vmatpush1.msra.mxu0 %v2127
    %2679 = vmatprep.subr.mxu0 %v2132
    %2680 = vmatpush1.msra.mxu0 %v2131
    %2681 = vmatprep.subr.mxu0 %v2136
    %2682 = vmatpush1.msra.mxu0 %v2135
    %2683 = vmatprep.subr.mxu0 %v2140
    %2684 = vmatpush1.msra.mxu0 %v2139
    %2685 = vmatprep.subr.mxu0 %v2144
    %2686 = vmatpush1.msra.mxu0 %v2143
    %2687 = vmatprep.subr.mxu0 %v2148
    %2688 = vmatpush1.msra.mxu0 %v2147
    %2689 = vmatprep.subr.mxu0 %v2152
    %2690 = vmatpush1.msra.mxu0 %v2151
    %2691 = vmatprep.subr.mxu0 %v2156
    %2692 = vmatpush1.msra.mxu0 %v2155
    %2693 = vmatprep.subr.mxu0 %v2160
    %2694 = vmatpush1.msra.mxu0 %v2159
    %2695 = vmatprep.subr.mxu0 %v2164
    %2696 = vmatpush1.msra.mxu0 %v2163
    %2697 = vmatprep.subr.mxu0 %v2168
    %2698 = vmatpush1.msra.mxu0 %v2167
    %2699 = vmatprep.subr.mxu0 %v2172
    %2700 = vmatpush1.msra.mxu0 %v2171
    %2701 = vmatprep.subr.mxu0 %v2176
    %2702 = vmatpush1.msra.mxu0 %v2175
    %2703 = vmatprep.subr.mxu0 %v2180
    %2704 = vmatpush1.msra.mxu0 %v2179
    %2705 = vmatprep.subr.mxu0 %v2184
    %2706 = vmatpush1.msra.mxu0 %v2183
    %2707 = vmatprep.subr.mxu0 %v2188
    %2708 = vmatpush1.msra.mxu0 %v2187
    %2709 = vmatprep.subr.mxu0 %v2192
    %2710 = vmatpush1.msra.mxu0 %v2191
    %2711 = vmatprep.subr.mxu0 0.0
    %2712 = vmatpush1.msra.mxu0 0.0
    %2713 = vmatprep.subr.mxu0 0.0
    %2714 = vmatpush1.msra.mxu0 0.0
    %2715 = vmatprep.subr.mxu0 0.0
    %2716 = vmatpush1.msra.mxu0 0.0
    %2717 = vmatprep.subr.mxu0 0.0
    %2718 = vmatpush1.msra.mxu0 0.0
    %2719 = vmatprep.subr.mxu0 0.0
    %2720 = vmatpush1.msra.mxu0 0.0
    %2721 = vmatprep.subr.mxu0 0.0
    %2722 = vmatpush1.msra.mxu0 0.0
    %2723 = vmatprep.subr.mxu0 0.0
    %2724 = vmatpush1.msra.mxu0 0.0
    %2725 = vmatprep.subr.mxu0 0.0
    %2726 = vmatpush1.msra.mxu0 0.0
    %2727 = vmatprep.subr.mxu0 0.0
    %2728 = vmatpush1.msra.mxu0 0.0
    %2729 = vmatprep.subr.mxu0 0.0
    %2730 = vmatpush1.msra.mxu0 0.0
    %2731 = vmatprep.subr.mxu0 0.0
    %2732 = vmatpush1.msra.mxu0 0.0
    %2733 = vmatprep.subr.mxu0 0.0
    %2734 = vmatpush1.msra.mxu0 0.0
    %2735 = vmatprep.mubr.f32.mxu0 %v2217
    %2736 = vmatmul.mubr.f32.gmra.mrb[0].mxu0 %v1196
    %v2737 = vpop.f32.mrb[0].mxu0
    %v2738 = vadd.f32 %v2649, %v2737
    %v2739 = vpop.f32.mrb[0].mxu0
    %v2740 = vadd.f32 %v2651, %v2739
    %2741 = vmatprep.mubr.f32.mxu0 %v2220
    %2742 = vmatmul.mubr.f32.gmra.mrb[0].mxu0 %v1473
    %v2743 = vpop.f32.mrb[0].mxu0
    %v2744 = vadd.f32 %v2655, %v2743
    %v2745 = vpop.f32.mrb[0].mxu0
    %v2746 = vadd.f32 %v2657, %v2745
    %2747 = vmatprep.mubr.f32.mxu0 %v2222
    %2748 = vmatmul.mubr.f32.gmra.mrb[0].mxu0 %v1426
    %v2749 = vpop.f32.mrb[0].mxu0
    %v2750 = vadd.f32 %v2661, %v2749
    %v2751 = vpop.f32.mrb[0].mxu0
    %v2752 = vadd.f32 %v2663, %v2751
    %2753 = vmatprep.mubr.f32.mxu0 %v2224
    %2754 = vmatmul.mubr.f32.gmra.mrb[0].mxu0 %v1425
    %v2755 = vpop.f32.mrb[0].mxu0
    %v2756 = vadd.f32 %v2667, %v2755
    %v2757 = vpop.f32.mrb[0].mxu0
    %v2758 = vadd.f32 %v2669, %v2757
    %2759 = vdwg.mxu0
    %2760 = vmatprep.subr.mxu0 %v1478
    %2761 = vmatpush1.msra.mxu0 %v1477
    %2762 = vmatprep.subr.mxu0 %v1482
    %2763 = vmatpush1.msra.mxu0 %v1481
    %2764 = vmatprep.subr.mxu0 %v1486
    %2765 = vmatpush1.msra.mxu0 %v1485
    %2766 = vmatprep.subr.mxu0 %v1490
    %2767 = vmatpush1.msra.mxu0 %v1489
    %2768 = vmatprep.subr.mxu0 %v1494
    %2769 = vmatpush1.msra.mxu0 %v1493
    %2770 = vmatprep.subr.mxu0 %v1498
    %2771 = vmatpush1.msra.mxu0 %v1497
    %2772 = vmatprep.subr.mxu0 %v1502
    %2773 = vmatpush1.msra.mxu0 %v1501
    %2774 = vmatprep.subr.mxu0 %v1506
    %2775 = vmatpush1.msra.mxu0 %v1505
    %2776 = vmatprep.subr.mxu0 %v1510
    %2777 = vmatpush1.msra.mxu0 %v1509
    %2778 = vmatprep.subr.mxu0 %v1514
    %2779 = vmatpush1.msra.mxu0 %v1513
    %2780 = vmatprep.subr.mxu0 %v1518
    %2781 = vmatpush1.msra.mxu0 %v1517
    %2782 = vmatprep.subr.mxu0 %v1522
    %2783 = vmatpush1.msra.mxu0 %v1521
    %2784 = vmatprep.subr.mxu0 %v1526
    %2785 = vmatpush1.msra.mxu0 %v1525
    %2786 = vmatprep.subr.mxu0 %v1530
    %2787 = vmatpush1.msra.mxu0 %v1529
    %2788 = vmatprep.subr.mxu0 %v1534
    %2789 = vmatpush1.msra.mxu0 %v1533
    %2790 = vmatprep.subr.mxu0 %v1538
    %2791 = vmatpush1.msra.mxu0 %v1537
    %2792 = vmatprep.subr.mxu0 %v1542
    %2793 = vmatpush1.msra.mxu0 %v1541
    %2794 = vmatprep.subr.mxu0 %v1546
    %2795 = vmatpush1.msra.mxu0 %v1545
    %2796 = vmatprep.subr.mxu0 %v1550
    %2797 = vmatpush1.msra.mxu0 %v1549
    %2798 = vmatprep.subr.mxu0 %v1554
    %2799 = vmatpush1.msra.mxu0 %v1553
    %2800 = vmatprep.subr.mxu0 %v1558
    %2801 = vmatpush1.msra.mxu0 %v1557
    %2802 = vmatprep.subr.mxu0 %v1562
    %2803 = vmatpush1.msra.mxu0 %v1561
    %2804 = vmatprep.subr.mxu0 %v1566
    %2805 = vmatpush1.msra.mxu0 %v1565
    %2806 = vmatprep.subr.mxu0 %v1570
    %2807 = vmatpush1.msra.mxu0 %v1569
    %2808 = vmatprep.subr.mxu0 %v1574
    %2809 = vmatpush1.msra.mxu0 %v1573
    %2810 = vmatprep.subr.mxu0 %v1578
    %2811 = vmatpush1.msra.mxu0 %v1577
    %2812 = vmatprep.subr.mxu0 %v1582
    %2813 = vmatpush1.msra.mxu0 %v1581
    %2814 = vmatprep.subr.mxu0 %v1586
    %2815 = vmatpush1.msra.mxu0 %v1585
    %2816 = vmatprep.subr.mxu0 %v1590
    %2817 = vmatpush1.msra.mxu0 %v1589
    %2818 = vmatprep.subr.mxu0 %v1594
    %2819 = vmatpush1.msra.mxu0 %v1593
    %2820 = vmatprep.subr.mxu0 %v1598
    %2821 = vmatpush1.msra.mxu0 %v1597
    %2822 = vmatprep.subr.mxu0 %v1602
    %2823 = vmatpush1.msra.mxu0 %v1601
    %2824 = vmatprep.mubr.f32.mxu0 %v1039
    %2825 = vmatmul.mubr.f32.gmra.mrb[0].mxu0 %v1038
    %v2826 = vpop.f32.mrb[0].mxu0
    %v2827 = vadd.f32 %v2208, %v2826
    %v2828 = vpop.f32.mrb[0].mxu0
    %v2829 = vadd.f32 %v2212, %v2828
    %2830 = vmatprep.mubr.f32.mxu0 %v1464
    %2831 = vmatmul.mubr.f32.gmra.mrb[0].mxu0 %v1463
    %v2832 = vpop.f32.mrb[0].mxu0
    %v2833 = vadd.f32 %v2208, %v2832
    %v2834 = vpop.f32.mrb[0].mxu0
    %v2835 = vadd.f32 %v2212, %v2834
    %2836 = vmatprep.mubr.f32.mxu0 %v1408
    %2837 = vmatmul.mubr.f32.gmra.mrb[0].mxu0 %v1406
    %v2838 = vpop.f32.mrb[0].mxu0
    %v2839 = vadd.f32 %v2208, %v2838
    %v2840 = vpop.f32.mrb[0].mxu0
    %v2841 = vadd.f32 %v2212, %v2840
    %2842 = vmatprep.mubr.f32.mxu0 %v1407
    %2843 = vmatmul.mubr.f32.gmra.mrb[0].mxu0 %v1405
    %v2844 = vpop.f32.mrb[0].mxu0
    %v2845 = vadd.f32 %v2208, %v2844
    %v2846 = vpop.f32.mrb[0].mxu0
    %v2847 = vadd.f32 %v2212, %v2846
    %2848 = vdwg.mxu0
    %2849 = vmatprep.subr.mxu0 %v1606
    %2850 = vmatpush1.msra.mxu0 %v1605
    %2851 = vmatprep.subr.mxu0 %v1610
    %2852 = vmatpush1.msra.mxu0 %v1609
    %2853 = vmatprep.subr.mxu0 %v1614
    %2854 = vmatpush1.msra.mxu0 %v1613
    %2855 = vmatprep.subr.mxu0 %v1618
    %2856 = vmatpush1.msra.mxu0 %v1617
    %2857 = vmatprep.subr.mxu0 %v1622
    %2858 = vmatpush1.msra.mxu0 %v1621
    %2859 = vmatprep.subr.mxu0 %v1626
    %2860 = vmatpush1.msra.mxu0 %v1625
    %2861 = vmatprep.subr.mxu0 %v1630
    %2862 = vmatpush1.msra.mxu0 %v1629
    %2863 = vmatprep.subr.mxu0 %v1634
    %2864 = vmatpush1.msra.mxu0 %v1633
    %2865 = vmatprep.subr.mxu0 %v1638
    %2866 = vmatpush1.msra.mxu0 %v1637
    %2867 = vmatprep.subr.mxu0 %v1642
    %2868 = vmatpush1.msra.mxu0 %v1641
    %2869 = vmatprep.subr.mxu0 %v1646
    %2870 = vmatpush1.msra.mxu0 %v1645
    %2871 = vmatprep.subr.mxu0 %v1650
    %2872 = vmatpush1.msra.mxu0 %v1649
    %2873 = vmatprep.subr.mxu0 %v1654
    %2874 = vmatpush1.msra.mxu0 %v1653
    %2875 = vmatprep.subr.mxu0 %v1658
    %2876 = vmatpush1.msra.mxu0 %v1657
    %2877 = vmatprep.subr.mxu0 %v1662
    %2878 = vmatpush1.msra.mxu0 %v1661
    %2879 = vmatprep.subr.mxu0 %v1666
    %2880 = vmatpush1.msra.mxu0 %v1665
    %2881 = vmatprep.subr.mxu0 %v1670
    %2882 = vmatpush1.msra.mxu0 %v1669
    %2883 = vmatprep.subr.mxu0 %v1674
    %2884 = vmatpush1.msra.mxu0 %v1673
    %2885 = vmatprep.subr.mxu0 %v1678
    %2886 = vmatpush1.msra.mxu0 %v1677
    %2887 = vmatprep.subr.mxu0 %v1682
    %2888 = vmatpush1.msra.mxu0 %v1681
    %2889 = vmatprep.subr.mxu0 %v1686
    %2890 = vmatpush1.msra.mxu0 %v1685
    %2891 = vmatprep.subr.mxu0 %v1690
    %2892 = vmatpush1.msra.mxu0 %v1689
    %2893 = vmatprep.subr.mxu0 %v1694
    %2894 = vmatpush1.msra.mxu0 %v1693
    %2895 = vmatprep.subr.mxu0 %v1698
    %2896 = vmatpush1.msra.mxu0 %v1697
    %2897 = vmatprep.subr.mxu0 %v1702
    %2898 = vmatpush1.msra.mxu0 %v1701
    %2899 = vmatprep.subr.mxu0 %v1706
    %2900 = vmatpush1.msra.mxu0 %v1705
    %2901 = vmatprep.subr.mxu0 %v1710
    %2902 = vmatpush1.msra.mxu0 %v1709
    %2903 = vmatprep.subr.mxu0 %v1714
    %2904 = vmatpush1.msra.mxu0 %v1713
    %2905 = vmatprep.subr.mxu0 %v1718
    %2906 = vmatpush1.msra.mxu0 %v1717
    %2907 = vmatprep.subr.mxu0 %v1722
    %2908 = vmatpush1.msra.mxu0 %v1721
    %2909 = vmatprep.subr.mxu0 %v1726
    %2910 = vmatpush1.msra.mxu0 %v1725
    %2911 = vmatprep.subr.mxu0 %v1730
    %2912 = vmatpush1.msra.mxu0 %v1729
    %2913 = vmatprep.mubr.f32.mxu0 %v1095
    %2914 = vmatmul.mubr.f32.gmra.mrb[0].mxu0 %v1211
    %v2915 = vpop.f32.mrb[0].mxu0
    %v2916 = vadd.f32 %v2827, %v2915
    %v2917 = vpop.f32.mrb[0].mxu0
    %v2918 = vadd.f32 %v2829, %v2917
    %2919 = vmatprep.mubr.f32.mxu0 %v1466
    %2920 = vmatmul.mubr.f32.gmra.mrb[0].mxu0 %v1465
    %v2921 = vpop.f32.mrb[0].mxu0
    %v2922 = vadd.f32 %v2833, %v2921
    %v2923 = vpop.f32.mrb[0].mxu0
    %v2924 = vadd.f32 %v2835, %v2923
    %2925 = vmatprep.mubr.f32.mxu0 %v1412
    %2926 = vmatmul.mubr.f32.gmra.mrb[0].mxu0 %v1410
    %v2927 = vpop.f32.mrb[0].mxu0
    %v2928 = vadd.f32 %v2839, %v2927
    %v2929 = vpop.f32.mrb[0].mxu0
    %v2930 = vadd.f32 %v2841, %v2929
    %2931 = vmatprep.mubr.f32.mxu0 %v1411
    %2932 = vmatmul.mubr.f32.gmra.mrb[0].mxu0 %v1409
    %v2933 = vpop.f32.mrb[0].mxu0
    %v2934 = vadd.f32 %v2845, %v2933
    %v2935 = vpop.f32.mrb[0].mxu0
    %v2936 = vadd.f32 %v2847, %v2935
    %2937 = vdwg.mxu0
    %2938 = vmatprep.subr.mxu0 %v1734
    %2939 = vmatpush1.msra.mxu0 %v1733
    %2940 = vmatprep.subr.mxu0 %v1738
    %2941 = vmatpush1.msra.mxu0 %v1737
    %2942 = vmatprep.subr.mxu0 %v1742
    %2943 = vmatpush1.msra.mxu0 %v1741
    %2944 = vmatprep.subr.mxu0 %v1746
    %2945 = vmatpush1.msra.mxu0 %v1745
    %2946 = vmatprep.subr.mxu0 %v1750
    %2947 = vmatpush1.msra.mxu0 %v1749
    %2948 = vmatprep.subr.mxu0 %v1754
    %2949 = vmatpush1.msra.mxu0 %v1753
    %2950 = vmatprep.subr.mxu0 %v1758
    %2951 = vmatpush1.msra.mxu0 %v1757
    %2952 = vmatprep.subr.mxu0 %v1762
    %2953 = vmatpush1.msra.mxu0 %v1761
    %2954 = vmatprep.subr.mxu0 %v1766
    %2955 = vmatpush1.msra.mxu0 %v1765
    %2956 = vmatprep.subr.mxu0 %v1770
    %2957 = vmatpush1.msra.mxu0 %v1769
    %2958 = vmatprep.subr.mxu0 %v1774
    %2959 = vmatpush1.msra.mxu0 %v1773
    %2960 = vmatprep.subr.mxu0 %v1778
    %2961 = vmatpush1.msra.mxu0 %v1777
    %2962 = vmatprep.subr.mxu0 %v1782
    %2963 = vmatpush1.msra.mxu0 %v1781
    %2964 = vmatprep.subr.mxu0 %v1786
    %2965 = vmatpush1.msra.mxu0 %v1785
    %2966 = vmatprep.subr.mxu0 %v1790
    %2967 = vmatpush1.msra.mxu0 %v1789
    %2968 = vmatprep.subr.mxu0 %v1794
    %2969 = vmatpush1.msra.mxu0 %v1793
    %2970 = vmatprep.subr.mxu0 %v1798
    %2971 = vmatpush1.msra.mxu0 %v1797
    %2972 = vmatprep.subr.mxu0 %v1802
    %2973 = vmatpush1.msra.mxu0 %v1801
    %2974 = vmatprep.subr.mxu0 %v1806
    %2975 = vmatpush1.msra.mxu0 %v1805
    %2976 = vmatprep.subr.mxu0 %v1810
    %2977 = vmatpush1.msra.mxu0 %v1809
    %2978 = vmatprep.subr.mxu0 %v1814
    %2979 = vmatpush1.msra.mxu0 %v1813
    %2980 = vmatprep.subr.mxu0 %v1818
    %2981 = vmatpush1.msra.mxu0 %v1817
    %2982 = vmatprep.subr.mxu0 %v1822
    %2983 = vmatpush1.msra.mxu0 %v1821
    %2984 = vmatprep.subr.mxu0 %v1826
    %2985 = vmatpush1.msra.mxu0 %v1825
    %2986 = vmatprep.subr.mxu0 %v1830
    %2987 = vmatpush1.msra.mxu0 %v1829
    %2988 = vmatprep.subr.mxu0 %v1834
    %2989 = vmatpush1.msra.mxu0 %v1833
    %2990 = vmatprep.subr.mxu0 %v1838
    %2991 = vmatpush1.msra.mxu0 %v1837
    %2992 = vmatprep.subr.mxu0 %v1842
    %2993 = vmatpush1.msra.mxu0 %v1841
    %2994 = vmatprep.subr.mxu0 %v1846
    %2995 = vmatpush1.msra.mxu0 %v1845
    %2996 = vmatprep.subr.mxu0 %v1850
    %2997 = vmatpush1.msra.mxu0 %v1849
    %2998 = vmatprep.subr.mxu0 %v1854
    %2999 = vmatpush1.msra.mxu0 %v1853
    %3000 = vmatprep.subr.mxu0 %v1858
    %3001 = vmatpush1.msra.mxu0 %v1857
    %3002 = vmatprep.mubr.f32.mxu0 %v1132
    %3003 = vmatmul.mubr.f32.gmra.mrb[0].mxu0 %v1213
    %v3004 = vpop.f32.mrb[0].mxu0
    %v3005 = vadd.f32 %v2916, %v3004
    %v3006 = vpop.f32.mrb[0].mxu0
    %v3007 = vadd.f32 %v2918, %v3006
    %3008 = vmatprep.mubr.f32.mxu0 %v1468
    %3009 = vmatmul.mubr.f32.gmra.mrb[0].mxu0 %v1467
    %v3010 = vpop.f32.mrb[0].mxu0
    %v3011 = vadd.f32 %v2922, %v3010
    %v3012 = vpop.f32.mrb[0].mxu0
    %v3013 = vadd.f32 %v2924, %v3012
    %3014 = vmatprep.mubr.f32.mxu0 %v1416
    %3015 = vmatmul.mubr.f32.gmra.mrb[0].mxu0 %v1414
    %v3016 = vpop.f32.mrb[0].mxu0
    %v3017 = vadd.f32 %v2928, %v3016
    %v3018 = vpop.f32.mrb[0].mxu0
    %v3019 = vadd.f32 %v2930, %v3018
    %3020 = vmatprep.mubr.f32.mxu0 %v1415
    %3021 = vmatmul.mubr.f32.gmra.mrb[0].mxu0 %v1413
    %v3022 = vpop.f32.mrb[0].mxu0
    %v3023 = vadd.f32 %v2934, %v3022
    %v3024 = vpop.f32.mrb[0].mxu0
    %v3025 = vadd.f32 %v2936, %v3024
    %3026 = vdwg.mxu0
    %3027 = vmatprep.subr.mxu0 %v1862
    %3028 = vmatpush1.msra.mxu0 %v1861
    %3029 = vmatprep.subr.mxu0 %v1866
    %3030 = vmatpush1.msra.mxu0 %v1865
    %3031 = vmatprep.subr.mxu0 %v1870
    %3032 = vmatpush1.msra.mxu0 %v1869
    %3033 = vmatprep.subr.mxu0 %v1874
    %3034 = vmatpush1.msra.mxu0 %v1873
    %3035 = vmatprep.subr.mxu0 %v1878
    %3036 = vmatpush1.msra.mxu0 %v1877
    %3037 = vmatprep.subr.mxu0 %v1882
    %3038 = vmatpush1.msra.mxu0 %v1881
    %3039 = vmatprep.subr.mxu0 %v1886
    %3040 = vmatpush1.msra.mxu0 %v1885
    %3041 = vmatprep.subr.mxu0 %v1890
    %3042 = vmatpush1.msra.mxu0 %v1889
    %3043 = vmatprep.subr.mxu0 %v1894
    %3044 = vmatpush1.msra.mxu0 %v1893
    %3045 = vmatprep.subr.mxu0 %v1898
    %3046 = vmatpush1.msra.mxu0 %v1897
    %3047 = vmatprep.subr.mxu0 %v1902
    %3048 = vmatpush1.msra.mxu0 %v1901
    %3049 = vmatprep.subr.mxu0 %v1906
    %3050 = vmatpush1.msra.mxu0 %v1905
    %3051 = vmatprep.subr.mxu0 %v1910
    %3052 = vmatpush1.msra.mxu0 %v1909
    %3053 = vmatprep.subr.mxu0 %v1914
    %3054 = vmatpush1.msra.mxu0 %v1913
    %3055 = vmatprep.subr.mxu0 %v1918
    %3056 = vmatpush1.msra.mxu0 %v1917
    %3057 = vmatprep.subr.mxu0 %v1922
    %3058 = vmatpush1.msra.mxu0 %v1921
    %3059 = vmatprep.subr.mxu0 %v1926
    %3060 = vmatpush1.msra.mxu0 %v1925
    %3061 = vmatprep.subr.mxu0 %v1930
    %3062 = vmatpush1.msra.mxu0 %v1929
    %3063 = vmatprep.subr.mxu0 %v1934
    %3064 = vmatpush1.msra.mxu0 %v1933
    %3065 = vmatprep.subr.mxu0 %v1938
    %3066 = vmatpush1.msra.mxu0 %v1937
    %3067 = vmatprep.subr.mxu0 %v1942
    %3068 = vmatpush1.msra.mxu0 %v1941
    %3069 = vmatprep.subr.mxu0 %v1946
    %3070 = vmatpush1.msra.mxu0 %v1945
    %3071 = vmatprep.subr.mxu0 %v1950
    %3072 = vmatpush1.msra.mxu0 %v1949
    %3073 = vmatprep.subr.mxu0 %v1954
    %3074 = vmatpush1.msra.mxu0 %v1953
    %3075 = vmatprep.subr.mxu0 %v1958
    %3076 = vmatpush1.msra.mxu0 %v1957
    %3077 = vmatprep.subr.mxu0 %v1962
    %3078 = vmatpush1.msra.mxu0 %v1961
    %3079 = vmatprep.subr.mxu0 %v1966
    %3080 = vmatpush1.msra.mxu0 %v1965
    %3081 = vmatprep.subr.mxu0 %v1970
    %3082 = vmatpush1.msra.mxu0 %v1969
    %3083 = vmatprep.subr.mxu0 %v1974
    %3084 = vmatpush1.msra.mxu0 %v1973
    %3085 = vmatprep.subr.mxu0 %v1978
    %3086 = vmatpush1.msra.mxu0 %v1977
    %3087 = vmatprep.subr.mxu0 %v1982
    %3088 = vmatpush1.msra.mxu0 %v1981
    %3089 = vmatprep.subr.mxu0 %v1986
    %3090 = vmatpush1.msra.mxu0 %v1985
    %3091 = vmatprep.mubr.f32.mxu0 %v1175
    %3092 = vmatmul.mubr.f32.gmra.mrb[0].mxu0 %v1215
    %v3093 = vpop.f32.mrb[0].mxu0
    %v3094 = vadd.f32 %v3005, %v3093
    %v3095 = vpop.f32.mrb[0].mxu0
    %v3096 = vadd.f32 %v3007, %v3095
    %3097 = vmatprep.mubr.f32.mxu0 %v1470
    %3098 = vmatmul.mubr.f32.gmra.mrb[0].mxu0 %v1469
    %v3099 = vpop.f32.mrb[0].mxu0
    %v3100 = vadd.f32 %v3011, %v3099
    %v3101 = vpop.f32.mrb[0].mxu0
    %v3102 = vadd.f32 %v3013, %v3101
    %3103 = vmatprep.mubr.f32.mxu0 %v1420
    %3104 = vmatmul.mubr.f32.gmra.mrb[0].mxu0 %v1418
    %v3105 = vpop.f32.mrb[0].mxu0
    %v3106 = vadd.f32 %v3017, %v3105
    %v3107 = vpop.f32.mrb[0].mxu0
    %v3108 = vadd.f32 %v3019, %v3107
    %3109 = vmatprep.mubr.f32.mxu0 %v1419
    %3110 = vmatmul.mubr.f32.gmra.mrb[0].mxu0 %v1417
    %v3111 = vpop.f32.mrb[0].mxu0
    %v3112 = vadd.f32 %v3023, %v3111
    %v3113 = vpop.f32.mrb[0].mxu0
    %v3114 = vadd.f32 %v3025, %v3113
    %3115 = vdwg.mxu0
    %3116 = vmatprep.subr.mxu0 %v1990
    %3117 = vmatpush1.msra.mxu0 %v1989
    %3118 = vmatprep.subr.mxu0 %v1994
    %3119 = vmatpush1.msra.mxu0 %v1993
    %3120 = vmatprep.subr.mxu0 %v1998
    %3121 = vmatpush1.msra.mxu0 %v1997
    %3122 = vmatprep.subr.mxu0 %v2002
    %3123 = vmatpush1.msra.mxu0 %v2001
    %3124 = vmatprep.subr.mxu0 %v2006
    %3125 = vmatpush1.msra.mxu0 %v2005
    %3126 = vmatprep.subr.mxu0 %v2010
    %3127 = vmatpush1.msra.mxu0 %v2009
    %3128 = vmatprep.subr.mxu0 %v2014
    %3129 = vmatpush1.msra.mxu0 %v2013
    %3130 = vmatprep.subr.mxu0 %v2018
    %3131 = vmatpush1.msra.mxu0 %v2017
    %3132 = vmatprep.subr.mxu0 %v2022
    %3133 = vmatpush1.msra.mxu0 %v2021
    %3134 = vmatprep.subr.mxu0 %v2026
    %3135 = vmatpush1.msra.mxu0 %v2025
    %3136 = vmatprep.subr.mxu0 %v2030
    %3137 = vmatpush1.msra.mxu0 %v2029
    %3138 = vmatprep.subr.mxu0 %v2034
    %3139 = vmatpush1.msra.mxu0 %v2033
    %3140 = vmatprep.subr.mxu0 %v2038
    %3141 = vmatpush1.msra.mxu0 %v2037
    %3142 = vmatprep.subr.mxu0 %v2042
    %3143 = vmatpush1.msra.mxu0 %v2041
    %3144 = vmatprep.subr.mxu0 %v2046
    %3145 = vmatpush1.msra.mxu0 %v2045
    %3146 = vmatprep.subr.mxu0 %v2050
    %3147 = vmatpush1.msra.mxu0 %v2049
    %3148 = vmatprep.subr.mxu0 %v2054
    %3149 = vmatpush1.msra.mxu0 %v2053
    %3150 = vmatprep.subr.mxu0 %v2058
    %3151 = vmatpush1.msra.mxu0 %v2057
    %3152 = vmatprep.subr.mxu0 %v2062
    %3153 = vmatpush1.msra.mxu0 %v2061
    %3154 = vmatprep.subr.mxu0 %v2066
    %3155 = vmatpush1.msra.mxu0 %v2065
    %3156 = vmatprep.subr.mxu0 %v2070
    %3157 = vmatpush1.msra.mxu0 %v2069
    %3158 = vmatprep.subr.mxu0 %v2074
    %3159 = vmatpush1.msra.mxu0 %v2073
    %3160 = vmatprep.subr.mxu0 %v2078
    %3161 = vmatpush1.msra.mxu0 %v2077
    %3162 = vmatprep.subr.mxu0 %v2082
    %3163 = vmatpush1.msra.mxu0 %v2081
    %3164 = vmatprep.subr.mxu0 %v2086
    %3165 = vmatpush1.msra.mxu0 %v2085
    %3166 = vmatprep.subr.mxu0 %v2090
    %3167 = vmatpush1.msra.mxu0 %v2089
    %3168 = vmatprep.subr.mxu0 %v2094
    %3169 = vmatpush1.msra.mxu0 %v2093
    %3170 = vmatprep.subr.mxu0 %v2098
    %3171 = vmatpush1.msra.mxu0 %v2097
    %3172 = vmatprep.subr.mxu0 %v2102
    %3173 = vmatpush1.msra.mxu0 %v2101
    %3174 = vmatprep.subr.mxu0 %v2106
    %3175 = vmatpush1.msra.mxu0 %v2105
    %3176 = vmatprep.subr.mxu0 %v2110
    %3177 = vmatpush1.msra.mxu0 %v2109
    %3178 = vmatprep.subr.mxu0 %v2114
    %3179 = vmatpush1.msra.mxu0 %v2113
    %3180 = vmatprep.mubr.f32.mxu0 %v1193
    %3181 = vmatmul.mubr.f32.gmra.mrb[0].mxu0 %v1176
    %v3182 = vpop.f32.mrb[0].mxu0
    %v3183 = vadd.f32 %v3094, %v3182
    %v3184 = vpop.f32.mrb[0].mxu0
    %v3185 = vadd.f32 %v3096, %v3184
    %3186 = vmatprep.mubr.f32.mxu0 %v1472
    %3187 = vmatmul.mubr.f32.gmra.mrb[0].mxu0 %v1471
    %v3188 = vpop.f32.mrb[0].mxu0
    %v3189 = vadd.f32 %v3100, %v3188
    %v3190 = vpop.f32.mrb[0].mxu0
    %v3191 = vadd.f32 %v3102, %v3190
    %3192 = vmatprep.mubr.f32.mxu0 %v1424
    %3193 = vmatmul.mubr.f32.gmra.mrb[0].mxu0 %v1422
    %v3194 = vpop.f32.mrb[0].mxu0
    %v3195 = vadd.f32 %v3106, %v3194
    %v3196 = vpop.f32.mrb[0].mxu0
    %v3197 = vadd.f32 %v3108, %v3196
    %3198 = vmatprep.mubr.f32.mxu0 %v1423
    %3199 = vmatmul.mubr.f32.gmra.mrb[0].mxu0 %v1421
    %v3200 = vpop.f32.mrb[0].mxu0
    %v3201 = vadd.f32 %v3112, %v3200
    %v3202 = vpop.f32.mrb[0].mxu0
    %v3203 = vadd.f32 %v3114, %v3202
    %3204 = vdwg.mxu0
    %3205 = vmatprep.subr.mxu0 %v2118
    %3206 = vmatpush1.msra.mxu0 %v2117
    %3207 = vmatprep.subr.mxu0 %v2122
    %3208 = vmatpush1.msra.mxu0 %v2121
    %3209 = vmatprep.subr.mxu0 %v2126
    %3210 = vmatpush1.msra.mxu0 %v2125
    %3211 = vmatprep.subr.mxu0 %v2130
    %3212 = vmatpush1.msra.mxu0 %v2129
    %3213 = vmatprep.subr.mxu0 %v2134
    %3214 = vmatpush1.msra.mxu0 %v2133
    %3215 = vmatprep.subr.mxu0 %v2138
    %3216 = vmatpush1.msra.mxu0 %v2137
    %3217 = vmatprep.subr.mxu0 %v2142
    %3218 = vmatpush1.msra.mxu0 %v2141
    %3219 = vmatprep.subr.mxu0 %v2146
    %3220 = vmatpush1.msra.mxu0 %v2145
    %3221 = vmatprep.subr.mxu0 %v2150
    %3222 = vmatpush1.msra.mxu0 %v2149
    %3223 = vmatprep.subr.mxu0 %v2154
    %3224 = vmatpush1.msra.mxu0 %v2153
    %3225 = vmatprep.subr.mxu0 %v2158
    %3226 = vmatpush1.msra.mxu0 %v2157
    %3227 = vmatprep.subr.mxu0 %v2162
    %3228 = vmatpush1.msra.mxu0 %v2161
    %3229 = vmatprep.subr.mxu0 %v2166
    %3230 = vmatpush1.msra.mxu0 %v2165
    %3231 = vmatprep.subr.mxu0 %v2170
    %3232 = vmatpush1.msra.mxu0 %v2169
    %3233 = vmatprep.subr.mxu0 %v2174
    %3234 = vmatpush1.msra.mxu0 %v2173
    %3235 = vmatprep.subr.mxu0 %v2178
    %3236 = vmatpush1.msra.mxu0 %v2177
    %3237 = vmatprep.subr.mxu0 %v2182
    %3238 = vmatpush1.msra.mxu0 %v2181
    %3239 = vmatprep.subr.mxu0 %v2186
    %3240 = vmatpush1.msra.mxu0 %v2185
    %3241 = vmatprep.subr.mxu0 %v2190
    %3242 = vmatpush1.msra.mxu0 %v2189
    %3243 = vmatprep.subr.mxu0 %v2194
    %3244 = vmatpush1.msra.mxu0 %v2193
    %3245 = vmatprep.subr.mxu0 0.0
    %3246 = vmatpush1.msra.mxu0 0.0
    %3247 = vmatprep.subr.mxu0 0.0
    %3248 = vmatpush1.msra.mxu0 0.0
    %3249 = vmatprep.subr.mxu0 0.0
    %3250 = vmatpush1.msra.mxu0 0.0
    %3251 = vmatprep.subr.mxu0 0.0
    %3252 = vmatpush1.msra.mxu0 0.0
    %3253 = vmatprep.subr.mxu0 0.0
    %3254 = vmatpush1.msra.mxu0 0.0
    %3255 = vmatprep.subr.mxu0 0.0
    %3256 = vmatpush1.msra.mxu0 0.0
    %3257 = vmatprep.subr.mxu0 0.0
    %3258 = vmatpush1.msra.mxu0 0.0
    %3259 = vmatprep.subr.mxu0 0.0
    %3260 = vmatpush1.msra.mxu0 0.0
    %3261 = vmatprep.subr.mxu0 0.0
    %3262 = vmatpush1.msra.mxu0 0.0
    %3263 = vmatprep.subr.mxu0 0.0
    %3264 = vmatpush1.msra.mxu0 0.0
    %3265 = vmatprep.subr.mxu0 0.0
    %3266 = vmatpush1.msra.mxu0 0.0
    %3267 = vmatprep.subr.mxu0 0.0
    %3268 = vmatpush1.msra.mxu0 0.0
    %3269 = vmatprep.mubr.f32.mxu0 %v2217
    %3270 = vmatmul.mubr.f32.gmra.mrb[0].mxu0 %v1196
    %v3271 = vpop.f32.mrb[0].mxu0
    %v3272 = vadd.f32 %v3183, %v3271
    %v3273 = vpop.f32.mrb[0].mxu0
    %v3274 = vadd.f32 %v3185, %v3273
    %3275 = vmatprep.mubr.f32.mxu0 %v2220
    %3276 = vmatmul.mubr.f32.gmra.mrb[0].mxu0 %v1473
    %v3277 = vpop.f32.mrb[0].mxu0
    %v3278 = vadd.f32 %v3189, %v3277
    %v3279 = vpop.f32.mrb[0].mxu0
    %v3280 = vadd.f32 %v3191, %v3279
    %3281 = vmatprep.mubr.f32.mxu0 %v2222
    %3282 = vmatmul.mubr.f32.gmra.mrb[0].mxu0 %v1426
    %v3283 = vpop.f32.mrb[0].mxu0
    %v3284 = vadd.f32 %v3195, %v3283
    %v3285 = vpop.f32.mrb[0].mxu0
    %v3286 = vadd.f32 %v3197, %v3285
    %3287 = vmatprep.mubr.f32.mxu0 %v2224
    %3288 = vmatmul.mubr.f32.gmra.mrb[0].mxu0 %v1425
    %v3289 = vpop.f32.mrb[0].mxu0
    %v3290 = vadd.f32 %v3201, %v3289
    %v3291 = vpop.f32.mrb[0].mxu0
    %v3292 = vadd.f32 %v3203, %v3291
    %3293 = vdwg.mxu0
    %v3294 = vmax.f32 %v2738, 0.0
    %v3295 = vmax.f32 %v2740, 0.0
    %v3296 = vmax.f32 %v3272, 0.0
    %v3297 = vmax.f32 %v3274, 0.0
    %v3298 = vmax.f32 %v2744, 0.0
    %v3299 = vmax.f32 %v2746, 0.0
    %v3300 = vmax.f32 %v3278, 0.0
    %v3301 = vmax.f32 %v3280, 0.0
    %v3302 = vmax.f32 %v2750, 0.0
    %v3303 = vmax.f32 %v2752, 0.0
    %v3304 = vmax.f32 %v3284, 0.0
    %v3305 = vmax.f32 %v3286, 0.0
    %v3306 = vmax.f32 %v2756, 0.0
    %v3307 = vmax.f32 %v2758, 0.0
    %v3308 = vmax.f32 %v3290, 0.0
    %v3309 = vmax.f32 %v3292, 0.0
    %3322 = vrot.lane.b32.xlu0 %v3295, 32
    %v3323 = vpop.permute.xlu0 %3322
    %3324 = vrot.lane.b32.xlu0 %v3296, 32
    %v3325 = vpop.permute.xlu0 %3324
    %3326 = vrot.lane.b32.xlu0 %v3297, 32
    %v3327 = vpop.permute.xlu0 %3326
    %3328 = vrot.lane.b32.xlu0 %v3299, 32
    %v3329 = vpop.permute.xlu0 %3328
    %3330 = vrot.lane.b32.xlu0 %v3300, 32
    %v3331 = vpop.permute.xlu0 %3330
    %3332 = vrot.lane.b32.xlu0 %v3301, 32
    %v3333 = vpop.permute.xlu0 %3332
    %3334 = vrot.lane.b32.xlu0 %v3303, 32
    %v3335 = vpop.permute.xlu0 %3334
    %3336 = vrot.lane.b32.xlu0 %v3304, 32
    %v3337 = vpop.permute.xlu0 %3336
    %3338 = vrot.lane.b32.xlu0 %v3305, 32
    %v3339 = vpop.permute.xlu0 %3338
    %3340 = vrot.lane.b32.xlu0 %v3307, 32
    %v3341 = vpop.permute.xlu0 %3340
    %3342 = vrot.lane.b32.xlu0 %v3308, 32
    %v3343 = vpop.permute.xlu0 %3342
    %3344 = vrot.lane.b32.xlu0 %v3309, 32
    %v3345 = vpop.permute.xlu0 %3344
    %v3346 = vsel %vm29, %v3323, %v3325
    %v3347 = vsel %vm29, %v3325, %v3327
    %v3348 = vsel %vm29, %v3329, %v3331
    %v3349 = vsel %vm29, %v3331, %v3333
    %v3350 = vsel %vm29, %v3335, %v3337
    %v3351 = vsel %vm29, %v3337, %v3339
    %v3352 = vsel %vm29, %v3341, %v3343
    %v3353 = vsel %vm29, %v3343, %v3345
    %v3362 = vmax.f32 %v3294, %v3346
    %v3363 = vmax.f32 %v3295, %v3347
    %v3364 = vmax.f32 %v3298, %v3348
    %v3365 = vmax.f32 %v3299, %v3349
    %v3366 = vmax.f32 %v3302, %v3350
    %v3367 = vmax.f32 %v3303, %v3351
    %v3368 = vmax.f32 %v3306, %v3352
    %v3369 = vmax.f32 %v3307, %v3353
    %v3372 = vrot.slane %v3362, 1
    %v3373 = vrot.slane %v3363, 1
    %v3376 = vmax.f32 %v3362, %v3372
    %v3377 = vmax.f32 %v3363, %v3373
    %v3380 = vrot.slane %v3364, 1
    %v3381 = vrot.slane %v3365, 1
    %v3384 = vmax.f32 %v3364, %v3380
    %v3385 = vmax.f32 %v3365, %v3381
    %v3388 = vrot.slane %v3376, 2
    %v3389 = vrot.slane %v3377, 2
    %3390 = vrot.lane.b32.xlu0 %v3388, 96
    %v3391 = vpop.permute.xlu0 %3390
    %3392 = vrot.lane.b32.xlu0 %v3389, 96
    %v3393 = vpop.permute.xlu0 %3392
    %v3394 = vsel %vm165, %v3391, %v3393
    %v3398 = vrot.slane %v3376, 4
    %v3399 = vrot.slane %v3377, 4
    %3400 = vrot.lane.b32.xlu0 %v3398, 64
    %v3401 = vpop.permute.xlu0 %3400
    %3402 = vrot.lane.b32.xlu0 %v3399, 64
    %v3403 = vpop.permute.xlu0 %3402
    %v3404 = vsel %vm160, %v3401, %v3403
    %v3408 = vrot.slane %v3376, 6
    %v3409 = vrot.slane %v3377, 6
    %3410 = vrot.lane.b32.xlu0 %v3408, 32
    %v3411 = vpop.permute.xlu0 %3410
    %3412 = vrot.lane.b32.xlu0 %v3409, 32
    %v3413 = vpop.permute.xlu0 %3412
    %v3414 = vsel %vm29, %v3411, %v3413
    %v3419 = vrot.slane %v3384, 2
    %v3420 = vrot.slane %v3385, 2
    %3421 = vrot.lane.b32.xlu0 %v3419, 96
    %v3422 = vpop.permute.xlu0 %3421
    %3423 = vrot.lane.b32.xlu0 %v3420, 96
    %v3424 = vpop.permute.xlu0 %3423
    %v3425 = vsel %vm165, %v3422, %v3424
    %v3429 = vrot.slane %v3384, 4
    %v3430 = vrot.slane %v3385, 4
    %3431 = vrot.lane.b32.xlu0 %v3429, 64
    %v3432 = vpop.permute.xlu0 %3431
    %3433 = vrot.lane.b32.xlu0 %v3430, 64
    %v3434 = vpop.permute.xlu0 %3433
    %v3435 = vsel %vm160, %v3432, %v3434
    %v3439 = vsel %vm165, %v3377, %v3391
    %v3440 = vsel %vm160, %v3393, %v3401
    %v3441 = vsel %vm29, %v3403, %v3411
    %v3442 = vsel %vm165, %v3385, %v3422
    %v3443 = vsel %vm160, %v3424, %v3432
    %v3446 = vrot.slane %v3366, 1
    %v3447 = vrot.slane %v3367, 1
    %v3450 = vmax.f32 %v3366, %v3446
    %v3451 = vmax.f32 %v3367, %v3447
    %v3454 = vrot.slane %v3368, 1
    %v3455 = vrot.slane %v3369, 1
    %v3458 = vmax.f32 %v3368, %v3454
    %v3459 = vmax.f32 %v3369, %v3455
    %v3462 = vrot.slane %v3450, 2
    %v3463 = vrot.slane %v3451, 2
    %3464 = vrot.lane.b32.xlu0 %v3462, 96
    %v3465 = vpop.permute.xlu0 %3464
    %3466 = vrot.lane.b32.xlu0 %v3463, 96
    %v3467 = vpop.permute.xlu0 %3466
    %v3468 = vsel %vm165, %v3465, %v3467
    %v3471 = vrot.slane %v3450, 4
    %v3472 = vrot.slane %v3451, 4
    %3473 = vrot.lane.b32.xlu0 %v3471, 64
    %v3474 = vpop.permute.xlu0 %3473
    %3475 = vrot.lane.b32.xlu0 %v3472, 64
    %v3476 = vpop.permute.xlu0 %3475
    %v3477 = vsel %vm160, %v3474, %v3476
    %v3480 = vrot.slane %v3450, 6
    %v3481 = vrot.slane %v3451, 6
    %3482 = vrot.lane.b32.xlu0 %v3480, 32
    %v3483 = vpop.permute.xlu0 %3482
    %3484 = vrot.lane.b32.xlu0 %v3481, 32
    %v3485 = vpop.permute.xlu0 %3484
    %v3486 = vsel %vm29, %v3483, %v3485
    %v3490 = vrot.slane %v3458, 2
    %v3491 = vrot.slane %v3459, 2
    %3492 = vrot.lane.b32.xlu0 %v3490, 96
    %v3493 = vpop.permute.xlu0 %3492
    %3494 = vrot.lane.b32.xlu0 %v3491, 96
    %v3495 = vpop.permute.xlu0 %3494
    %v3496 = vsel %vm165, %v3493, %v3495
    %v3499 = vrot.slane %v3458, 4
    %v3500 = vrot.slane %v3459, 4
    %3501 = vrot.lane.b32.xlu0 %v3499, 64
    %v3502 = vpop.permute.xlu0 %3501
    %3503 = vrot.lane.b32.xlu0 %v3500, 64
    %v3504 = vpop.permute.xlu0 %3503
    %v3505 = vsel %vm160, %v3502, %v3504
    %v3507 = vsel %vm165, %v3385, %v3465
    %v3508 = vsel %vm160, %v3467, %v3474
    %v3509 = vsel %vm29, %v3476, %v3483
    %v3510 = vsel %vm165, %v3451, %v3493
    %v3511 = vsel %vm160, %v3495, %v3502
    %v3517 = vrot.slane %v3384, 5
    %v3518 = vrot.slane %v3507, 5
    %v3519 = vrot.slane %v3468, 5
    %v3520 = vrot.slane %v3508, 5
    %v3521 = vrot.slane %v3477, 5
    %v3522 = vrot.slane %v3509, 5
    %v3523 = vrot.slane %v3486, 5
    %v3524 = vrot.slane %v3450, 5
    %v3525 = vrot.slane %v3510, 5
    %v3526 = vrot.slane %v3496, 5
    %v3527 = vrot.slane %v3511, 5
    %v3528 = vrot.slane %v3505, 5
    %v3529 = vrot.slane %v3504, 5
    %v3543 = vsel %vm855, %v3376, %v3517
    %v3544 = vsel %vm855, %v3439, %v3518
    %v3545 = vsel %vm855, %v3394, %v3519
    %v3546 = vsel %vm855, %v3440, %v3520
    %v3547 = vsel %vm855, %v3404, %v3521
    %v3548 = vsel %vm855, %v3441, %v3522
    %v3549 = vsel %vm855, %v3414, %v3523
    %v3550 = vsel %vm855, %v3384, %v3524
    %v3551 = vsel %vm855, %v3442, %v3525
    %v3552 = vsel %vm855, %v3425, %v3526
    %v3553 = vsel %vm855, %v3443, %v3527
    %v3554 = vsel %vm855, %v3435, %v3528
    %v3555 = vsel %vm855, %v3434, %v3529
    %v3569 = vcombine.low %v3543, %v3544
    %v3570 = vcombine.low %v3545, %v3546
    %v3572 = vunpack.c.l.s4 1983009808
    %v3573 = vunpack.c.0.s8 %v3572
    %v3574 = vlaneseq
    %v3575 = vshrl.u32 %v3574, 7
    %v3576 = vsub.s32 %v3573, %v3575
    %v3577 = vrot.slane %v3569, %v3576
    %v3579 = vunpack.c.l.s4 1983009808
    %v3580 = vunpack.c.0.s8 %v3579
    %v3581 = vlaneseq
    %v3582 = vshrl.u32 %v3581, 7
    %v3583 = vsub.s32 %v3580, %v3582
    %v3584 = vrot.slane %v3570, %v3583
    %v3585 = vcombine.low %v3577, %v3584
    %v3586 = vcombine.low %v3547, %v3548
    %v3587 = vcombine.low %v3549, %v3550
    %v3589 = vunpack.c.l.s4 1983009808
    %v3590 = vunpack.c.0.s8 %v3589
    %v3591 = vlaneseq
    %v3592 = vshrl.u32 %v3591, 7
    %v3593 = vsub.s32 %v3590, %v3592
    %v3594 = vrot.slane %v3586, %v3593
    %v3596 = vunpack.c.l.s4 1983009808
    %v3597 = vunpack.c.0.s8 %v3596
    %v3598 = vlaneseq
    %v3599 = vshrl.u32 %v3598, 7
    %v3600 = vsub.s32 %v3597, %v3599
    %v3601 = vrot.slane %v3587, %v3600
    %v3602 = vcombine.low %v3594, %v3601
    %v3603 = vcombine.low %v3551, %v3552
    %v3604 = vcombine.low %v3553, %v3554
    %v3606 = vunpack.c.l.s4 1983009808
    %v3607 = vunpack.c.0.s8 %v3606
    %v3608 = vlaneseq
    %v3609 = vshrl.u32 %v3608, 7
    %v3610 = vsub.s32 %v3607, %v3609
    %v3611 = vrot.slane %v3603, %v3610
    %v3613 = vunpack.c.l.s4 1983009808
    %v3614 = vunpack.c.0.s8 %v3613
    %v3615 = vlaneseq
    %v3616 = vshrl.u32 %v3615, 7
    %v3617 = vsub.s32 %v3614, %v3616
    %v3618 = vrot.slane %v3604, %v3617
    %v3619 = vcombine.low %v3611, %v3618
    %v3621 = vunpack.c.l.s4 1983009808
    %v3622 = vunpack.c.0.s8 %v3621
    %v3623 = vlaneseq
    %v3624 = vshrl.u32 %v3623, 7
    %v3625 = vsub.s32 %v3622, %v3624
    %v3626 = vrot.slane %v3555, %v3625
    %3631 = vst [vmem:[%s8] sm:$0xff] %v3585
    %3632 = vst [vmem:[%s8 + $0x8] sm:$0xff] %v3602
    %3633 = vst [vmem:[%s8 + $0x10] sm:$0xff] %v3619
    %3634 = vst.msk [vmem:[%s8 + $0x18] sm:$0x3] %vm756, %v3626
    %v3635 = vld [vmem:[%s5] sm:$0xff]
    %v3636 = vld [vmem:[%s5 + $0x8] sm:$0xff]
    %v3637 = vld [vmem:[%s5 + $0x10] sm:$0xff]
    %v3638 = vld [vmem:[%s5 + $0x18] sm:$0xff]
    %v3639 = vld [vmem:[%s5 + $0x20] sm:$0xff]
    %v3640 = vld [vmem:[%s5 + $0x28] sm:$0xff]
    %v3641 = vld [vmem:[%s5 + $0x30] sm:$0xff]
    %v3642 = vld [vmem:[%s5 + $0x38] sm:$0xff]
    %v3643 = vld [vmem:[%s5 + $0x40] sm:$0xff]
    %v3644 = vld [vmem:[%s5 + $0x48] sm:$0xff]
    %v3645 = vld [vmem:[%s5 + $0x50] sm:$0xff]
    %v3646 = vld [vmem:[%s5 + $0x58] sm:$0xff]
    %v3647 = vld [vmem:[%s5 + $0x60] sm:$0xff]
    %v3648 = vld [vmem:[%s5 + $0x68] sm:$0xff]
    %v3649 = vld [vmem:[%s5 + $0x70] sm:$0xff]
    %v3650 = vld [vmem:[%s5 + $0x78] sm:$0xff]
    %v3651 = vld [vmem:[%s5 + $0x80] sm:$0xff]
    %v3652 = vld [vmem:[%s5 + $0x88] sm:$0xff]
    %v3653 = vld [vmem:[%s5 + $0x90] sm:$0xff]
    %v3654 = vld [vmem:[%s5 + $0x98] sm:$0xff]
    %v3655 = vld [vmem:[%s5 + $0xa0] sm:$0xff]
    %v3656 = vld [vmem:[%s5 + $0xa8] sm:$0xff]
    %v3657 = vld [vmem:[%s5 + $0xb0] sm:$0xff]
    %v3658 = vld [vmem:[%s5 + $0xb8] sm:$0xff]
    %v3659 = vld [vmem:[%s5 + $0xc0] sm:$0xff]
    %v3660 = vld [vmem:[%s5 + $0xc8] sm:$0xff]
    %v3661 = vld [vmem:[%s5 + $0xd0] sm:$0xff]
    %v3662 = vld [vmem:[%s5 + $0xd8] sm:$0xff]
    %v3663 = vld [vmem:[%s5 + $0xe0] sm:$0xff]
    %v3664 = vld [vmem:[%s5 + $0xe8] sm:$0xff]
    %v3665 = vld [vmem:[%s5 + $0xf0] sm:$0xff]
    %v3666 = vld [vmem:[%s5 + $0xf8] sm:$0xff]
    %v3667 = vld [vmem:[%s5 + $0x100] sm:$0xff]
    %v3668 = vld [vmem:[%s5 + $0x108] sm:$0xff]
    %v3669 = vld [vmem:[%s5 + $0x110] sm:$0xff]
    %v3670 = vld [vmem:[%s5 + $0x118] sm:$0xff]
    %v3671 = vld [vmem:[%s5 + $0x120] sm:$0xff]
    %v3672 = vld [vmem:[%s5 + $0x128] sm:$0xff]
    %v3673 = vld [vmem:[%s5 + $0x130] sm:$0xff]
    %v3674 = vld [vmem:[%s5 + $0x138] sm:$0xff]
    %v3675 = vld [vmem:[%s5 + $0x140] sm:$0xff]
    %v3676 = vld [vmem:[%s5 + $0x148] sm:$0xff]
    %v3677 = vld [vmem:[%s5 + $0x150] sm:$0xff]
    %v3678 = vld [vmem:[%s5 + $0x158] sm:$0xff]
    %v3679 = vld [vmem:[%s5 + $0x160] sm:$0xff]
    %v3680 = vld [vmem:[%s5 + $0x168] sm:$0xff]
    %v3681 = vld [vmem:[%s5 + $0x170] sm:$0xff]
    %v3682 = vld [vmem:[%s5 + $0x178] sm:$0xff]
    %v3683 = vld [vmem:[%s5 + $0x180] sm:$0xff]
    %v3684 = vld [vmem:[%s5 + $0x188] sm:$0xff]
    %v3685 = vld [vmem:[%s5 + $0x190] sm:$0xff]
    %v3686 = vld [vmem:[%s5 + $0x198] sm:$0xff]
    %v3687 = vld [vmem:[%s5 + $0x1a0] sm:$0xff]
    %v3688 = vld [vmem:[%s5 + $0x1a8] sm:$0xff]
    %v3689 = vld [vmem:[%s5 + $0x1b0] sm:$0xff]
    %v3690 = vld [vmem:[%s5 + $0x1b8] sm:$0xff]
    %v3691 = vld [vmem:[%s5 + $0x1c0] sm:$0xff]
    %v3692 = vld [vmem:[%s5 + $0x1c8] sm:$0xff]
    %v3693 = vld [vmem:[%s5 + $0x1d0] sm:$0xff]
    %v3694 = vld [vmem:[%s5 + $0x1d8] sm:$0xff]
    %v3695 = vld [vmem:[%s5 + $0x1e0] sm:$0xff]
    %v3696 = vld [vmem:[%s5 + $0x1e8] sm:$0xff]
    %v3697 = vld [vmem:[%s5 + $0x1f0] sm:$0xff]
    %v3698 = vld [vmem:[%s5 + $0x1f8] sm:$0xff]
    %v3699 = vld [vmem:[%s5 + $0x200] sm:$0xff]
    %v3700 = vld [vmem:[%s5 + $0x208] sm:$0xff]
    %v3701 = vld [vmem:[%s5 + $0x210] sm:$0xff]
    %v3702 = vld [vmem:[%s5 + $0x218] sm:$0xff]
    %v3703 = vld [vmem:[%s5 + $0x220] sm:$0xff]
    %v3704 = vld [vmem:[%s5 + $0x228] sm:$0xff]
    %v3705 = vld [vmem:[%s5 + $0x230] sm:$0xff]
    %v3706 = vld [vmem:[%s5 + $0x238] sm:$0xff]
    %v3707 = vld [vmem:[%s5 + $0x240] sm:$0xff]
    %v3708 = vld [vmem:[%s5 + $0x248] sm:$0xff]
    %v3709 = vld [vmem:[%s5 + $0x250] sm:$0xff]
    %v3710 = vld [vmem:[%s5 + $0x258] sm:$0xff]
    %v3711 = vld [vmem:[%s5 + $0x260] sm:$0xff]
    %v3712 = vld [vmem:[%s5 + $0x268] sm:$0xff]
    %v3713 = vld [vmem:[%s5 + $0x270] sm:$0xff]
    %v3714 = vld [vmem:[%s5 + $0x278] sm:$0xff]
    %v3715 = vld [vmem:[%s5 + $0x280] sm:$0xff]
    %v3716 = vld [vmem:[%s5 + $0x288] sm:$0xff]
    %v3717 = vld [vmem:[%s5 + $0x290] sm:$0xff]
    %v3718 = vld [vmem:[%s5 + $0x298] sm:$0xff]
    %v3719 = vld [vmem:[%s5 + $0x2a0] sm:$0xff]
    %v3720 = vld [vmem:[%s5 + $0x2a8] sm:$0xff]
    %v3721 = vld [vmem:[%s5 + $0x2b0] sm:$0xff]
    %v3722 = vld [vmem:[%s5 + $0x2b8] sm:$0xff]
    %v3723 = vld [vmem:[%s5 + $0x2c0] sm:$0xff]
    %v3724 = vld [vmem:[%s5 + $0x2c8] sm:$0xff]
    %v3725 = vld [vmem:[%s5 + $0x2d0] sm:$0xff]
    %v3726 = vld [vmem:[%s5 + $0x2d8] sm:$0xff]
    %v3727 = vld [vmem:[%s5 + $0x2e0] sm:$0xff]
    %v3728 = vld [vmem:[%s5 + $0x2e8] sm:$0xff]
    %v3729 = vld [vmem:[%s5 + $0x2f0] sm:$0xff]
    %v3730 = vld [vmem:[%s5 + $0x2f8] sm:$0xff]
    %v3731 = vld [vmem:[%s5 + $0x300] sm:$0xff]
    %v3732 = vld [vmem:[%s5 + $0x308] sm:$0xff]
    %v3733 = vld [vmem:[%s5 + $0x310] sm:$0xff]
    %v3734 = vld [vmem:[%s5 + $0x318] sm:$0xff]
    %v3735 = vld [vmem:[%s5 + $0x320] sm:$0xff]
    %v3736 = vld [vmem:[%s5 + $0x328] sm:$0xff]
    %v3737 = vld [vmem:[%s5 + $0x330] sm:$0xff]
    %v3738 = vld [vmem:[%s5 + $0x338] sm:$0xff]
    %v3739 = vld [vmem:[%s5 + $0x340] sm:$0xff]
    %v3740 = vld [vmem:[%s5 + $0x348] sm:$0xff]
    %v3741 = vld [vmem:[%s5 + $0x350] sm:$0xff]
    %v3742 = vld [vmem:[%s5 + $0x358] sm:$0xff]
    %v3743 = vld [vmem:[%s5 + $0x360] sm:$0xff]
    %v3744 = vld [vmem:[%s5 + $0x368] sm:$0xff]
    %v3745 = vld [vmem:[%s5 + $0x370] sm:$0xff]
    %v3746 = vld [vmem:[%s5 + $0x378] sm:$0xff]
    %v3747 = vld [vmem:[%s5 + $0x380] sm:$0xff]
    %v3748 = vld [vmem:[%s5 + $0x388] sm:$0xff]
    %v3749 = vld [vmem:[%s5 + $0x390] sm:$0xff]
    %v3750 = vld [vmem:[%s5 + $0x398] sm:$0xff]
    %v3751 = vld [vmem:[%s5 + $0x3a0] sm:$0xff]
    %v3752 = vld [vmem:[%s5 + $0x3a8] sm:$0xff]
    %v3753 = vld [vmem:[%s5 + $0x3b0] sm:$0xff]
    %v3754 = vld [vmem:[%s5 + $0x3b8] sm:$0xff]
    %v3755 = vld [vmem:[%s5 + $0x3c0] sm:$0xff]
    %v3756 = vld [vmem:[%s5 + $0x3c8] sm:$0xff]
    %v3757 = vld [vmem:[%s5 + $0x3d0] sm:$0xff]
    %v3758 = vld [vmem:[%s5 + $0x3d8] sm:$0xff]
    %v3759 = vld [vmem:[%s5 + $0x3e0] sm:$0xff]
    %v3760 = vld [vmem:[%s5 + $0x3e8] sm:$0xff]
    %v3761 = vld [vmem:[%s5 + $0x3f0] sm:$0xff]
    %v3762 = vld [vmem:[%s5 + $0x3f8] sm:$0xff]
    %v3763 = vld [vmem:[%s5 + $0x400] sm:$0xff]
    %v3764 = vld [vmem:[%s5 + $0x408] sm:$0xff]
    %v3765 = vld [vmem:[%s5 + $0x410] sm:$0xff]
    %v3766 = vld [vmem:[%s5 + $0x418] sm:$0xff]
    %v3767 = vld [vmem:[%s5 + $0x420] sm:$0xff]
    %v3768 = vld [vmem:[%s5 + $0x428] sm:$0xff]
    %v3769 = vld [vmem:[%s5 + $0x430] sm:$0xff]
    %v3770 = vld [vmem:[%s5 + $0x438] sm:$0xff]
    %v3771 = vld [vmem:[%s5 + $0x440] sm:$0xff]
    %v3772 = vld [vmem:[%s5 + $0x448] sm:$0xff]
    %v3773 = vld [vmem:[%s5 + $0x450] sm:$0xff]
    %v3774 = vld [vmem:[%s5 + $0x458] sm:$0xff]
    %v3775 = vld [vmem:[%s5 + $0x460] sm:$0xff]
    %v3776 = vld [vmem:[%s5 + $0x468] sm:$0xff]
    %v3777 = vld [vmem:[%s5 + $0x470] sm:$0xff]
    %v3778 = vld [vmem:[%s5 + $0x478] sm:$0xff]
    %v3779 = vld [vmem:[%s5 + $0x480] sm:$0xff]
    %v3780 = vld [vmem:[%s5 + $0x488] sm:$0xff]
    %v3781 = vld [vmem:[%s5 + $0x490] sm:$0xff]
    %v3782 = vld [vmem:[%s5 + $0x498] sm:$0xff]
    %v3783 = vld [vmem:[%s5 + $0x4a0] sm:$0xff]
    %v3784 = vld [vmem:[%s5 + $0x4a8] sm:$0xff]
    %v3785 = vld [vmem:[%s5 + $0x4b0] sm:$0xff]
    %v3786 = vld [vmem:[%s5 + $0x4b8] sm:$0xff]
    %v3787 = vld [vmem:[%s5 + $0x4c0] sm:$0xff]
    %v3788 = vld [vmem:[%s5 + $0x4c8] sm:$0xff]
    %v3789 = vld [vmem:[%s5 + $0x4d0] sm:$0xff]
    %v3790 = vld [vmem:[%s5 + $0x4d8] sm:$0xff]
    %v3791 = vld [vmem:[%s5 + $0x4e0] sm:$0xff]
    %v3792 = vld [vmem:[%s5 + $0x4e8] sm:$0xff]
    %v3793 = vld [vmem:[%s5 + $0x4f0] sm:$0xff]
    %v3794 = vld [vmem:[%s5 + $0x4f8] sm:$0xff]
    %v3795 = vld [vmem:[%s5 + $0x500] sm:$0xff]
    %v3796 = vld [vmem:[%s5 + $0x508] sm:$0xff]
    %v3797 = vld [vmem:[%s5 + $0x510] sm:$0xff]
    %v3798 = vld [vmem:[%s5 + $0x518] sm:$0xff]
    %v3799 = vld [vmem:[%s5 + $0x520] sm:$0xff]
    %v3800 = vld [vmem:[%s5 + $0x528] sm:$0xff]
    %v3801 = vld [vmem:[%s5 + $0x530] sm:$0xff]
    %v3802 = vld [vmem:[%s5 + $0x538] sm:$0xff]
    %v3803 = vld [vmem:[%s5 + $0x540] sm:$0xff]
    %v3804 = vld [vmem:[%s5 + $0x548] sm:$0xff]
    %v3805 = vld [vmem:[%s5 + $0x550] sm:$0xff]
    %v3806 = vld [vmem:[%s5 + $0x558] sm:$0xff]
    %v3807 = vld [vmem:[%s5 + $0x560] sm:$0xff]
    %v3808 = vld [vmem:[%s5 + $0x568] sm:$0xff]
    %v3809 = vld [vmem:[%s5 + $0x570] sm:$0xff]
    %v3810 = vld [vmem:[%s5 + $0x578] sm:$0xff]
    %v3811 = vld [vmem:[%s5 + $0x580] sm:$0xff]
    %v3812 = vld [vmem:[%s5 + $0x588] sm:$0xff]
    %v3813 = vld [vmem:[%s5 + $0x590] sm:$0xff]
    %v3814 = vld [vmem:[%s5 + $0x598] sm:$0xff]
    %v3815 = vld [vmem:[%s5 + $0x5a0] sm:$0xff]
    %v3816 = vld [vmem:[%s5 + $0x5a8] sm:$0xff]
    %v3817 = vld [vmem:[%s5 + $0x5b0] sm:$0xff]
    %v3818 = vld [vmem:[%s5 + $0x5b8] sm:$0xff]
    %v3819 = vld [vmem:[%s5 + $0x5c0] sm:$0xff]
    %v3820 = vld [vmem:[%s5 + $0x5c8] sm:$0xff]
    %v3821 = vld [vmem:[%s5 + $0x5d0] sm:$0xff]
    %v3822 = vld [vmem:[%s5 + $0x5d8] sm:$0xff]
    %v3823 = vld [vmem:[%s5 + $0x5e0] sm:$0xff]
    %v3824 = vld [vmem:[%s5 + $0x5e8] sm:$0xff]
    %v3825 = vld [vmem:[%s5 + $0x5f0] sm:$0xff]
    %v3826 = vld [vmem:[%s5 + $0x5f8] sm:$0xff]
    %v3827 = vld [vmem:[%s5 + $0x600] sm:$0xff]
    %v3828 = vld [vmem:[%s5 + $0x608] sm:$0xff]
    %v3829 = vld [vmem:[%s5 + $0x610] sm:$0xff]
    %v3830 = vld [vmem:[%s5 + $0x618] sm:$0xff]
    %v3831 = vld [vmem:[%s6] sm:$0x1]
    %v3833 = vlaneseq
    %v3834 = vshrl.u32 %v3833, 7
    %v3835 = vsub.s32 0, %v3834
    %v3836 = vrot.slane %v3831, %v3835
    %v3838 = vsel %vm29, %v3555, 0
    %3840 = vmatprep.subr.mxu0 0.0
    %3841 = vmatpush1.msra.mxu0 %v3635
    %3842 = vmatprep.subr.mxu0 0.0
    %3843 = vmatpush1.msra.mxu0 %v3636
    %3844 = vmatprep.subr.mxu0 0.0
    %3845 = vmatpush1.msra.mxu0 %v3637
    %3846 = vmatprep.subr.mxu0 0.0
    %3847 = vmatpush1.msra.mxu0 %v3638
    %3848 = vmatprep.subr.mxu0 0.0
    %3849 = vmatpush1.msra.mxu0 %v3639
    %3850 = vmatprep.subr.mxu0 0.0
    %3851 = vmatpush1.msra.mxu0 %v3640
    %3852 = vmatprep.subr.mxu0 0.0
    %3853 = vmatpush1.msra.mxu0 %v3641
    %3854 = vmatprep.subr.mxu0 0.0
    %3855 = vmatpush1.msra.mxu0 %v3642
    %3856 = vmatprep.subr.mxu0 0.0
    %3857 = vmatpush1.msra.mxu0 %v3643
    %3858 = vmatprep.subr.mxu0 0.0
    %3859 = vmatpush1.msra.mxu0 %v3644
    %3860 = vmatprep.subr.mxu0 0.0
    %3861 = vmatpush1.msra.mxu0 %v3645
    %3862 = vmatprep.subr.mxu0 0.0
    %3863 = vmatpush1.msra.mxu0 %v3646
    %3864 = vmatprep.subr.mxu0 0.0
    %3865 = vmatpush1.msra.mxu0 %v3647
    %3866 = vmatprep.subr.mxu0 0.0
    %3867 = vmatpush1.msra.mxu0 %v3648
    %3868 = vmatprep.subr.mxu0 0.0
    %3869 = vmatpush1.msra.mxu0 %v3649
    %3870 = vmatprep.subr.mxu0 0.0
    %3871 = vmatpush1.msra.mxu0 %v3650
    %3872 = vmatprep.subr.mxu0 0.0
    %3873 = vmatpush1.msra.mxu0 %v3651
    %3874 = vmatprep.subr.mxu0 0.0
    %3875 = vmatpush1.msra.mxu0 %v3652
    %3876 = vmatprep.subr.mxu0 0.0
    %3877 = vmatpush1.msra.mxu0 %v3653
    %3878 = vmatprep.subr.mxu0 0.0
    %3879 = vmatpush1.msra.mxu0 %v3654
    %3880 = vmatprep.subr.mxu0 0.0
    %3881 = vmatpush1.msra.mxu0 %v3655
    %3882 = vmatprep.subr.mxu0 0.0
    %3883 = vmatpush1.msra.mxu0 %v3656
    %3884 = vmatprep.subr.mxu0 0.0
    %3885 = vmatpush1.msra.mxu0 %v3657
    %3886 = vmatprep.subr.mxu0 0.0
    %3887 = vmatpush1.msra.mxu0 %v3658
    %3888 = vmatprep.subr.mxu0 0.0
    %3889 = vmatpush1.msra.mxu0 %v3659
    %3890 = vmatprep.subr.mxu0 0.0
    %3891 = vmatpush1.msra.mxu0 %v3660
    %3892 = vmatprep.subr.mxu0 0.0
    %3893 = vmatpush1.msra.mxu0 %v3661
    %3894 = vmatprep.subr.mxu0 0.0
    %3895 = vmatpush1.msra.mxu0 %v3662
    %3896 = vmatprep.subr.mxu0 0.0
    %3897 = vmatpush1.msra.mxu0 %v3663
    %3898 = vmatprep.subr.mxu0 0.0
    %3899 = vmatpush1.msra.mxu0 %v3664
    %3900 = vmatprep.subr.mxu0 0.0
    %3901 = vmatpush1.msra.mxu0 %v3665
    %3902 = vmatprep.subr.mxu0 0.0
    %3903 = vmatpush1.msra.mxu0 %v3666
    %3904 = vmatprep.mubr.f32.mxu0 %v3544
    %3905 = vmatmul.mubr.f32.gmra.mrb[0].mxu0 %v3543
    %v3906 = vpop.f32.mrb[0].mxu0
    %v3907 = vadd.f32 %v3836, %v3906
    %v3908 = vpop.f32.mrb[0].mxu0
    %3909 = vdwg.mxu0
    %3910 = vmatprep.subr.mxu0 0.0
    %3911 = vmatpush1.msra.mxu0 %v3667
    %3912 = vmatprep.subr.mxu0 0.0
    %3913 = vmatpush1.msra.mxu0 %v3668
    %3914 = vmatprep.subr.mxu0 0.0
    %3915 = vmatpush1.msra.mxu0 %v3669
    %3916 = vmatprep.subr.mxu0 0.0
    %3917 = vmatpush1.msra.mxu0 %v3670
    %3918 = vmatprep.subr.mxu0 0.0
    %3919 = vmatpush1.msra.mxu0 %v3671
    %3920 = vmatprep.subr.mxu0 0.0
    %3921 = vmatpush1.msra.mxu0 %v3672
    %3922 = vmatprep.subr.mxu0 0.0
    %3923 = vmatpush1.msra.mxu0 %v3673
    %3924 = vmatprep.subr.mxu0 0.0
    %3925 = vmatpush1.msra.mxu0 %v3674
    %3926 = vmatprep.subr.mxu0 0.0
    %3927 = vmatpush1.msra.mxu0 %v3675
    %3928 = vmatprep.subr.mxu0 0.0
    %3929 = vmatpush1.msra.mxu0 %v3676
    %3930 = vmatprep.subr.mxu0 0.0
    %3931 = vmatpush1.msra.mxu0 %v3677
    %3932 = vmatprep.subr.mxu0 0.0
    %3933 = vmatpush1.msra.mxu0 %v3678
    %3934 = vmatprep.subr.mxu0 0.0
    %3935 = vmatpush1.msra.mxu0 %v3679
    %3936 = vmatprep.subr.mxu0 0.0
    %3937 = vmatpush1.msra.mxu0 %v3680
    %3938 = vmatprep.subr.mxu0 0.0
    %3939 = vmatpush1.msra.mxu0 %v3681
    %3940 = vmatprep.subr.mxu0 0.0
    %3941 = vmatpush1.msra.mxu0 %v3682
    %3942 = vmatprep.subr.mxu0 0.0
    %3943 = vmatpush1.msra.mxu0 %v3683
    %3944 = vmatprep.subr.mxu0 0.0
    %3945 = vmatpush1.msra.mxu0 %v3684
    %3946 = vmatprep.subr.mxu0 0.0
    %3947 = vmatpush1.msra.mxu0 %v3685
    %3948 = vmatprep.subr.mxu0 0.0
    %3949 = vmatpush1.msra.mxu0 %v3686
    %3950 = vmatprep.subr.mxu0 0.0
    %3951 = vmatpush1.msra.mxu0 %v3687
    %3952 = vmatprep.subr.mxu0 0.0
    %3953 = vmatpush1.msra.mxu0 %v3688
    %3954 = vmatprep.subr.mxu0 0.0
    %3955 = vmatpush1.msra.mxu0 %v3689
    %3956 = vmatprep.subr.mxu0 0.0
    %3957 = vmatpush1.msra.mxu0 %v3690
    %3958 = vmatprep.subr.mxu0 0.0
    %3959 = vmatpush1.msra.mxu0 %v3691
    %3960 = vmatprep.subr.mxu0 0.0
    %3961 = vmatpush1.msra.mxu0 %v3692
    %3962 = vmatprep.subr.mxu0 0.0
    %3963 = vmatpush1.msra.mxu0 %v3693
    %3964 = vmatprep.subr.mxu0 0.0
    %3965 = vmatpush1.msra.mxu0 %v3694
    %3966 = vmatprep.subr.mxu0 0.0
    %3967 = vmatpush1.msra.mxu0 %v3695
    %3968 = vmatprep.subr.mxu0 0.0
    %3969 = vmatpush1.msra.mxu0 %v3696
    %3970 = vmatprep.subr.mxu0 0.0
    %3971 = vmatpush1.msra.mxu0 %v3697
    %3972 = vmatprep.subr.mxu0 0.0
    %3973 = vmatpush1.msra.mxu0 %v3698
    %3974 = vmatprep.mubr.f32.mxu0 %v3546
    %3975 = vmatmul.mubr.f32.gmra.mrb[0].mxu0 %v3545
    %v3976 = vpop.f32.mrb[0].mxu0
    %v3977 = vadd.f32 %v3907, %v3976
    %v3978 = vpop.f32.mrb[0].mxu0
    %3979 = vdwg.mxu0
    %3980 = vmatprep.subr.mxu0 0.0
    %3981 = vmatpush1.msra.mxu0 %v3699
    %3982 = vmatprep.subr.mxu0 0.0
    %3983 = vmatpush1.msra.mxu0 %v3700
    %3984 = vmatprep.subr.mxu0 0.0
    %3985 = vmatpush1.msra.mxu0 %v3701
    %3986 = vmatprep.subr.mxu0 0.0
    %3987 = vmatpush1.msra.mxu0 %v3702
    %3988 = vmatprep.subr.mxu0 0.0
    %3989 = vmatpush1.msra.mxu0 %v3703
    %3990 = vmatprep.subr.mxu0 0.0
    %3991 = vmatpush1.msra.mxu0 %v3704
    %3992 = vmatprep.subr.mxu0 0.0
    %3993 = vmatpush1.msra.mxu0 %v3705
    %3994 = vmatprep.subr.mxu0 0.0
    %3995 = vmatpush1.msra.mxu0 %v3706
    %3996 = vmatprep.subr.mxu0 0.0
    %3997 = vmatpush1.msra.mxu0 %v3707
    %3998 = vmatprep.subr.mxu0 0.0
    %3999 = vmatpush1.msra.mxu0 %v3708
    %4000 = vmatprep.subr.mxu0 0.0
    %4001 = vmatpush1.msra.mxu0 %v3709
    %4002 = vmatprep.subr.mxu0 0.0
    %4003 = vmatpush1.msra.mxu0 %v3710
    %4004 = vmatprep.subr.mxu0 0.0
    %4005 = vmatpush1.msra.mxu0 %v3711
    %4006 = vmatprep.subr.mxu0 0.0
    %4007 = vmatpush1.msra.mxu0 %v3712
    %4008 = vmatprep.subr.mxu0 0.0
    %4009 = vmatpush1.msra.mxu0 %v3713
    %4010 = vmatprep.subr.mxu0 0.0
    %4011 = vmatpush1.msra.mxu0 %v3714
    %4012 = vmatprep.subr.mxu0 0.0
    %4013 = vmatpush1.msra.mxu0 %v3715
    %4014 = vmatprep.subr.mxu0 0.0
    %4015 = vmatpush1.msra.mxu0 %v3716
    %4016 = vmatprep.subr.mxu0 0.0
    %4017 = vmatpush1.msra.mxu0 %v3717
    %4018 = vmatprep.subr.mxu0 0.0
    %4019 = vmatpush1.msra.mxu0 %v3718
    %4020 = vmatprep.subr.mxu0 0.0
    %4021 = vmatpush1.msra.mxu0 %v3719
    %4022 = vmatprep.subr.mxu0 0.0
    %4023 = vmatpush1.msra.mxu0 %v3720
    %4024 = vmatprep.subr.mxu0 0.0
    %4025 = vmatpush1.msra.mxu0 %v3721
    %4026 = vmatprep.subr.mxu0 0.0
    %4027 = vmatpush1.msra.mxu0 %v3722
    %4028 = vmatprep.subr.mxu0 0.0
    %4029 = vmatpush1.msra.mxu0 %v3723
    %4030 = vmatprep.subr.mxu0 0.0
    %4031 = vmatpush1.msra.mxu0 %v3724
    %4032 = vmatprep.subr.mxu0 0.0
    %4033 = vmatpush1.msra.mxu0 %v3725
    %4034 = vmatprep.subr.mxu0 0.0
    %4035 = vmatpush1.msra.mxu0 %v3726
    %4036 = vmatprep.subr.mxu0 0.0
    %4037 = vmatpush1.msra.mxu0 %v3727
    %4038 = vmatprep.subr.mxu0 0.0
    %4039 = vmatpush1.msra.mxu0 %v3728
    %4040 = vmatprep.subr.mxu0 0.0
    %4041 = vmatpush1.msra.mxu0 %v3729
    %4042 = vmatprep.subr.mxu0 0.0
    %4043 = vmatpush1.msra.mxu0 %v3730
    %4044 = vmatprep.mubr.f32.mxu0 %v3548
    %4045 = vmatmul.mubr.f32.gmra.mrb[0].mxu0 %v3547
    %v4046 = vpop.f32.mrb[0].mxu0
    %v4047 = vadd.f32 %v3977, %v4046
    %v4048 = vpop.f32.mrb[0].mxu0
    %4049 = vdwg.mxu0
    %4050 = vmatprep.subr.mxu0 0.0
    %4051 = vmatpush1.msra.mxu0 %v3731
    %4052 = vmatprep.subr.mxu0 0.0
    %4053 = vmatpush1.msra.mxu0 %v3732
    %4054 = vmatprep.subr.mxu0 0.0
    %4055 = vmatpush1.msra.mxu0 %v3733
    %4056 = vmatprep.subr.mxu0 0.0
    %4057 = vmatpush1.msra.mxu0 %v3734
    %4058 = vmatprep.subr.mxu0 0.0
    %4059 = vmatpush1.msra.mxu0 %v3735
    %4060 = vmatprep.subr.mxu0 0.0
    %4061 = vmatpush1.msra.mxu0 %v3736
    %4062 = vmatprep.subr.mxu0 0.0
    %4063 = vmatpush1.msra.mxu0 %v3737
    %4064 = vmatprep.subr.mxu0 0.0
    %4065 = vmatpush1.msra.mxu0 %v3738
    %4066 = vmatprep.subr.mxu0 0.0
    %4067 = vmatpush1.msra.mxu0 %v3739
    %4068 = vmatprep.subr.mxu0 0.0
    %4069 = vmatpush1.msra.mxu0 %v3740
    %4070 = vmatprep.subr.mxu0 0.0
    %4071 = vmatpush1.msra.mxu0 %v3741
    %4072 = vmatprep.subr.mxu0 0.0
    %4073 = vmatpush1.msra.mxu0 %v3742
    %4074 = vmatprep.subr.mxu0 0.0
    %4075 = vmatpush1.msra.mxu0 %v3743
    %4076 = vmatprep.subr.mxu0 0.0
    %4077 = vmatpush1.msra.mxu0 %v3744
    %4078 = vmatprep.subr.mxu0 0.0
    %4079 = vmatpush1.msra.mxu0 %v3745
    %4080 = vmatprep.subr.mxu0 0.0
    %4081 = vmatpush1.msra.mxu0 %v3746
    %4082 = vmatprep.subr.mxu0 0.0
    %4083 = vmatpush1.msra.mxu0 %v3747
    %4084 = vmatprep.subr.mxu0 0.0
    %4085 = vmatpush1.msra.mxu0 %v3748
    %4086 = vmatprep.subr.mxu0 0.0
    %4087 = vmatpush1.msra.mxu0 %v3749
    %4088 = vmatprep.subr.mxu0 0.0
    %4089 = vmatpush1.msra.mxu0 %v3750
    %4090 = vmatprep.subr.mxu0 0.0
    %4091 = vmatpush1.msra.mxu0 %v3751
    %4092 = vmatprep.subr.mxu0 0.0
    %4093 = vmatpush1.msra.mxu0 %v3752
    %4094 = vmatprep.subr.mxu0 0.0
    %4095 = vmatpush1.msra.mxu0 %v3753
    %4096 = vmatprep.subr.mxu0 0.0
    %4097 = vmatpush1.msra.mxu0 %v3754
    %4098 = vmatprep.subr.mxu0 0.0
    %4099 = vmatpush1.msra.mxu0 %v3755
    %4100 = vmatprep.subr.mxu0 0.0
    %4101 = vmatpush1.msra.mxu0 %v3756
    %4102 = vmatprep.subr.mxu0 0.0
    %4103 = vmatpush1.msra.mxu0 %v3757
    %4104 = vmatprep.subr.mxu0 0.0
    %4105 = vmatpush1.msra.mxu0 %v3758
    %4106 = vmatprep.subr.mxu0 0.0
    %4107 = vmatpush1.msra.mxu0 %v3759
    %4108 = vmatprep.subr.mxu0 0.0
    %4109 = vmatpush1.msra.mxu0 %v3760
    %4110 = vmatprep.subr.mxu0 0.0
    %4111 = vmatpush1.msra.mxu0 %v3761
    %4112 = vmatprep.subr.mxu0 0.0
    %4113 = vmatpush1.msra.mxu0 %v3762
    %4114 = vmatprep.mubr.f32.mxu0 %v3550
    %4115 = vmatmul.mubr.f32.gmra.mrb[0].mxu0 %v3549
    %v4116 = vpop.f32.mrb[0].mxu0
    %v4117 = vadd.f32 %v4047, %v4116
    %v4118 = vpop.f32.mrb[0].mxu0
    %4119 = vdwg.mxu0
    %4120 = vmatprep.subr.mxu0 0.0
    %4121 = vmatpush1.msra.mxu0 %v3763
    %4122 = vmatprep.subr.mxu0 0.0
    %4123 = vmatpush1.msra.mxu0 %v3764
    %4124 = vmatprep.subr.mxu0 0.0
    %4125 = vmatpush1.msra.mxu0 %v3765
    %4126 = vmatprep.subr.mxu0 0.0
    %4127 = vmatpush1.msra.mxu0 %v3766
    %4128 = vmatprep.subr.mxu0 0.0
    %4129 = vmatpush1.msra.mxu0 %v3767
    %4130 = vmatprep.subr.mxu0 0.0
    %4131 = vmatpush1.msra.mxu0 %v3768
    %4132 = vmatprep.subr.mxu0 0.0
    %4133 = vmatpush1.msra.mxu0 %v3769
    %4134 = vmatprep.subr.mxu0 0.0
    %4135 = vmatpush1.msra.mxu0 %v3770
    %4136 = vmatprep.subr.mxu0 0.0
    %4137 = vmatpush1.msra.mxu0 %v3771
    %4138 = vmatprep.subr.mxu0 0.0
    %4139 = vmatpush1.msra.mxu0 %v3772
    %4140 = vmatprep.subr.mxu0 0.0
    %4141 = vmatpush1.msra.mxu0 %v3773
    %4142 = vmatprep.subr.mxu0 0.0
    %4143 = vmatpush1.msra.mxu0 %v3774
    %4144 = vmatprep.subr.mxu0 0.0
    %4145 = vmatpush1.msra.mxu0 %v3775
    %4146 = vmatprep.subr.mxu0 0.0
    %4147 = vmatpush1.msra.mxu0 %v3776
    %4148 = vmatprep.subr.mxu0 0.0
    %4149 = vmatpush1.msra.mxu0 %v3777
    %4150 = vmatprep.subr.mxu0 0.0
    %4151 = vmatpush1.msra.mxu0 %v3778
    %4152 = vmatprep.subr.mxu0 0.0
    %4153 = vmatpush1.msra.mxu0 %v3779
    %4154 = vmatprep.subr.mxu0 0.0
    %4155 = vmatpush1.msra.mxu0 %v3780
    %4156 = vmatprep.subr.mxu0 0.0
    %4157 = vmatpush1.msra.mxu0 %v3781
    %4158 = vmatprep.subr.mxu0 0.0
    %4159 = vmatpush1.msra.mxu0 %v3782
    %4160 = vmatprep.subr.mxu0 0.0
    %4161 = vmatpush1.msra.mxu0 %v3783
    %4162 = vmatprep.subr.mxu0 0.0
    %4163 = vmatpush1.msra.mxu0 %v3784
    %4164 = vmatprep.subr.mxu0 0.0
    %4165 = vmatpush1.msra.mxu0 %v3785
    %4166 = vmatprep.subr.mxu0 0.0
    %4167 = vmatpush1.msra.mxu0 %v3786
    %4168 = vmatprep.subr.mxu0 0.0
    %4169 = vmatpush1.msra.mxu0 %v3787
    %4170 = vmatprep.subr.mxu0 0.0
    %4171 = vmatpush1.msra.mxu0 %v3788
    %4172 = vmatprep.subr.mxu0 0.0
    %4173 = vmatpush1.msra.mxu0 %v3789
    %4174 = vmatprep.subr.mxu0 0.0
    %4175 = vmatpush1.msra.mxu0 %v3790
    %4176 = vmatprep.subr.mxu0 0.0
    %4177 = vmatpush1.msra.mxu0 %v3791
    %4178 = vmatprep.subr.mxu0 0.0
    %4179 = vmatpush1.msra.mxu0 %v3792
    %4180 = vmatprep.subr.mxu0 0.0
    %4181 = vmatpush1.msra.mxu0 %v3793
    %4182 = vmatprep.subr.mxu0 0.0
    %4183 = vmatpush1.msra.mxu0 %v3794
    %4184 = vmatprep.mubr.f32.mxu0 %v3552
    %4185 = vmatmul.mubr.f32.gmra.mrb[0].mxu0 %v3551
    %v4186 = vpop.f32.mrb[0].mxu0
    %v4187 = vadd.f32 %v4117, %v4186
    %v4188 = vpop.f32.mrb[0].mxu0
    %4189 = vdwg.mxu0
    %4190 = vmatprep.subr.mxu0 0.0
    %4191 = vmatpush1.msra.mxu0 %v3795
    %4192 = vmatprep.subr.mxu0 0.0
    %4193 = vmatpush1.msra.mxu0 %v3796
    %4194 = vmatprep.subr.mxu0 0.0
    %4195 = vmatpush1.msra.mxu0 %v3797
    %4196 = vmatprep.subr.mxu0 0.0
    %4197 = vmatpush1.msra.mxu0 %v3798
    %4198 = vmatprep.subr.mxu0 0.0
    %4199 = vmatpush1.msra.mxu0 %v3799
    %4200 = vmatprep.subr.mxu0 0.0
    %4201 = vmatpush1.msra.mxu0 %v3800
    %4202 = vmatprep.subr.mxu0 0.0
    %4203 = vmatpush1.msra.mxu0 %v3801
    %4204 = vmatprep.subr.mxu0 0.0
    %4205 = vmatpush1.msra.mxu0 %v3802
    %4206 = vmatprep.subr.mxu0 0.0
    %4207 = vmatpush1.msra.mxu0 %v3803
    %4208 = vmatprep.subr.mxu0 0.0
    %4209 = vmatpush1.msra.mxu0 %v3804
    %4210 = vmatprep.subr.mxu0 0.0
    %4211 = vmatpush1.msra.mxu0 %v3805
    %4212 = vmatprep.subr.mxu0 0.0
    %4213 = vmatpush1.msra.mxu0 %v3806
    %4214 = vmatprep.subr.mxu0 0.0
    %4215 = vmatpush1.msra.mxu0 %v3807
    %4216 = vmatprep.subr.mxu0 0.0
    %4217 = vmatpush1.msra.mxu0 %v3808
    %4218 = vmatprep.subr.mxu0 0.0
    %4219 = vmatpush1.msra.mxu0 %v3809
    %4220 = vmatprep.subr.mxu0 0.0
    %4221 = vmatpush1.msra.mxu0 %v3810
    %4222 = vmatprep.subr.mxu0 0.0
    %4223 = vmatpush1.msra.mxu0 %v3811
    %4224 = vmatprep.subr.mxu0 0.0
    %4225 = vmatpush1.msra.mxu0 %v3812
    %4226 = vmatprep.subr.mxu0 0.0
    %4227 = vmatpush1.msra.mxu0 %v3813
    %4228 = vmatprep.subr.mxu0 0.0
    %4229 = vmatpush1.msra.mxu0 %v3814
    %4230 = vmatprep.subr.mxu0 0.0
    %4231 = vmatpush1.msra.mxu0 %v3815
    %4232 = vmatprep.subr.mxu0 0.0
    %4233 = vmatpush1.msra.mxu0 %v3816
    %4234 = vmatprep.subr.mxu0 0.0
    %4235 = vmatpush1.msra.mxu0 %v3817
    %4236 = vmatprep.subr.mxu0 0.0
    %4237 = vmatpush1.msra.mxu0 %v3818
    %4238 = vmatprep.subr.mxu0 0.0
    %4239 = vmatpush1.msra.mxu0 %v3819
    %4240 = vmatprep.subr.mxu0 0.0
    %4241 = vmatpush1.msra.mxu0 %v3820
    %4242 = vmatprep.subr.mxu0 0.0
    %4243 = vmatpush1.msra.mxu0 %v3821
    %4244 = vmatprep.subr.mxu0 0.0
    %4245 = vmatpush1.msra.mxu0 %v3822
    %4246 = vmatprep.subr.mxu0 0.0
    %4247 = vmatpush1.msra.mxu0 %v3823
    %4248 = vmatprep.subr.mxu0 0.0
    %4249 = vmatpush1.msra.mxu0 %v3824
    %4250 = vmatprep.subr.mxu0 0.0
    %4251 = vmatpush1.msra.mxu0 %v3825
    %4252 = vmatprep.subr.mxu0 0.0
    %4253 = vmatpush1.msra.mxu0 %v3826
    %4254 = vmatprep.mubr.f32.mxu0 %v3554
    %4255 = vmatmul.mubr.f32.gmra.mrb[0].mxu0 %v3553
    %v4256 = vpop.f32.mrb[0].mxu0
    %v4257 = vadd.f32 %v4187, %v4256
    %v4258 = vpop.f32.mrb[0].mxu0
    %4259 = vdwg.mxu0
    %4260 = vmatprep.subr.mxu0 0.0
    %4261 = vmatpush1.msra.mxu0 %v3827
    %4262 = vmatprep.subr.mxu0 0.0
    %4263 = vmatpush1.msra.mxu0 %v3828
    %4264 = vmatprep.subr.mxu0 0.0
    %4265 = vmatpush1.msra.mxu0 %v3829
    %4266 = vmatprep.subr.mxu0 0.0
    %4267 = vmatpush1.msra.mxu0 %v3830
    %4268 = vmatprep.subr.mxu0 0.0
    %4269 = vmatpush1.msra.mxu0 0.0
    %4270 = vmatprep.subr.mxu0 0.0
    %4271 = vmatpush1.msra.mxu0 0.0
    %4272 = vmatprep.subr.mxu0 0.0
    %4273 = vmatpush1.msra.mxu0 0.0
    %4274 = vmatprep.subr.mxu0 0.0
    %4275 = vmatpush1.msra.mxu0 0.0
    %4276 = vmatprep.subr.mxu0 0.0
    %4277 = vmatpush1.msra.mxu0 0.0
    %4278 = vmatprep.subr.mxu0 0.0
    %4279 = vmatpush1.msra.mxu0 0.0
    %4280 = vmatprep.subr.mxu0 0.0
    %4281 = vmatpush1.msra.mxu0 0.0
    %4282 = vmatprep.subr.mxu0 0.0
    %4283 = vmatpush1.msra.mxu0 0.0
    %4284 = vmatprep.subr.mxu0 0.0
    %4285 = vmatpush1.msra.mxu0 0.0
    %4286 = vmatprep.subr.mxu0 0.0
    %4287 = vmatpush1.msra.mxu0 0.0
    %4288 = vmatprep.subr.mxu0 0.0
    %4289 = vmatpush1.msra.mxu0 0.0
    %4290 = vmatprep.subr.mxu0 0.0
    %4291 = vmatpush1.msra.mxu0 0.0
    %4292 = vmatprep.subr.mxu0 0.0
    %4293 = vmatpush1.msra.mxu0 0.0
    %4294 = vmatprep.subr.mxu0 0.0
    %4295 = vmatpush1.msra.mxu0 0.0
    %4296 = vmatprep.subr.mxu0 0.0
    %4297 = vmatpush1.msra.mxu0 0.0
    %4298 = vmatprep.subr.mxu0 0.0
    %4299 = vmatpush1.msra.mxu0 0.0
    %4300 = vmatprep.subr.mxu0 0.0
    %4301 = vmatpush1.msra.mxu0 0.0
    %4302 = vmatprep.subr.mxu0 0.0
    %4303 = vmatpush1.msra.mxu0 0.0
    %4304 = vmatprep.subr.mxu0 0.0
    %4305 = vmatpush1.msra.mxu0 0.0
    %4306 = vmatprep.subr.mxu0 0.0
    %4307 = vmatpush1.msra.mxu0 0.0
    %4308 = vmatprep.subr.mxu0 0.0
    %4309 = vmatpush1.msra.mxu0 0.0
    %4310 = vmatprep.subr.mxu0 0.0
    %4311 = vmatpush1.msra.mxu0 0.0
    %4312 = vmatprep.subr.mxu0 0.0
    %4313 = vmatpush1.msra.mxu0 0.0
    %4314 = vmatprep.subr.mxu0 0.0
    %4315 = vmatpush1.msra.mxu0 0.0
    %4316 = vmatprep.subr.mxu0 0.0
    %4317 = vmatpush1.msra.mxu0 0.0
    %4318 = vmatprep.subr.mxu0 0.0
    %4319 = vmatpush1.msra.mxu0 0.0
    %4320 = vmatprep.subr.mxu0 0.0
    %4321 = vmatpush1.msra.mxu0 0.0
    %4322 = vmatprep.subr.mxu0 0.0
    %4323 = vmatpush1.msra.mxu0 0.0
    %4324 = vmatprep.mubr.f32.mxu0 0.0
    %4325 = vmatmul.mubr.f32.gmra.mrb[0].mxu0 %v3838
    %v4326 = vpop.f32.mrb[0].mxu0
    %v4327 = vadd.f32 %v4257, %v4326
    %v4328 = vpop.f32.mrb[0].mxu0
    %4329 = vdwg.mxu0
    %vm4330 = vcmask 74752
    %4331 = vst.msk [vmem:[#allocation4] sm:$0x3] %vm4330, %v4327
    // Predicated region
    $region30: #{cnn_forward.1} parent=1 // pred_check
      _
    $region31: #{cnn_forward.1} parent=1 // pred_check_branch
      %4333 = sbr.rel (0) target = $region33
    $region32: #{cnn_forward.1} parent=1 // pred_region
      %s4335 = ssub.s32 32, 32
      %4336 = vsyncadd [#allocation5], %s4335
      %s4338 = sshll.u32 [#allocation4], 4
      %s4339 = int_to_ptr.vmem [resolvable:$true] %s4338
      %4341 = dma.vmem_to_hbm [thread:$0]  %s4339, 32, %s7, [#allocation5]
    $region33: #{cnn_forward.1} parent=1 // pred_fallthru
      _
    // Predicated region
    $region34: #{cnn_forward.1} parent=1 // pred_check
      _
    $region35: #{cnn_forward.1} parent=1 // pred_check_branch
      %4343 = sbr.rel (0) target = $region37
    $region36: #{cnn_forward.1} parent=1 // pred_region
      _
    $region37: #{cnn_forward.1} parent=1 // pred_fallthru
      _
    // Predicated region
    $region38: #{cnn_forward.1} parent=1 // pred_check
      _
    $region39: #{cnn_forward.1} parent=1 // pred_check_branch
      %4345 = sbr.rel (0) target = $region41
    $region40: #{cnn_forward.1} parent=1 // pred_region
      %4346 = dma.done [#allocation5], 32
    $region41: #{cnn_forward.1} parent=1 // pred_fallthru
      _
    // Predicated region
    $region42: #{cnn_forward.1} parent=1 // pred_check
      _
    $region43: #{cnn_forward.1} parent=1 // pred_check_branch
      %4348 = sbr.rel (0) target = $region45
    $region44: #{cnn_forward.1} parent=1 // pred_region
      _
    $region45: #{cnn_forward.1} parent=1 // pred_fallthru
      _
    %4349 = vsyncpa [#allocation5], 1

</llo_original>
